<compile_context>
chip_gen: v7x
topology: tpu7x:2x2x1
jax: 0.10.0
libtpu: 0.0.40
codegen_flags: <defaults>
</compile_context>

<pallas_src>
import math
import numpy as np

import jax
import jax.numpy as jnp
from jax import lax
from jax.experimental import pallas as pl
from jax.experimental.pallas import tpu as pltpu


# ----------------------------- config ------------------------------------
DIM = 32            # channels
H = W = 8           # input resolution
B = 2               # batch
NUM_HEADS = 4
WINDOW = 4          # window size
SHIFT = 2           # shift size (SW-MSA)
MLP_RATIO = 4.0
HIDDEN = int(DIM * MLP_RATIO)
HEAD_DIM = DIM // NUM_HEADS
SCALE = HEAD_DIM ** (-0.5)
N = WINDOW * WINDOW                    # tokens per window
NW = (H // WINDOW) * (W // WINDOW)     # windows per image
L = H * W                              # tokens per image
T = B * L                              # total tokens handled by the kernel
EPS = 1e-5
NEG = -1e9                             # "never attend" additive bias


# ------------------------- plain-JAX glue helpers -------------------------
def window_partition(x, ws):
    b, h, w, c = x.shape
    x = x.reshape(b, h // ws, ws, w // ws, ws, c)
    return x.transpose(0, 1, 3, 2, 4, 5).reshape(-1, ws, ws, c)


def window_reverse(windows, ws, h, w):
    b = windows.shape[0] // (h * w // ws // ws)
    x = windows.reshape(b, h // ws, w // ws, ws, ws, -1)
    return x.transpose(0, 1, 3, 2, 4, 5).reshape(b, h, w, -1)


def _layernorm(x, g, b):
    m = jnp.mean(x, axis=-1, keepdims=True)
    v = jnp.mean((x - m) ** 2, axis=-1, keepdims=True)
    return (x - m) * lax.rsqrt(v + EPS) * g + b


def _gelu_exact(x):
    return 0.5 * x * (1.0 + lax.erf(x * (1.0 / math.sqrt(2.0))))


# ------------------------------ Pallas kernel -----------------------------
def swin_block_kernel(x_ref, g1_ref, be1_ref, wqkv_ref, bqkv_ref, wproj_ref,
                      bproj_ref, bias_ref, g2_ref, be2_ref, w1_ref, b1_ref,
                      w2_ref, b2_ref, o_ref, attn_buf):
    """Fully fused SwinTransformerBlock forward over all B*L tokens.

    Attention runs per image (64 tokens) per head; `bias_ref[h]` is a
    (64, 64) additive bias in original token order containing relative
    position bias + shift mask for same-shifted-window pairs and NEG for
    cross-window pairs, reproducing the reference windowed attention exactly
    (masked pairs get softmax weight 0).
    """
    x = x_ref[...]                                        # (T, C)
    xn = _layernorm(x, g1_ref[...], be1_ref[...])

    # ---- fused QKV projection: one lane-dense matmul --------------------
    qkv = jnp.dot(xn, wqkv_ref[...],
                  preferred_element_type=jnp.float32) + bqkv_ref[...]   # (T, 3C)

    # ---- shifted-window multi-head attention, per image / per head ------
    for b in range(B):                                    # unrolled, 2 images
        r0, r1 = b * L, (b + 1) * L
        for h in range(NUM_HEADS):                        # unrolled, 4 heads
            c0 = h * HEAD_DIM
            q = qkv[r0:r1, c0:c0 + HEAD_DIM] * SCALE                   # (L, hd)
            k = qkv[r0:r1, DIM + c0:DIM + c0 + HEAD_DIM]               # (L, hd)
            v = qkv[r0:r1, 2 * DIM + c0:2 * DIM + c0 + HEAD_DIM]       # (L, hd)
            s = lax.dot_general(q, k, (((1,), (1,)), ((), ())),
                                preferred_element_type=jnp.float32)    # (L, L)
            s = s + bias_ref[h]
            s = s - jnp.max(s, axis=-1, keepdims=True)
            p = jnp.exp(s)
            ov = jnp.dot(p, v, preferred_element_type=jnp.float32)     # (L, hd)
            # normalize AFTER PV: scale the (L, hd) tile, not the (L, L) tile.
            # exact reciprocal keeps the 1e-4 tolerance; approx=True would use
            # the otherwise-idle EUP slot if more speed were ever needed.
            ov = ov * pl.reciprocal(jnp.sum(p, axis=-1, keepdims=True))
            attn_buf[r0:r1, c0:c0 + HEAD_DIM] = ov

    # ---- fused output projection + residual ------------------------------
    attn_out = jnp.dot(attn_buf[...], wproj_ref[...],
                       preferred_element_type=jnp.float32) + bproj_ref[...]
    x1 = x + attn_out

    # ---- MLP + residual ---------------------------------------------------
    xn2 = _layernorm(x1, g2_ref[...], be2_ref[...])
    hmid = jnp.dot(xn2, w1_ref[...],
                   preferred_element_type=jnp.float32) + b1_ref[...]
    hmid = _gelu_exact(hmid)
    y = jnp.dot(hmid, w2_ref[...],
                preferred_element_type=jnp.float32) + b2_ref[...]
    o_ref[...] = x1 + y


# ------------------------------ wrapper ------------------------------------
@jax.jit
def swin_block_forward(x, p, bias_img):
    """x: (B, L, C) float32 -> (B, L, C)."""
    b, l, c = x.shape
    tokens = x.reshape(b * l, c)
    out = pl.pallas_call(
        swin_block_kernel,
        out_shape=jax.ShapeDtypeStruct((b * l, c), jnp.float32),
        scratch_shapes=[pltpu.VMEM((b * l, c), jnp.float32)],
    )(tokens,
      p["g1"], p["be1"], p["wqkv"], p["bqkv"], p["wproj"], p["bproj"],
      bias_img,
      p["g2"], p["be2"], p["w1"], p["b1m"], p["w2"], p["b2m"])
    return out.reshape(b, l, c)


# --------------------------- pure-JAX reference ----------------------------
def swin_block_reference(x, params, rel_bias, attn_mask):
    b, l, c = x.shape
    shortcut = x
    xn = _layernorm(x, params["g1"][0], params["be1"][0])
    xr = xn.reshape(b, H, W, c)
    if SHIFT > 0:
        xr = jnp.roll(xr, shift=(-SHIFT, -SHIFT), axis=(1, 2))
    xw = window_partition(xr, WINDOW).reshape(-1, N, c)           # (B_, N, C)
    b_ = xw.shape[0]

    qkv = xw @ params["wqkv"] + params["bqkv"][0]
    qkv = qkv.reshape(b_, N, 3, NUM_HEADS, HEAD_DIM).transpose(2, 0, 3, 1, 4)
    q, k, v = qkv[0], qkv[1], qkv[2]
    q = q * SCALE
    attn = jnp.einsum("bhnd,bhmd->bhnm", q, k)
    attn = attn + rel_bias[None]
    attn = attn.reshape(b_ // NW, NW, NUM_HEADS, N, N) + attn_mask[None, :, None]
    attn = attn.reshape(b_, NUM_HEADS, N, N)
    attn = jax.nn.softmax(attn, axis=-1)
    xo = jnp.einsum("bhnm,bhmd->bhnd", attn, v)
    xo = xo.transpose(0, 2, 1, 3).reshape(b_, N, c)
    xo = xo @ params["wproj"] + params["bproj"][0]

    xo = xo.reshape(-1, WINDOW, WINDOW, c)
    xr = window_reverse(xo, WINDOW, H, W)
    if SHIFT > 0:
        xr = jnp.roll(xr, shift=(SHIFT, SHIFT), axis=(1, 2))
    x1 = shortcut + xr.reshape(b, l, c)

    xn2 = _layernorm(x1, params["g2"][0], params["be2"][0])
    h = _gelu_exact(xn2 @ params["w1"] + params["b1m"][0])
    y = h @ params["w2"] + params["b2m"][0]
    return x1 + y


# ------------------------------- setup -------------------------------------
def make_params(key):
    ks = jax.random.split(key, 10)
    p = {
        "g1":    jnp.ones((1, DIM), jnp.float32),
        "be1":   jnp.zeros((1, DIM), jnp.float32),
        # column ordering of wqkv is (3, heads, head_dim) flattened, exactly as
        # in the PyTorch module, so per-head q/k/v are contiguous 8-lane slices.
        "wqkv":  0.05 * jax.random.normal(ks[0], (DIM, 3 * DIM), jnp.float32),
        "bqkv":  0.01 * jax.random.normal(ks[1], (1, 3 * DIM), jnp.float32),
        "wproj": 0.05 * jax.random.normal(ks[2], (DIM, DIM), jnp.float32),
        "bproj": 0.01 * jax.random.normal(ks[3], (1, DIM), jnp.float32),
        "g2":    jnp.ones((1, DIM), jnp.float32),
        "be2":   jnp.zeros((1, DIM), jnp.float32),
        "w1":    0.05 * jax.random.normal(ks[4], (DIM, HIDDEN), jnp.float32),
        "b1m":   0.01 * jax.random.normal(ks[5], (1, HIDDEN), jnp.float32),
        "w2":    0.05 * jax.random.normal(ks[6], (HIDDEN, DIM), jnp.float32),
        "b2m":   0.01 * jax.random.normal(ks[7], (1, DIM), jnp.float32),
        # trunc_normal_(std=0.02) approximated by a plain normal (synthetic init)
        "rel_table": 0.02 * jax.random.normal(
            ks[8], ((2 * WINDOW - 1) * (2 * WINDOW - 1), NUM_HEADS), jnp.float32),
    }
    return p


def make_relative_bias(table):
    coords = np.stack(np.meshgrid(np.arange(WINDOW), np.arange(WINDOW),
                                  indexing="ij"))            # (2, ws, ws)
    coords_flat = coords.reshape(2, -1)                       # (2, N)
    rel = coords_flat[:, :, None] - coords_flat[:, None, :]   # (2, N, N)
    rel = rel.transpose(1, 2, 0)
    rel[:, :, 0] += WINDOW - 1
    rel[:, :, 1] += WINDOW - 1
    rel[:, :, 0] *= 2 * WINDOW - 1
    rel_index = rel.sum(-1)                                   # (N, N)
    bias = table[rel_index.reshape(-1)].reshape(N, N, NUM_HEADS)
    return jnp.transpose(bias, (2, 0, 1))                     # (heads, N, N)


def make_attn_mask():
    if SHIFT == 0:
        return jnp.zeros((NW, N, N), jnp.float32)
    img_mask = np.zeros((1, H, W, 1), np.float32)
    h_slices = (slice(0, -WINDOW), slice(-WINDOW, -SHIFT), slice(-SHIFT, None))
    w_slices = (slice(0, -WINDOW), slice(-WINDOW, -SHIFT), slice(-SHIFT, None))
    cnt = 0
    for hs in h_slices:
        for ws in w_slices:
            img_mask[:, hs, ws, :] = cnt
            cnt += 1
    mw = window_partition(jnp.asarray(img_mask), WINDOW).reshape(-1, N)  # (nW, N)
    am = mw[:, None, :] - mw[:, :, None]
    return jnp.where(am != 0, -100.0, 0.0).astype(jnp.float32)


def make_image_bias(rel_bias, attn_mask):
    """(heads, L, L) additive attention bias in ORIGINAL per-image token order.

    Encodes: relative position bias + shift mask for pairs in the same
    shifted window; NEG for every other pair.  Shared by all images in the
    batch (attention is computed per image inside the kernel).
    """
    rel_np = np.asarray(rel_bias)             # (heads, N, N)
    mask_np = np.asarray(attn_mask)           # (NW, N, N)
    comb = rel_np[None] + mask_np[:, None]    # (NW, heads, N, N)

    tok = np.arange(L)
    i, j = tok // W, tok % W
    if SHIFT > 0:
        ri, rj = (i - SHIFT) % H, (j - SHIFT) % W
    else:
        ri, rj = i, j
    win = (ri // WINDOW) * (W // WINDOW) + (rj // WINDOW)   # window id / image
    loc = (ri % WINDOW) * WINDOW + (rj % WINDOW)            # position in window

    gathered = comb[win[:, None], :, loc[:, None], loc[None, :]]   # (L, L, heads)
    same_win = (win[:, None] == win[None, :])[:, :, None]
    bias_img = np.where(same_win, gathered, np.float32(NEG))       # (L, L, heads)
    bias_img = np.ascontiguousarray(np.transpose(bias_img, (2, 0, 1)))
    return jnp.asarray(bias_img)                                   # (heads, L, L)


# --------------------------------- main -------------------------------------
if __name__ == "__main__":
    key = jax.random.PRNGKey(0)
    kx, kparam = jax.random.split(key)
    x = jax.random.normal(kx, (B, L, DIM), jnp.float32)

    params = make_params(kparam)
    rel_bias = make_relative_bias(params["rel_table"])        # (heads, N, N)
    attn_mask = make_attn_mask()                              # (nW, N, N)
    bias_img = make_image_bias(rel_bias, attn_mask)           # (heads, L, L)

    out = swin_block_forward(x, params, bias_img)
    out = jax.block_until_ready(out)

    ref = swin_block_reference(x, params, rel_bias, attn_mask)
    assert out.shape == (B, L, DIM)
    np.testing.assert_allclose(np.asarray(out), np.asarray(ref),
                               rtol=1e-4, atol=1e-4)
    print("KERNEL_OK")
</pallas_src>

<mosaic_0001>
module attributes {stable_mosaic.version = 11 : i64} {
  func.func @swin_block_kernel(%arg0: memref<128x32xf32, #tpu.memory_space<vmem>>, %arg1: memref<1x32xf32, #tpu.memory_space<vmem>>, %arg2: memref<1x32xf32, #tpu.memory_space<vmem>>, %arg3: memref<32x96xf32, #tpu.memory_space<vmem>>, %arg4: memref<1x96xf32, #tpu.memory_space<vmem>>, %arg5: memref<32x32xf32, #tpu.memory_space<vmem>>, %arg6: memref<1x32xf32, #tpu.memory_space<vmem>>, %arg7: memref<4x64x64xf32, #tpu.memory_space<vmem>>, %arg8: memref<1x32xf32, #tpu.memory_space<vmem>>, %arg9: memref<1x32xf32, #tpu.memory_space<vmem>>, %arg10: memref<32x128xf32, #tpu.memory_space<vmem>>, %arg11: memref<1x128xf32, #tpu.memory_space<vmem>>, %arg12: memref<128x32xf32, #tpu.memory_space<vmem>>, %arg13: memref<1x32xf32, #tpu.memory_space<vmem>>, %arg14: memref<128x32xf32, #tpu.memory_space<vmem>>, %arg15: memref<128x32xf32, #tpu.memory_space<vmem>>) attributes {dimension_semantics = [], scalar_prefetch = 0 : i64, scratch_operands = 1 : i64, tpu.core_type = #tpu.core_type<tc>} {
    %c0 = arith.constant 0 : index
    %c0_0 = arith.constant 0 : index
    %0 = vector.load %arg0[%c0, %c0_0] : memref<128x32xf32, #tpu.memory_space<vmem>>, vector<128x32xf32>
    %c0_1 = arith.constant 0 : index
    %c0_2 = arith.constant 0 : index
    %1 = vector.load %arg1[%c0_1, %c0_2] : memref<1x32xf32, #tpu.memory_space<vmem>>, vector<1x32xf32>
    %c0_3 = arith.constant 0 : index
    %c0_4 = arith.constant 0 : index
    %2 = vector.load %arg2[%c0_3, %c0_4] : memref<1x32xf32, #tpu.memory_space<vmem>>, vector<1x32xf32>
    %cst = arith.constant dense<0.000000e+00> : vector<128xf32>
    %3 = vector.multi_reduction <add>, %0, %cst [1] : vector<128x32xf32> to vector<128xf32>
    %4 = vector.shape_cast %3 : vector<128xf32> to vector<128x1xf32>
    %cst_5 = arith.constant 3.200000e+01 : f32
    %5 = vector.broadcast %cst_5 : f32 to vector<128x1xf32>
    %6 = arith.divf %4, %5 : vector<128x1xf32>
    %7 = vector.broadcast %6 : vector<128x1xf32> to vector<128x32xf32>
    %8 = arith.subf %0, %7 : vector<128x32xf32>
    %9 = arith.mulf %8, %8 : vector<128x32xf32>
    %cst_6 = arith.constant dense<0.000000e+00> : vector<128xf32>
    %10 = vector.multi_reduction <add>, %9, %cst_6 [1] : vector<128x32xf32> to vector<128xf32>
    %11 = vector.shape_cast %10 : vector<128xf32> to vector<128x1xf32>
    %cst_7 = arith.constant 3.200000e+01 : f32
    %12 = vector.broadcast %cst_7 : f32 to vector<128x1xf32>
    %13 = arith.divf %11, %12 : vector<128x1xf32>
    %14 = vector.broadcast %6 : vector<128x1xf32> to vector<128x32xf32>
    %15 = arith.subf %0, %14 : vector<128x32xf32>
    %cst_8 = arith.constant 9.99999974E-6 : f32
    %16 = vector.broadcast %cst_8 : f32 to vector<128x1xf32>
    %17 = arith.addf %13, %16 : vector<128x1xf32>
    %18 = math.rsqrt %17 : vector<128x1xf32>
    %19 = vector.broadcast %18 : vector<128x1xf32> to vector<128x32xf32>
    %20 = arith.mulf %15, %19 : vector<128x32xf32>
    %21 = vector.broadcast %1 : vector<1x32xf32> to vector<128x32xf32>
    %22 = arith.mulf %20, %21 : vector<128x32xf32>
    %23 = vector.broadcast %2 : vector<1x32xf32> to vector<128x32xf32>
    %24 = arith.addf %22, %23 : vector<128x32xf32>
    %c0_9 = arith.constant 0 : index
    %c0_10 = arith.constant 0 : index
    %25 = vector.load %arg3[%c0_9, %c0_10] : memref<32x96xf32, #tpu.memory_space<vmem>>, vector<32x96xf32>
    %cst_11 = arith.constant dense<0.000000e+00> : vector<128x96xf32>
    %26 = tpu.matmul %24, %25, %cst_11 {dimension_numbers = #tpu.dot_dimension_numbers<[1], [0], [0], [1], [0, 0, 1, 1], [], []>} : vector<128x32xf32>, vector<32x96xf32>, vector<128x96xf32> -> vector<128x96xf32>
    %c0_12 = arith.constant 0 : index
    %c0_13 = arith.constant 0 : index
    %27 = vector.load %arg4[%c0_12, %c0_13] : memref<1x96xf32, #tpu.memory_space<vmem>>, vector<1x96xf32>
    %28 = vector.broadcast %27 : vector<1x96xf32> to vector<128x96xf32>
    %29 = arith.addf %26, %28 : vector<128x96xf32>
    %30 = vector.extract_strided_slice %29 {offsets = [0, 0], sizes = [64, 8], strides = [1, 1]} : vector<128x96xf32> to vector<64x8xf32>
    %cst_14 = arith.constant 0.353553385 : f32
    %31 = vector.broadcast %cst_14 : f32 to vector<64x8xf32>
    %32 = arith.mulf %30, %31 : vector<64x8xf32>
    %33 = vector.extract_strided_slice %29 {offsets = [0, 32], sizes = [64, 8], strides = [1, 1]} : vector<128x96xf32> to vector<64x8xf32>
    %34 = vector.extract_strided_slice %29 {offsets = [0, 64], sizes = [64, 8], strides = [1, 1]} : vector<128x96xf32> to vector<64x8xf32>
    %cst_15 = arith.constant dense<0.000000e+00> : vector<64x64xf32>
    %35 = tpu.matmul %32, %33, %cst_15 {dimension_numbers = #tpu.dot_dimension_numbers<[1], [1], [0], [0], [0, 0, 1, 0], [], []>} : vector<64x8xf32>, vector<64x8xf32>, vector<64x64xf32> -> vector<64x64xf32>
    %c0_16 = arith.constant 0 : index
    %c0_17 = arith.constant 0 : index
    %c0_18 = arith.constant 0 : index
    %36 = vector.load %arg7[%c0_16, %c0_17, %c0_18] : memref<4x64x64xf32, #tpu.memory_space<vmem>>, vector<1x64x64xf32>
    %37 = vector.shape_cast %36 : vector<1x64x64xf32> to vector<64x64xf32>
    %38 = arith.addf %35, %37 : vector<64x64xf32>
    %cst_19 = arith.constant dense<0xFF800000> : vector<64xf32>
    %39 = vector.multi_reduction <maximumf>, %38, %cst_19 [1] : vector<64x64xf32> to vector<64xf32>
    %40 = vector.shape_cast %39 : vector<64xf32> to vector<64x1xf32>
    %41 = vector.broadcast %40 : vector<64x1xf32> to vector<64x64xf32>
    %42 = arith.subf %38, %41 : vector<64x64xf32>
    %43 = math.exp %42 : vector<64x64xf32>
    %cst_20 = arith.constant dense<0.000000e+00> : vector<64x8xf32>
    %44 = tpu.matmul %43, %34, %cst_20 {dimension_numbers = #tpu.dot_dimension_numbers<[1], [0], [0], [1], [0, 0, 1, 1], [], []>} : vector<64x64xf32>, vector<64x8xf32>, vector<64x8xf32> -> vector<64x8xf32>
    %cst_21 = arith.constant dense<0.000000e+00> : vector<64xf32>
    %45 = vector.multi_reduction <add>, %43, %cst_21 [1] : vector<64x64xf32> to vector<64xf32>
    %46 = vector.shape_cast %45 : vector<64xf32> to vector<64x1xf32>
    %47 = tpu.reciprocal %46 : vector<64x1xf32> -> vector<64x1xf32>
    %48 = vector.broadcast %47 : vector<64x1xf32> to vector<64x8xf32>
    %49 = arith.mulf %44, %48 : vector<64x8xf32>
    %c0_22 = arith.constant 0 : index
    %c0_23 = arith.constant 0 : index
    %50 = vector.load %arg15[%c0_22, %c0_23] : memref<128x32xf32, #tpu.memory_space<vmem>>, vector<64x8xf32>
    tpu.vector_store %arg15[%c0_22, %c0_23], %49 {strides = array<i32>} : memref<128x32xf32, #tpu.memory_space<vmem>>, vector<64x8xf32>,
    %51 = vector.extract_strided_slice %29 {offsets = [0, 8], sizes = [64, 8], strides = [1, 1]} : vector<128x96xf32> to vector<64x8xf32>
    %cst_24 = arith.constant 0.353553385 : f32
    %52 = vector.broadcast %cst_24 : f32 to vector<64x8xf32>
    %53 = arith.mulf %51, %52 : vector<64x8xf32>
    %54 = vector.extract_strided_slice %29 {offsets = [0, 40], sizes = [64, 8], strides = [1, 1]} : vector<128x96xf32> to vector<64x8xf32>
    %55 = vector.extract_strided_slice %29 {offsets = [0, 72], sizes = [64, 8], strides = [1, 1]} : vector<128x96xf32> to vector<64x8xf32>
    %cst_25 = arith.constant dense<0.000000e+00> : vector<64x64xf32>
    %56 = tpu.matmul %53, %54, %cst_25 {dimension_numbers = #tpu.dot_dimension_numbers<[1], [1], [0], [0], [0, 0, 1, 0], [], []>} : vector<64x8xf32>, vector<64x8xf32>, vector<64x64xf32> -> vector<64x64xf32>
    %c1 = arith.constant 1 : index
    %c0_26 = arith.constant 0 : index
    %c0_27 = arith.constant 0 : index
    %57 = vector.load %arg7[%c1, %c0_26, %c0_27] : memref<4x64x64xf32, #tpu.memory_space<vmem>>, vector<1x64x64xf32>
    %58 = vector.shape_cast %57 : vector<1x64x64xf32> to vector<64x64xf32>
    %59 = arith.addf %56, %58 : vector<64x64xf32>
    %cst_28 = arith.constant dense<0xFF800000> : vector<64xf32>
    %60 = vector.multi_reduction <maximumf>, %59, %cst_28 [1] : vector<64x64xf32> to vector<64xf32>
    %61 = vector.shape_cast %60 : vector<64xf32> to vector<64x1xf32>
    %62 = vector.broadcast %61 : vector<64x1xf32> to vector<64x64xf32>
    %63 = arith.subf %59, %62 : vector<64x64xf32>
    %64 = math.exp %63 : vector<64x64xf32>
    %cst_29 = arith.constant dense<0.000000e+00> : vector<64x8xf32>
    %65 = tpu.matmul %64, %55, %cst_29 {dimension_numbers = #tpu.dot_dimension_numbers<[1], [0], [0], [1], [0, 0, 1, 1], [], []>} : vector<64x64xf32>, vector<64x8xf32>, vector<64x8xf32> -> vector<64x8xf32>
    %cst_30 = arith.constant dense<0.000000e+00> : vector<64xf32>
    %66 = vector.multi_reduction <add>, %64, %cst_30 [1] : vector<64x64xf32> to vector<64xf32>
    %67 = vector.shape_cast %66 : vector<64xf32> to vector<64x1xf32>
    %68 = tpu.reciprocal %67 : vector<64x1xf32> -> vector<64x1xf32>
    %69 = vector.broadcast %68 : vector<64x1xf32> to vector<64x8xf32>
    %70 = arith.mulf %65, %69 : vector<64x8xf32>
    %c0_31 = arith.constant 0 : index
    %c8 = arith.constant 8 : index
    %71 = vector.load %arg15[%c0_31, %c8] : memref<128x32xf32, #tpu.memory_space<vmem>>, vector<64x8xf32>
    tpu.vector_store %arg15[%c0_31, %c8], %70 {strides = array<i32>} : memref<128x32xf32, #tpu.memory_space<vmem>>, vector<64x8xf32>,
    %72 = vector.extract_strided_slice %29 {offsets = [0, 16], sizes = [64, 8], strides = [1, 1]} : vector<128x96xf32> to vector<64x8xf32>
    %cst_32 = arith.constant 0.353553385 : f32
    %73 = vector.broadcast %cst_32 : f32 to vector<64x8xf32>
    %74 = arith.mulf %72, %73 : vector<64x8xf32>
    %75 = vector.extract_strided_slice %29 {offsets = [0, 48], sizes = [64, 8], strides = [1, 1]} : vector<128x96xf32> to vector<64x8xf32>
    %76 = vector.extract_strided_slice %29 {offsets = [0, 80], sizes = [64, 8], strides = [1, 1]} : vector<128x96xf32> to vector<64x8xf32>
    %cst_33 = arith.constant dense<0.000000e+00> : vector<64x64xf32>
    %77 = tpu.matmul %74, %75, %cst_33 {dimension_numbers = #tpu.dot_dimension_numbers<[1], [1], [0], [0], [0, 0, 1, 0], [], []>} : vector<64x8xf32>, vector<64x8xf32>, vector<64x64xf32> -> vector<64x64xf32>
    %c2 = arith.constant 2 : index
    %c0_34 = arith.constant 0 : index
    %c0_35 = arith.constant 0 : index
    %78 = vector.load %arg7[%c2, %c0_34, %c0_35] : memref<4x64x64xf32, #tpu.memory_space<vmem>>, vector<1x64x64xf32>
    %79 = vector.shape_cast %78 : vector<1x64x64xf32> to vector<64x64xf32>
    %80 = arith.addf %77, %79 : vector<64x64xf32>
    %cst_36 = arith.constant dense<0xFF800000> : vector<64xf32>
    %81 = vector.multi_reduction <maximumf>, %80, %cst_36 [1] : vector<64x64xf32> to vector<64xf32>
    %82 = vector.shape_cast %81 : vector<64xf32> to vector<64x1xf32>
    %83 = vector.broadcast %82 : vector<64x1xf32> to vector<64x64xf32>
    %84 = arith.subf %80, %83 : vector<64x64xf32>
    %85 = math.exp %84 : vector<64x64xf32>
    %cst_37 = arith.constant dense<0.000000e+00> : vector<64x8xf32>
    %86 = tpu.matmul %85, %76, %cst_37 {dimension_numbers = #tpu.dot_dimension_numbers<[1], [0], [0], [1], [0, 0, 1, 1], [], []>} : vector<64x64xf32>, vector<64x8xf32>, vector<64x8xf32> -> vector<64x8xf32>
    %cst_38 = arith.constant dense<0.000000e+00> : vector<64xf32>
    %87 = vector.multi_reduction <add>, %85, %cst_38 [1] : vector<64x64xf32> to vector<64xf32>
    %88 = vector.shape_cast %87 : vector<64xf32> to vector<64x1xf32>
    %89 = tpu.reciprocal %88 : vector<64x1xf32> -> vector<64x1xf32>
    %90 = vector.broadcast %89 : vector<64x1xf32> to vector<64x8xf32>
    %91 = arith.mulf %86, %90 : vector<64x8xf32>
    %c0_39 = arith.constant 0 : index
    %c16 = arith.constant 16 : index
    %92 = vector.load %arg15[%c0_39, %c16] : memref<128x32xf32, #tpu.memory_space<vmem>>, vector<64x8xf32>
    tpu.vector_store %arg15[%c0_39, %c16], %91 {strides = array<i32>} : memref<128x32xf32, #tpu.memory_space<vmem>>, vector<64x8xf32>,
    %93 = vector.extract_strided_slice %29 {offsets = [0, 24], sizes = [64, 8], strides = [1, 1]} : vector<128x96xf32> to vector<64x8xf32>
    %cst_40 = arith.constant 0.353553385 : f32
    %94 = vector.broadcast %cst_40 : f32 to vector<64x8xf32>
    %95 = arith.mulf %93, %94 : vector<64x8xf32>
    %96 = vector.extract_strided_slice %29 {offsets = [0, 56], sizes = [64, 8], strides = [1, 1]} : vector<128x96xf32> to vector<64x8xf32>
    %97 = vector.extract_strided_slice %29 {offsets = [0, 88], sizes = [64, 8], strides = [1, 1]} : vector<128x96xf32> to vector<64x8xf32>
    %cst_41 = arith.constant dense<0.000000e+00> : vector<64x64xf32>
    %98 = tpu.matmul %95, %96, %cst_41 {dimension_numbers = #tpu.dot_dimension_numbers<[1], [1], [0], [0], [0, 0, 1, 0], [], []>} : vector<64x8xf32>, vector<64x8xf32>, vector<64x64xf32> -> vector<64x64xf32>
    %c3 = arith.constant 3 : index
    %c0_42 = arith.constant 0 : index
    %c0_43 = arith.constant 0 : index
    %99 = vector.load %arg7[%c3, %c0_42, %c0_43] : memref<4x64x64xf32, #tpu.memory_space<vmem>>, vector<1x64x64xf32>
    %100 = vector.shape_cast %99 : vector<1x64x64xf32> to vector<64x64xf32>
    %101 = arith.addf %98, %100 : vector<64x64xf32>
    %cst_44 = arith.constant dense<0xFF800000> : vector<64xf32>
    %102 = vector.multi_reduction <maximumf>, %101, %cst_44 [1] : vector<64x64xf32> to vector<64xf32>
    %103 = vector.shape_cast %102 : vector<64xf32> to vector<64x1xf32>
    %104 = vector.broadcast %103 : vector<64x1xf32> to vector<64x64xf32>
    %105 = arith.subf %101, %104 : vector<64x64xf32>
    %106 = math.exp %105 : vector<64x64xf32>
    %cst_45 = arith.constant dense<0.000000e+00> : vector<64x8xf32>
    %107 = tpu.matmul %106, %97, %cst_45 {dimension_numbers = #tpu.dot_dimension_numbers<[1], [0], [0], [1], [0, 0, 1, 1], [], []>} : vector<64x64xf32>, vector<64x8xf32>, vector<64x8xf32> -> vector<64x8xf32>
    %cst_46 = arith.constant dense<0.000000e+00> : vector<64xf32>
    %108 = vector.multi_reduction <add>, %106, %cst_46 [1] : vector<64x64xf32> to vector<64xf32>
    %109 = vector.shape_cast %108 : vector<64xf32> to vector<64x1xf32>
    %110 = tpu.reciprocal %109 : vector<64x1xf32> -> vector<64x1xf32>
    %111 = vector.broadcast %110 : vector<64x1xf32> to vector<64x8xf32>
    %112 = arith.mulf %107, %111 : vector<64x8xf32>
    %c0_47 = arith.constant 0 : index
    %c24 = arith.constant 24 : index
    %113 = vector.load %arg15[%c0_47, %c24] : memref<128x32xf32, #tpu.memory_space<vmem>>, vector<64x8xf32>
    tpu.vector_store %arg15[%c0_47, %c24], %112 {strides = array<i32>} : memref<128x32xf32, #tpu.memory_space<vmem>>, vector<64x8xf32>,
    %114 = vector.extract_strided_slice %29 {offsets = [64, 0], sizes = [64, 8], strides = [1, 1]} : vector<128x96xf32> to vector<64x8xf32>
    %cst_48 = arith.constant 0.353553385 : f32
    %115 = vector.broadcast %cst_48 : f32 to vector<64x8xf32>
    %116 = arith.mulf %114, %115 : vector<64x8xf32>
    %117 = vector.extract_strided_slice %29 {offsets = [64, 32], sizes = [64, 8], strides = [1, 1]} : vector<128x96xf32> to vector<64x8xf32>
    %118 = vector.extract_strided_slice %29 {offsets = [64, 64], sizes = [64, 8], strides = [1, 1]} : vector<128x96xf32> to vector<64x8xf32>
    %cst_49 = arith.constant dense<0.000000e+00> : vector<64x64xf32>
    %119 = tpu.matmul %116, %117, %cst_49 {dimension_numbers = #tpu.dot_dimension_numbers<[1], [1], [0], [0], [0, 0, 1, 0], [], []>} : vector<64x8xf32>, vector<64x8xf32>, vector<64x64xf32> -> vector<64x64xf32>
    %c0_50 = arith.constant 0 : index
    %c0_51 = arith.constant 0 : index
    %c0_52 = arith.constant 0 : index
    %120 = vector.load %arg7[%c0_50, %c0_51, %c0_52] : memref<4x64x64xf32, #tpu.memory_space<vmem>>, vector<1x64x64xf32>
    %121 = vector.shape_cast %120 : vector<1x64x64xf32> to vector<64x64xf32>
    %122 = arith.addf %119, %121 : vector<64x64xf32>
    %cst_53 = arith.constant dense<0xFF800000> : vector<64xf32>
    %123 = vector.multi_reduction <maximumf>, %122, %cst_53 [1] : vector<64x64xf32> to vector<64xf32>
    %124 = vector.shape_cast %123 : vector<64xf32> to vector<64x1xf32>
    %125 = vector.broadcast %124 : vector<64x1xf32> to vector<64x64xf32>
    %126 = arith.subf %122, %125 : vector<64x64xf32>
    %127 = math.exp %126 : vector<64x64xf32>
    %cst_54 = arith.constant dense<0.000000e+00> : vector<64x8xf32>
    %128 = tpu.matmul %127, %118, %cst_54 {dimension_numbers = #tpu.dot_dimension_numbers<[1], [0], [0], [1], [0, 0, 1, 1], [], []>} : vector<64x64xf32>, vector<64x8xf32>, vector<64x8xf32> -> vector<64x8xf32>
    %cst_55 = arith.constant dense<0.000000e+00> : vector<64xf32>
    %129 = vector.multi_reduction <add>, %127, %cst_55 [1] : vector<64x64xf32> to vector<64xf32>
    %130 = vector.shape_cast %129 : vector<64xf32> to vector<64x1xf32>
    %131 = tpu.reciprocal %130 : vector<64x1xf32> -> vector<64x1xf32>
    %132 = vector.broadcast %131 : vector<64x1xf32> to vector<64x8xf32>
    %133 = arith.mulf %128, %132 : vector<64x8xf32>
    %c64 = arith.constant 64 : index
    %c0_56 = arith.constant 0 : index
    %134 = vector.load %arg15[%c64, %c0_56] : memref<128x32xf32, #tpu.memory_space<vmem>>, vector<64x8xf32>
    tpu.vector_store %arg15[%c64, %c0_56], %133 {strides = array<i32>} : memref<128x32xf32, #tpu.memory_space<vmem>>, vector<64x8xf32>,
    %135 = vector.extract_strided_slice %29 {offsets = [64, 8], sizes = [64, 8], strides = [1, 1]} : vector<128x96xf32> to vector<64x8xf32>
    %cst_57 = arith.constant 0.353553385 : f32
    %136 = vector.broadcast %cst_57 : f32 to vector<64x8xf32>
    %137 = arith.mulf %135, %136 : vector<64x8xf32>
    %138 = vector.extract_strided_slice %29 {offsets = [64, 40], sizes = [64, 8], strides = [1, 1]} : vector<128x96xf32> to vector<64x8xf32>
    %139 = vector.extract_strided_slice %29 {offsets = [64, 72], sizes = [64, 8], strides = [1, 1]} : vector<128x96xf32> to vector<64x8xf32>
    %cst_58 = arith.constant dense<0.000000e+00> : vector<64x64xf32>
    %140 = tpu.matmul %137, %138, %cst_58 {dimension_numbers = #tpu.dot_dimension_numbers<[1], [1], [0], [0], [0, 0, 1, 0], [], []>} : vector<64x8xf32>, vector<64x8xf32>, vector<64x64xf32> -> vector<64x64xf32>
    %c1_59 = arith.constant 1 : index
    %c0_60 = arith.constant 0 : index
    %c0_61 = arith.constant 0 : index
    %141 = vector.load %arg7[%c1_59, %c0_60, %c0_61] : memref<4x64x64xf32, #tpu.memory_space<vmem>>, vector<1x64x64xf32>
    %142 = vector.shape_cast %141 : vector<1x64x64xf32> to vector<64x64xf32>
    %143 = arith.addf %140, %142 : vector<64x64xf32>
    %cst_62 = arith.constant dense<0xFF800000> : vector<64xf32>
    %144 = vector.multi_reduction <maximumf>, %143, %cst_62 [1] : vector<64x64xf32> to vector<64xf32>
    %145 = vector.shape_cast %144 : vector<64xf32> to vector<64x1xf32>
    %146 = vector.broadcast %145 : vector<64x1xf32> to vector<64x64xf32>
    %147 = arith.subf %143, %146 : vector<64x64xf32>
    %148 = math.exp %147 : vector<64x64xf32>
    %cst_63 = arith.constant dense<0.000000e+00> : vector<64x8xf32>
    %149 = tpu.matmul %148, %139, %cst_63 {dimension_numbers = #tpu.dot_dimension_numbers<[1], [0], [0], [1], [0, 0, 1, 1], [], []>} : vector<64x64xf32>, vector<64x8xf32>, vector<64x8xf32> -> vector<64x8xf32>
    %cst_64 = arith.constant dense<0.000000e+00> : vector<64xf32>
    %150 = vector.multi_reduction <add>, %148, %cst_64 [1] : vector<64x64xf32> to vector<64xf32>
    %151 = vector.shape_cast %150 : vector<64xf32> to vector<64x1xf32>
    %152 = tpu.reciprocal %151 : vector<64x1xf32> -> vector<64x1xf32>
    %153 = vector.broadcast %152 : vector<64x1xf32> to vector<64x8xf32>
    %154 = arith.mulf %149, %153 : vector<64x8xf32>
    %c64_65 = arith.constant 64 : index
    %c8_66 = arith.constant 8 : index
    %155 = vector.load %arg15[%c64_65, %c8_66] : memref<128x32xf32, #tpu.memory_space<vmem>>, vector<64x8xf32>
    tpu.vector_store %arg15[%c64_65, %c8_66], %154 {strides = array<i32>} : memref<128x32xf32, #tpu.memory_space<vmem>>, vector<64x8xf32>,
    %156 = vector.extract_strided_slice %29 {offsets = [64, 16], sizes = [64, 8], strides = [1, 1]} : vector<128x96xf32> to vector<64x8xf32>
    %cst_67 = arith.constant 0.353553385 : f32
    %157 = vector.broadcast %cst_67 : f32 to vector<64x8xf32>
    %158 = arith.mulf %156, %157 : vector<64x8xf32>
    %159 = vector.extract_strided_slice %29 {offsets = [64, 48], sizes = [64, 8], strides = [1, 1]} : vector<128x96xf32> to vector<64x8xf32>
    %160 = vector.extract_strided_slice %29 {offsets = [64, 80], sizes = [64, 8], strides = [1, 1]} : vector<128x96xf32> to vector<64x8xf32>
    %cst_68 = arith.constant dense<0.000000e+00> : vector<64x64xf32>
    %161 = tpu.matmul %158, %159, %cst_68 {dimension_numbers = #tpu.dot_dimension_numbers<[1], [1], [0], [0], [0, 0, 1, 0], [], []>} : vector<64x8xf32>, vector<64x8xf32>, vector<64x64xf32> -> vector<64x64xf32>
    %c2_69 = arith.constant 2 : index
    %c0_70 = arith.constant 0 : index
    %c0_71 = arith.constant 0 : index
    %162 = vector.load %arg7[%c2_69, %c0_70, %c0_71] : memref<4x64x64xf32, #tpu.memory_space<vmem>>, vector<1x64x64xf32>
    %163 = vector.shape_cast %162 : vector<1x64x64xf32> to vector<64x64xf32>
    %164 = arith.addf %161, %163 : vector<64x64xf32>
    %cst_72 = arith.constant dense<0xFF800000> : vector<64xf32>
    %165 = vector.multi_reduction <maximumf>, %164, %cst_72 [1] : vector<64x64xf32> to vector<64xf32>
    %166 = vector.shape_cast %165 : vector<64xf32> to vector<64x1xf32>
    %167 = vector.broadcast %166 : vector<64x1xf32> to vector<64x64xf32>
    %168 = arith.subf %164, %167 : vector<64x64xf32>
    %169 = math.exp %168 : vector<64x64xf32>
    %cst_73 = arith.constant dense<0.000000e+00> : vector<64x8xf32>
    %170 = tpu.matmul %169, %160, %cst_73 {dimension_numbers = #tpu.dot_dimension_numbers<[1], [0], [0], [1], [0, 0, 1, 1], [], []>} : vector<64x64xf32>, vector<64x8xf32>, vector<64x8xf32> -> vector<64x8xf32>
    %cst_74 = arith.constant dense<0.000000e+00> : vector<64xf32>
    %171 = vector.multi_reduction <add>, %169, %cst_74 [1] : vector<64x64xf32> to vector<64xf32>
    %172 = vector.shape_cast %171 : vector<64xf32> to vector<64x1xf32>
    %173 = tpu.reciprocal %172 : vector<64x1xf32> -> vector<64x1xf32>
    %174 = vector.broadcast %173 : vector<64x1xf32> to vector<64x8xf32>
    %175 = arith.mulf %170, %174 : vector<64x8xf32>
    %c64_75 = arith.constant 64 : index
    %c16_76 = arith.constant 16 : index
    %176 = vector.load %arg15[%c64_75, %c16_76] : memref<128x32xf32, #tpu.memory_space<vmem>>, vector<64x8xf32>
    tpu.vector_store %arg15[%c64_75, %c16_76], %175 {strides = array<i32>} : memref<128x32xf32, #tpu.memory_space<vmem>>, vector<64x8xf32>,
    %177 = vector.extract_strided_slice %29 {offsets = [64, 24], sizes = [64, 8], strides = [1, 1]} : vector<128x96xf32> to vector<64x8xf32>
    %cst_77 = arith.constant 0.353553385 : f32
    %178 = vector.broadcast %cst_77 : f32 to vector<64x8xf32>
    %179 = arith.mulf %177, %178 : vector<64x8xf32>
    %180 = vector.extract_strided_slice %29 {offsets = [64, 56], sizes = [64, 8], strides = [1, 1]} : vector<128x96xf32> to vector<64x8xf32>
    %181 = vector.extract_strided_slice %29 {offsets = [64, 88], sizes = [64, 8], strides = [1, 1]} : vector<128x96xf32> to vector<64x8xf32>
    %cst_78 = arith.constant dense<0.000000e+00> : vector<64x64xf32>
    %182 = tpu.matmul %179, %180, %cst_78 {dimension_numbers = #tpu.dot_dimension_numbers<[1], [1], [0], [0], [0, 0, 1, 0], [], []>} : vector<64x8xf32>, vector<64x8xf32>, vector<64x64xf32> -> vector<64x64xf32>
    %c3_79 = arith.constant 3 : index
    %c0_80 = arith.constant 0 : index
    %c0_81 = arith.constant 0 : index
    %183 = vector.load %arg7[%c3_79, %c0_80, %c0_81] : memref<4x64x64xf32, #tpu.memory_space<vmem>>, vector<1x64x64xf32>
    %184 = vector.shape_cast %183 : vector<1x64x64xf32> to vector<64x64xf32>
    %185 = arith.addf %182, %184 : vector<64x64xf32>
    %cst_82 = arith.constant dense<0xFF800000> : vector<64xf32>
    %186 = vector.multi_reduction <maximumf>, %185, %cst_82 [1] : vector<64x64xf32> to vector<64xf32>
    %187 = vector.shape_cast %186 : vector<64xf32> to vector<64x1xf32>
    %188 = vector.broadcast %187 : vector<64x1xf32> to vector<64x64xf32>
    %189 = arith.subf %185, %188 : vector<64x64xf32>
    %190 = math.exp %189 : vector<64x64xf32>
    %cst_83 = arith.constant dense<0.000000e+00> : vector<64x8xf32>
    %191 = tpu.matmul %190, %181, %cst_83 {dimension_numbers = #tpu.dot_dimension_numbers<[1], [0], [0], [1], [0, 0, 1, 1], [], []>} : vector<64x64xf32>, vector<64x8xf32>, vector<64x8xf32> -> vector<64x8xf32>
    %cst_84 = arith.constant dense<0.000000e+00> : vector<64xf32>
    %192 = vector.multi_reduction <add>, %190, %cst_84 [1] : vector<64x64xf32> to vector<64xf32>
    %193 = vector.shape_cast %192 : vector<64xf32> to vector<64x1xf32>
    %194 = tpu.reciprocal %193 : vector<64x1xf32> -> vector<64x1xf32>
    %195 = vector.broadcast %194 : vector<64x1xf32> to vector<64x8xf32>
    %196 = arith.mulf %191, %195 : vector<64x8xf32>
    %c64_85 = arith.constant 64 : index
    %c24_86 = arith.constant 24 : index
    %197 = vector.load %arg15[%c64_85, %c24_86] : memref<128x32xf32, #tpu.memory_space<vmem>>, vector<64x8xf32>
    tpu.vector_store %arg15[%c64_85, %c24_86], %196 {strides = array<i32>} : memref<128x32xf32, #tpu.memory_space<vmem>>, vector<64x8xf32>,
    %c0_87 = arith.constant 0 : index
    %c0_88 = arith.constant 0 : index
    %198 = vector.load %arg15[%c0_87, %c0_88] : memref<128x32xf32, #tpu.memory_space<vmem>>, vector<128x32xf32>
    %c0_89 = arith.constant 0 : index
    %c0_90 = arith.constant 0 : index
    %199 = vector.load %arg5[%c0_89, %c0_90] : memref<32x32xf32, #tpu.memory_space<vmem>>, vector<32x32xf32>
    %cst_91 = arith.constant dense<0.000000e+00> : vector<128x32xf32>
    %200 = tpu.matmul %198, %199, %cst_91 {dimension_numbers = #tpu.dot_dimension_numbers<[1], [0], [0], [1], [0, 0, 1, 1], [], []>} : vector<128x32xf32>, vector<32x32xf32>, vector<128x32xf32> -> vector<128x32xf32>
    %c0_92 = arith.constant 0 : index
    %c0_93 = arith.constant 0 : index
    %201 = vector.load %arg6[%c0_92, %c0_93] : memref<1x32xf32, #tpu.memory_space<vmem>>, vector<1x32xf32>
    %202 = vector.broadcast %201 : vector<1x32xf32> to vector<128x32xf32>
    %203 = arith.addf %200, %202 : vector<128x32xf32>
    %204 = arith.addf %0, %203 : vector<128x32xf32>
    %c0_94 = arith.constant 0 : index
    %c0_95 = arith.constant 0 : index
    %205 = vector.load %arg8[%c0_94, %c0_95] : memref<1x32xf32, #tpu.memory_space<vmem>>, vector<1x32xf32>
    %c0_96 = arith.constant 0 : index
    %c0_97 = arith.constant 0 : index
    %206 = vector.load %arg9[%c0_96, %c0_97] : memref<1x32xf32, #tpu.memory_space<vmem>>, vector<1x32xf32>
    %cst_98 = arith.constant dense<0.000000e+00> : vector<128xf32>
    %207 = vector.multi_reduction <add>, %204, %cst_98 [1] : vector<128x32xf32> to vector<128xf32>
    %208 = vector.shape_cast %207 : vector<128xf32> to vector<128x1xf32>
    %cst_99 = arith.constant 3.200000e+01 : f32
    %209 = vector.broadcast %cst_99 : f32 to vector<128x1xf32>
    %210 = arith.divf %208, %209 : vector<128x1xf32>
    %211 = vector.broadcast %210 : vector<128x1xf32> to vector<128x32xf32>
    %212 = arith.subf %204, %211 : vector<128x32xf32>
    %213 = arith.mulf %212, %212 : vector<128x32xf32>
    %cst_100 = arith.constant dense<0.000000e+00> : vector<128xf32>
    %214 = vector.multi_reduction <add>, %213, %cst_100 [1] : vector<128x32xf32> to vector<128xf32>
    %215 = vector.shape_cast %214 : vector<128xf32> to vector<128x1xf32>
    %cst_101 = arith.constant 3.200000e+01 : f32
    %216 = vector.broadcast %cst_101 : f32 to vector<128x1xf32>
    %217 = arith.divf %215, %216 : vector<128x1xf32>
    %218 = vector.broadcast %210 : vector<128x1xf32> to vector<128x32xf32>
    %219 = arith.subf %204, %218 : vector<128x32xf32>
    %cst_102 = arith.constant 9.99999974E-6 : f32
    %220 = vector.broadcast %cst_102 : f32 to vector<128x1xf32>
    %221 = arith.addf %217, %220 : vector<128x1xf32>
    %222 = math.rsqrt %221 : vector<128x1xf32>
    %223 = vector.broadcast %222 : vector<128x1xf32> to vector<128x32xf32>
    %224 = arith.mulf %219, %223 : vector<128x32xf32>
    %225 = vector.broadcast %205 : vector<1x32xf32> to vector<128x32xf32>
    %226 = arith.mulf %224, %225 : vector<128x32xf32>
    %227 = vector.broadcast %206 : vector<1x32xf32> to vector<128x32xf32>
    %228 = arith.addf %226, %227 : vector<128x32xf32>
    %c0_103 = arith.constant 0 : index
    %c0_104 = arith.constant 0 : index
    %229 = vector.load %arg10[%c0_103, %c0_104] : memref<32x128xf32, #tpu.memory_space<vmem>>, vector<32x128xf32>
    %cst_105 = arith.constant dense<0.000000e+00> : vector<128x128xf32>
    %230 = tpu.matmul %228, %229, %cst_105 {dimension_numbers = #tpu.dot_dimension_numbers<[1], [0], [0], [1], [0, 0, 1, 1], [], []>} : vector<128x32xf32>, vector<32x128xf32>, vector<128x128xf32> -> vector<128x128xf32>
    %c0_106 = arith.constant 0 : index
    %c0_107 = arith.constant 0 : index
    %231 = vector.load %arg11[%c0_106, %c0_107] : memref<1x128xf32, #tpu.memory_space<vmem>>, vector<1x128xf32>
    %232 = vector.broadcast %231 : vector<1x128xf32> to vector<128x128xf32>
    %233 = arith.addf %230, %232 : vector<128x128xf32>
    %cst_108 = arith.constant 5.000000e-01 : f32
    %234 = vector.broadcast %cst_108 : f32 to vector<128x128xf32>
    %235 = arith.mulf %234, %233 : vector<128x128xf32>
    %cst_109 = arith.constant 0.707106769 : f32
    %236 = vector.broadcast %cst_109 : f32 to vector<128x128xf32>
    %237 = arith.mulf %233, %236 : vector<128x128xf32>
    %238 = math.erf %237 : vector<128x128xf32>
    %cst_110 = arith.constant 1.000000e+00 : f32
    %239 = vector.broadcast %cst_110 : f32 to vector<128x128xf32>
    %240 = arith.addf %239, %238 : vector<128x128xf32>
    %241 = arith.mulf %235, %240 : vector<128x128xf32>
    %c0_111 = arith.constant 0 : index
    %c0_112 = arith.constant 0 : index
    %242 = vector.load %arg12[%c0_111, %c0_112] : memref<128x32xf32, #tpu.memory_space<vmem>>, vector<128x32xf32>
    %cst_113 = arith.constant dense<0.000000e+00> : vector<128x32xf32>
    %243 = tpu.matmul %241, %242, %cst_113 {dimension_numbers = #tpu.dot_dimension_numbers<[1], [0], [0], [1], [0, 0, 1, 1], [], []>} : vector<128x128xf32>, vector<128x32xf32>, vector<128x32xf32> -> vector<128x32xf32>
    %c0_114 = arith.constant 0 : index
    %c0_115 = arith.constant 0 : index
    %244 = vector.load %arg13[%c0_114, %c0_115] : memref<1x32xf32, #tpu.memory_space<vmem>>, vector<1x32xf32>
    %245 = vector.broadcast %244 : vector<1x32xf32> to vector<128x32xf32>
    %246 = arith.addf %243, %245 : vector<128x32xf32>
    %247 = arith.addf %204, %246 : vector<128x32xf32>
    %c0_116 = arith.constant 0 : index
    %c0_117 = arith.constant 0 : index
    %248 = vector.load %arg14[%c0_116, %c0_117] : memref<128x32xf32, #tpu.memory_space<vmem>>, vector<128x32xf32>
    tpu.vector_store %arg14[%c0_116, %c0_117], %247 {strides = array<i32>} : memref<128x32xf32, #tpu.memory_space<vmem>>, vector<128x32xf32>,
    return
  }
}

</mosaic_0001>

<llo_original>
// kernel: swin_block_forward.1
$region0: #{swin_block_forward.1}
  #allocation0 [shape = 'u32[]', space=smem, size = 0x4, offset = 0x4, fixed_abs, tag = 'smem constant byte address 0x4 - core index']
  #allocation1 [shape = 'u32[144,128]{1,0:T(1,128)}', space=vmem, size = 0x12000, scoped, tag = 'internal scratch']
  #allocation2 [shape = 'f32[128,32]{1,0:T(8,128)}', space=vmem, size = 0x10000, scoped, tag = 'scratch operand']
  %s0 = inlined_call_operand.vmem [shape: f32[128,32], index: 0, kind: input, shape index: {}]
  %s1 = inlined_call_operand.vmem [shape: f32[1,32], index: 1, kind: input, shape index: {}]
  %s2 = inlined_call_operand.vmem [shape: f32[1,32], index: 2, kind: input, shape index: {}]
  %s3 = inlined_call_operand.vmem [shape: f32[32,96], index: 3, kind: input, shape index: {}]
  %s4 = inlined_call_operand.vmem [shape: f32[1,96], index: 4, kind: input, shape index: {}]
  %s5 = inlined_call_operand.vmem [shape: f32[32,32], index: 5, kind: input, shape index: {}]
  %s6 = inlined_call_operand.vmem [shape: f32[1,32], index: 6, kind: input, shape index: {}]
  %s7 = inlined_call_operand.vmem [shape: f32[4,64,64], index: 7, kind: input, shape index: {}]
  %s8 = inlined_call_operand.vmem [shape: f32[1,32], index: 8, kind: input, shape index: {}]
  %s9 = inlined_call_operand.vmem [shape: f32[1,32], index: 9, kind: input, shape index: {}]
  %s10 = inlined_call_operand.vmem [shape: f32[32,128], index: 10, kind: input, shape index: {}]
  %s11 = inlined_call_operand.vmem [shape: f32[1,128], index: 11, kind: input, shape index: {}]
  %s12 = inlined_call_operand.vmem [shape: f32[128,32], index: 12, kind: input, shape index: {}]
  %s13 = inlined_call_operand.vmem [shape: f32[1,32], index: 13, kind: input, shape index: {}]
  %s14 = inlined_call_operand.vmem [shape: f32[128,32], index: 14, kind: output, shape index: {}]
  %s15 = sld [smem:[#allocation0]]
  $region66: #{swin_block_forward.1} parent=0
    _
  %s17 = ssub.s32 1, %s15
  %s18 = scalar_select 0, %s17, %s15
  // Predicated region
  $region2: #{swin_block_forward.1} parent=0 // pred_check
    _
  $region3: #{swin_block_forward.1} parent=0 // pred_check_branch
    %20 = sbr.rel (0) target = $region5
  $region4: #{swin_block_forward.1} parent=0 // pred_region
    _
  $region5: #{swin_block_forward.1} parent=0 // pred_fallthru
    _
  // Predicated region
  $region6: #{swin_block_forward.1} parent=0 // pred_check
    _
  $region7: #{swin_block_forward.1} parent=0 // pred_check_branch
    %22 = sbr.rel (0) target = $region9
  $region8: #{swin_block_forward.1} parent=0 // pred_region
    _
  $region9: #{swin_block_forward.1} parent=0 // pred_fallthru
    _
  // Predicated region
  $region10: #{swin_block_forward.1} parent=0 // pred_check
    _
  $region11: #{swin_block_forward.1} parent=0 // pred_check_branch
    %24 = sbr.rel (0) target = $region13
  $region12: #{swin_block_forward.1} parent=0 // pred_region
    _
  $region13: #{swin_block_forward.1} parent=0 // pred_fallthru
    _
  // Predicated region
  $region14: #{swin_block_forward.1} parent=0 // pred_check
    _
  $region15: #{swin_block_forward.1} parent=0 // pred_check_branch
    %26 = sbr.rel (0) target = $region17
  $region16: #{swin_block_forward.1} parent=0 // pred_region
    _
  $region17: #{swin_block_forward.1} parent=0 // pred_fallthru
    _
  // Predicated region
  $region18: #{swin_block_forward.1} parent=0 // pred_check
    _
  $region19: #{swin_block_forward.1} parent=0 // pred_check_branch
    %28 = sbr.rel (0) target = $region21
  $region20: #{swin_block_forward.1} parent=0 // pred_region
    _
  $region21: #{swin_block_forward.1} parent=0 // pred_fallthru
    _
  // Predicated region
  $region22: #{swin_block_forward.1} parent=0 // pred_check
    _
  $region23: #{swin_block_forward.1} parent=0 // pred_check_branch
    %30 = sbr.rel (0) target = $region25
  $region24: #{swin_block_forward.1} parent=0 // pred_region
    _
  $region25: #{swin_block_forward.1} parent=0 // pred_fallthru
    _
  // Predicated region
  $region26: #{swin_block_forward.1} parent=0 // pred_check
    _
  $region27: #{swin_block_forward.1} parent=0 // pred_check_branch
    %32 = sbr.rel (0) target = $region29
  $region28: #{swin_block_forward.1} parent=0 // pred_region
    _
  $region29: #{swin_block_forward.1} parent=0 // pred_fallthru
    _
  // Predicated region
  $region30: #{swin_block_forward.1} parent=0 // pred_check
    _
  $region31: #{swin_block_forward.1} parent=0 // pred_check_branch
    %34 = sbr.rel (0) target = $region33
  $region32: #{swin_block_forward.1} parent=0 // pred_region
    _
  $region33: #{swin_block_forward.1} parent=0 // pred_fallthru
    _
  // Predicated region
  $region34: #{swin_block_forward.1} parent=0 // pred_check
    _
  $region35: #{swin_block_forward.1} parent=0 // pred_check_branch
    %36 = sbr.rel (0) target = $region37
  $region36: #{swin_block_forward.1} parent=0 // pred_region
    _
  $region37: #{swin_block_forward.1} parent=0 // pred_fallthru
    _
  // Predicated region
  $region38: #{swin_block_forward.1} parent=0 // pred_check
    _
  $region39: #{swin_block_forward.1} parent=0 // pred_check_branch
    %38 = sbr.rel (0) target = $region41
  $region40: #{swin_block_forward.1} parent=0 // pred_region
    _
  $region41: #{swin_block_forward.1} parent=0 // pred_fallthru
    _
  // Predicated region
  $region42: #{swin_block_forward.1} parent=0 // pred_check
    _
  $region43: #{swin_block_forward.1} parent=0 // pred_check_branch
    %40 = sbr.rel (0) target = $region45
  $region44: #{swin_block_forward.1} parent=0 // pred_region
    _
  $region45: #{swin_block_forward.1} parent=0 // pred_fallthru
    _
  // Predicated region
  $region46: #{swin_block_forward.1} parent=0 // pred_check
    _
  $region47: #{swin_block_forward.1} parent=0 // pred_check_branch
    %42 = sbr.rel (0) target = $region49
  $region48: #{swin_block_forward.1} parent=0 // pred_region
    _
  $region49: #{swin_block_forward.1} parent=0 // pred_fallthru
    _
  // Predicated region
  $region50: #{swin_block_forward.1} parent=0 // pred_check
    _
  $region51: #{swin_block_forward.1} parent=0 // pred_check_branch
    %44 = sbr.rel (0) target = $region53
  $region52: #{swin_block_forward.1} parent=0 // pred_region
    _
  $region53: #{swin_block_forward.1} parent=0 // pred_fallthru
    _
  // Predicated region
  $region54: #{swin_block_forward.1} parent=0 // pred_check
    _
  $region55: #{swin_block_forward.1} parent=0 // pred_check_branch
    %46 = sbr.rel (0) target = $region57
  $region56: #{swin_block_forward.1} parent=0 // pred_region
    _
  $region57: #{swin_block_forward.1} parent=0 // pred_fallthru
    _
  %v47 = vld [vmem:[%s0] sm:$0xff]
  %v48 = vld [vmem:[%s0 + $0x8] sm:$0xff]
  %v49 = vld [vmem:[%s0 + $0x10] sm:$0xff]
  %v50 = vld [vmem:[%s0 + $0x18] sm:$0xff]
  %v51 = vld [vmem:[%s0 + $0x20] sm:$0xff]
  %v52 = vld [vmem:[%s0 + $0x28] sm:$0xff]
  %v53 = vld [vmem:[%s0 + $0x30] sm:$0xff]
  %v54 = vld [vmem:[%s0 + $0x38] sm:$0xff]
  %v55 = vld [vmem:[%s0 + $0x40] sm:$0xff]
  %v56 = vld [vmem:[%s0 + $0x48] sm:$0xff]
  %v57 = vld [vmem:[%s0 + $0x50] sm:$0xff]
  %v58 = vld [vmem:[%s0 + $0x58] sm:$0xff]
  %v59 = vld [vmem:[%s0 + $0x60] sm:$0xff]
  %v60 = vld [vmem:[%s0 + $0x68] sm:$0xff]
  %v61 = vld [vmem:[%s0 + $0x70] sm:$0xff]
  %v62 = vld [vmem:[%s0 + $0x78] sm:$0xff]
  %v63 = vld [vmem:[%s1] sm:$0x1]
  %v64 = vld [vmem:[%s2] sm:$0x1]
  %vm65 = vcmask 261120
  %v66 = vsel %vm65, %v47, 0.0
  %67 = vadd.xlane.f32.xlu0 %v66
  %v68 = vpop.xlane.xlu0 %67
  %v69 = vsel %vm65, %v48, 0.0
  %70 = vadd.xlane.f32.xlu0 %v69
  %v71 = vpop.xlane.xlu0 %70
  %v72 = vsel %vm65, %v49, 0.0
  %73 = vadd.xlane.f32.xlu0 %v72
  %v74 = vpop.xlane.xlu0 %73
  %v75 = vsel %vm65, %v50, 0.0
  %76 = vadd.xlane.f32.xlu0 %v75
  %v77 = vpop.xlane.xlu0 %76
  %v78 = vsel %vm65, %v51, 0.0
  %79 = vadd.xlane.f32.xlu0 %v78
  %v80 = vpop.xlane.xlu0 %79
  %v81 = vsel %vm65, %v52, 0.0
  %82 = vadd.xlane.f32.xlu0 %v81
  %v83 = vpop.xlane.xlu0 %82
  %v84 = vsel %vm65, %v53, 0.0
  %85 = vadd.xlane.f32.xlu0 %v84
  %v86 = vpop.xlane.xlu0 %85
  %v87 = vsel %vm65, %v54, 0.0
  %88 = vadd.xlane.f32.xlu0 %v87
  %v89 = vpop.xlane.xlu0 %88
  %v90 = vsel %vm65, %v55, 0.0
  %91 = vadd.xlane.f32.xlu0 %v90
  %v92 = vpop.xlane.xlu0 %91
  %v93 = vsel %vm65, %v56, 0.0
  %94 = vadd.xlane.f32.xlu0 %v93
  %v95 = vpop.xlane.xlu0 %94
  %v96 = vsel %vm65, %v57, 0.0
  %97 = vadd.xlane.f32.xlu0 %v96
  %v98 = vpop.xlane.xlu0 %97
  %v99 = vsel %vm65, %v58, 0.0
  %100 = vadd.xlane.f32.xlu0 %v99
  %v101 = vpop.xlane.xlu0 %100
  %v102 = vsel %vm65, %v59, 0.0
  %103 = vadd.xlane.f32.xlu0 %v102
  %v104 = vpop.xlane.xlu0 %103
  %v105 = vsel %vm65, %v60, 0.0
  %106 = vadd.xlane.f32.xlu0 %v105
  %v107 = vpop.xlane.xlu0 %106
  %v108 = vsel %vm65, %v61, 0.0
  %109 = vadd.xlane.f32.xlu0 %v108
  %v110 = vpop.xlane.xlu0 %109
  %v111 = vsel %vm65, %v62, 0.0
  %112 = vadd.xlane.f32.xlu0 %v111
  %v113 = vpop.xlane.xlu0 %112
  %v114 = vrcp.pop 32.0
  %v115 = vmul.f32 %v68, %v114
  %v116 = vmul.f32 %v71, %v114
  %v117 = vmul.f32 %v74, %v114
  %v118 = vmul.f32 %v77, %v114
  %v119 = vmul.f32 %v80, %v114
  %v120 = vmul.f32 %v83, %v114
  %v121 = vmul.f32 %v86, %v114
  %v122 = vmul.f32 %v89, %v114
  %v123 = vmul.f32 %v92, %v114
  %v124 = vmul.f32 %v95, %v114
  %v125 = vmul.f32 %v98, %v114
  %v126 = vmul.f32 %v101, %v114
  %v127 = vmul.f32 %v104, %v114
  %v128 = vmul.f32 %v107, %v114
  %v129 = vmul.f32 %v110, %v114
  %v130 = vmul.f32 %v113, %v114
  %v131 = vsub.f32 %v47, %v115
  %v132 = vsub.f32 %v48, %v116
  %v133 = vsub.f32 %v49, %v117
  %v134 = vsub.f32 %v50, %v118
  %v135 = vsub.f32 %v51, %v119
  %v136 = vsub.f32 %v52, %v120
  %v137 = vsub.f32 %v53, %v121
  %v138 = vsub.f32 %v54, %v122
  %v139 = vsub.f32 %v55, %v123
  %v140 = vsub.f32 %v56, %v124
  %v141 = vsub.f32 %v57, %v125
  %v142 = vsub.f32 %v58, %v126
  %v143 = vsub.f32 %v59, %v127
  %v144 = vsub.f32 %v60, %v128
  %v145 = vsub.f32 %v61, %v129
  %v146 = vsub.f32 %v62, %v130
  %v147 = vmul.f32 %v131, %v131
  %v148 = vmul.f32 %v132, %v132
  %v149 = vmul.f32 %v133, %v133
  %v150 = vmul.f32 %v134, %v134
  %v151 = vmul.f32 %v135, %v135
  %v152 = vmul.f32 %v136, %v136
  %v153 = vmul.f32 %v137, %v137
  %v154 = vmul.f32 %v138, %v138
  %v155 = vmul.f32 %v139, %v139
  %v156 = vmul.f32 %v140, %v140
  %v157 = vmul.f32 %v141, %v141
  %v158 = vmul.f32 %v142, %v142
  %v159 = vmul.f32 %v143, %v143
  %v160 = vmul.f32 %v144, %v144
  %v161 = vmul.f32 %v145, %v145
  %v162 = vmul.f32 %v146, %v146
  %v163 = vsel %vm65, %v147, 0.0
  %164 = vadd.xlane.f32.xlu0 %v163
  %v165 = vpop.xlane.xlu0 %164
  %v166 = vsel %vm65, %v148, 0.0
  %167 = vadd.xlane.f32.xlu0 %v166
  %v168 = vpop.xlane.xlu0 %167
  %v169 = vsel %vm65, %v149, 0.0
  %170 = vadd.xlane.f32.xlu0 %v169
  %v171 = vpop.xlane.xlu0 %170
  %v172 = vsel %vm65, %v150, 0.0
  %173 = vadd.xlane.f32.xlu0 %v172
  %v174 = vpop.xlane.xlu0 %173
  %v175 = vsel %vm65, %v151, 0.0
  %176 = vadd.xlane.f32.xlu0 %v175
  %v177 = vpop.xlane.xlu0 %176
  %v178 = vsel %vm65, %v152, 0.0
  %179 = vadd.xlane.f32.xlu0 %v178
  %v180 = vpop.xlane.xlu0 %179
  %v181 = vsel %vm65, %v153, 0.0
  %182 = vadd.xlane.f32.xlu0 %v181
  %v183 = vpop.xlane.xlu0 %182
  %v184 = vsel %vm65, %v154, 0.0
  %185 = vadd.xlane.f32.xlu0 %v184
  %v186 = vpop.xlane.xlu0 %185
  %v187 = vsel %vm65, %v155, 0.0
  %188 = vadd.xlane.f32.xlu0 %v187
  %v189 = vpop.xlane.xlu0 %188
  %v190 = vsel %vm65, %v156, 0.0
  %191 = vadd.xlane.f32.xlu0 %v190
  %v192 = vpop.xlane.xlu0 %191
  %v193 = vsel %vm65, %v157, 0.0
  %194 = vadd.xlane.f32.xlu0 %v193
  %v195 = vpop.xlane.xlu0 %194
  %v196 = vsel %vm65, %v158, 0.0
  %197 = vadd.xlane.f32.xlu0 %v196
  %v198 = vpop.xlane.xlu0 %197
  %v199 = vsel %vm65, %v159, 0.0
  %200 = vadd.xlane.f32.xlu0 %v199
  %v201 = vpop.xlane.xlu0 %200
  %v202 = vsel %vm65, %v160, 0.0
  %203 = vadd.xlane.f32.xlu0 %v202
  %v204 = vpop.xlane.xlu0 %203
  %v205 = vsel %vm65, %v161, 0.0
  %206 = vadd.xlane.f32.xlu0 %v205
  %v207 = vpop.xlane.xlu0 %206
  %v208 = vsel %vm65, %v162, 0.0
  %209 = vadd.xlane.f32.xlu0 %v208
  %v210 = vpop.xlane.xlu0 %209
  %v211 = vmul.f32 %v165, %v114
  %v212 = vmul.f32 %v168, %v114
  %v213 = vmul.f32 %v171, %v114
  %v214 = vmul.f32 %v174, %v114
  %v215 = vmul.f32 %v177, %v114
  %v216 = vmul.f32 %v180, %v114
  %v217 = vmul.f32 %v183, %v114
  %v218 = vmul.f32 %v186, %v114
  %v219 = vmul.f32 %v189, %v114
  %v220 = vmul.f32 %v192, %v114
  %v221 = vmul.f32 %v195, %v114
  %v222 = vmul.f32 %v198, %v114
  %v223 = vmul.f32 %v201, %v114
  %v224 = vmul.f32 %v204, %v114
  %v225 = vmul.f32 %v207, %v114
  %v226 = vmul.f32 %v210, %v114
  %v227 = vadd.f32 %v211, 1e-05
  %v228 = vadd.f32 %v212, 1e-05
  %v229 = vadd.f32 %v213, 1e-05
  %v230 = vadd.f32 %v214, 1e-05
  %v231 = vadd.f32 %v215, 1e-05
  %v232 = vadd.f32 %v216, 1e-05
  %v233 = vadd.f32 %v217, 1e-05
  %v234 = vadd.f32 %v218, 1e-05
  %v235 = vadd.f32 %v219, 1e-05
  %v236 = vadd.f32 %v220, 1e-05
  %v237 = vadd.f32 %v221, 1e-05
  %v238 = vadd.f32 %v222, 1e-05
  %v239 = vadd.f32 %v223, 1e-05
  %v240 = vadd.f32 %v224, 1e-05
  %v241 = vadd.f32 %v225, 1e-05
  %v242 = vadd.f32 %v226, 1e-05
  %v243 = vrsqrt.pop %v227
  %v244 = vrsqrt.pop %v228
  %v245 = vrsqrt.pop %v229
  %v246 = vrsqrt.pop %v230
  %v247 = vrsqrt.pop %v231
  %v248 = vrsqrt.pop %v232
  %v249 = vrsqrt.pop %v233
  %v250 = vrsqrt.pop %v234
  %v251 = vrsqrt.pop %v235
  %v252 = vrsqrt.pop %v236
  %v253 = vrsqrt.pop %v237
  %v254 = vrsqrt.pop %v238
  %v255 = vrsqrt.pop %v239
  %v256 = vrsqrt.pop %v240
  %v257 = vrsqrt.pop %v241
  %v258 = vrsqrt.pop %v242
  %v259 = vmul.f32 %v131, %v243
  %v260 = vmul.f32 %v132, %v244
  %v261 = vmul.f32 %v133, %v245
  %v262 = vmul.f32 %v134, %v246
  %v263 = vmul.f32 %v135, %v247
  %v264 = vmul.f32 %v136, %v248
  %v265 = vmul.f32 %v137, %v249
  %v266 = vmul.f32 %v138, %v250
  %v267 = vmul.f32 %v139, %v251
  %v268 = vmul.f32 %v140, %v252
  %v269 = vmul.f32 %v141, %v253
  %v270 = vmul.f32 %v142, %v254
  %v271 = vmul.f32 %v143, %v255
  %v272 = vmul.f32 %v144, %v256
  %v273 = vmul.f32 %v145, %v257
  %v274 = vmul.f32 %v146, %v258
  %v276 = vlaneseq
  %v277 = vshrl.u32 %v276, 7
  %v278 = vsub.s32 0, %v277
  %v279 = vrot.slane %v63, %v278
  %v281 = vmul.f32 %v259, %v279
  %v282 = vmul.f32 %v260, %v279
  %v283 = vmul.f32 %v261, %v279
  %v284 = vmul.f32 %v262, %v279
  %v285 = vmul.f32 %v263, %v279
  %v286 = vmul.f32 %v264, %v279
  %v287 = vmul.f32 %v265, %v279
  %v288 = vmul.f32 %v266, %v279
  %v289 = vmul.f32 %v267, %v279
  %v290 = vmul.f32 %v268, %v279
  %v291 = vmul.f32 %v269, %v279
  %v292 = vmul.f32 %v270, %v279
  %v293 = vmul.f32 %v271, %v279
  %v294 = vmul.f32 %v272, %v279
  %v295 = vmul.f32 %v273, %v279
  %v296 = vmul.f32 %v274, %v279
  %v298 = vlaneseq
  %v299 = vshrl.u32 %v298, 7
  %v300 = vsub.s32 0, %v299
  %v301 = vrot.slane %v64, %v300
  %v303 = vadd.f32 %v281, %v301
  %v304 = vadd.f32 %v282, %v301
  %v305 = vadd.f32 %v283, %v301
  %v306 = vadd.f32 %v284, %v301
  %v307 = vadd.f32 %v285, %v301
  %v308 = vadd.f32 %v286, %v301
  %v309 = vadd.f32 %v287, %v301
  %v310 = vadd.f32 %v288, %v301
  %v311 = vadd.f32 %v289, %v301
  %v312 = vadd.f32 %v290, %v301
  %v313 = vadd.f32 %v291, %v301
  %v314 = vadd.f32 %v292, %v301
  %v315 = vadd.f32 %v293, %v301
  %v316 = vadd.f32 %v294, %v301
  %v317 = vadd.f32 %v295, %v301
  %v318 = vadd.f32 %v296, %v301
  %v319 = vld [vmem:[%s3] sm:$0xff]
  %v320 = vld [vmem:[%s3 + $0x8] sm:$0xff]
  %v321 = vld [vmem:[%s3 + $0x10] sm:$0xff]
  %v322 = vld [vmem:[%s3 + $0x18] sm:$0xff]
  %v323 = vld [vmem:[%s4] sm:$0x1]
  %v325 = vlaneseq
  %v326 = vshrl.u32 %v325, 7
  %v327 = vsub.s32 0, %v326
  %v328 = vrot.slane %v323, %v327
  %v331 = vsel %vm65, %v303, 0
  %v334 = vsel %vm65, %v304, 0
  %v337 = vsel %vm65, %v305, 0
  %v340 = vsel %vm65, %v306, 0
  %v343 = vsel %vm65, %v307, 0
  %v346 = vsel %vm65, %v308, 0
  %v349 = vsel %vm65, %v309, 0
  %v352 = vsel %vm65, %v310, 0
  %v355 = vsel %vm65, %v311, 0
  %v358 = vsel %vm65, %v312, 0
  %v361 = vsel %vm65, %v313, 0
  %v364 = vsel %vm65, %v314, 0
  %v367 = vsel %vm65, %v315, 0
  %v370 = vsel %vm65, %v316, 0
  %v373 = vsel %vm65, %v317, 0
  %v376 = vsel %vm65, %v318, 0
  %378 = vmatprep.subr.mxu0 0.0
  %379 = vmatpush1.msra.mxu0 %v319
  %380 = vmatprep.subr.mxu0 0.0
  %381 = vmatpush1.msra.mxu0 %v320
  %382 = vmatprep.subr.mxu0 0.0
  %383 = vmatpush1.msra.mxu0 %v321
  %384 = vmatprep.subr.mxu0 0.0
  %385 = vmatpush1.msra.mxu0 %v322
  %386 = vmatprep.subr.mxu0 0.0
  %387 = vmatpush1.msra.mxu0 0.0
  %388 = vmatprep.subr.mxu0 0.0
  %389 = vmatpush1.msra.mxu0 0.0
  %390 = vmatprep.subr.mxu0 0.0
  %391 = vmatpush1.msra.mxu0 0.0
  %392 = vmatprep.subr.mxu0 0.0
  %393 = vmatpush1.msra.mxu0 0.0
  %394 = vmatprep.subr.mxu0 0.0
  %395 = vmatpush1.msra.mxu0 0.0
  %396 = vmatprep.subr.mxu0 0.0
  %397 = vmatpush1.msra.mxu0 0.0
  %398 = vmatprep.subr.mxu0 0.0
  %399 = vmatpush1.msra.mxu0 0.0
  %400 = vmatprep.subr.mxu0 0.0
  %401 = vmatpush1.msra.mxu0 0.0
  %402 = vmatprep.subr.mxu0 0.0
  %403 = vmatpush1.msra.mxu0 0.0
  %404 = vmatprep.subr.mxu0 0.0
  %405 = vmatpush1.msra.mxu0 0.0
  %406 = vmatprep.subr.mxu0 0.0
  %407 = vmatpush1.msra.mxu0 0.0
  %408 = vmatprep.subr.mxu0 0.0
  %409 = vmatpush1.msra.mxu0 0.0
  %410 = vmatprep.subr.mxu0 0.0
  %411 = vmatpush1.msra.mxu0 0.0
  %412 = vmatprep.subr.mxu0 0.0
  %413 = vmatpush1.msra.mxu0 0.0
  %414 = vmatprep.subr.mxu0 0.0
  %415 = vmatpush1.msra.mxu0 0.0
  %416 = vmatprep.subr.mxu0 0.0
  %417 = vmatpush1.msra.mxu0 0.0
  %418 = vmatprep.subr.mxu0 0.0
  %419 = vmatpush1.msra.mxu0 0.0
  %420 = vmatprep.subr.mxu0 0.0
  %421 = vmatpush1.msra.mxu0 0.0
  %422 = vmatprep.subr.mxu0 0.0
  %423 = vmatpush1.msra.mxu0 0.0
  %424 = vmatprep.subr.mxu0 0.0
  %425 = vmatpush1.msra.mxu0 0.0
  %426 = vmatprep.subr.mxu0 0.0
  %427 = vmatpush1.msra.mxu0 0.0
  %428 = vmatprep.subr.mxu0 0.0
  %429 = vmatpush1.msra.mxu0 0.0
  %430 = vmatprep.subr.mxu0 0.0
  %431 = vmatpush1.msra.mxu0 0.0
  %432 = vmatprep.subr.mxu0 0.0
  %433 = vmatpush1.msra.mxu0 0.0
  %434 = vmatprep.subr.mxu0 0.0
  %435 = vmatpush1.msra.mxu0 0.0
  %436 = vmatprep.subr.mxu0 0.0
  %437 = vmatpush1.msra.mxu0 0.0
  %438 = vmatprep.subr.mxu0 0.0
  %439 = vmatpush1.msra.mxu0 0.0
  %440 = vmatprep.subr.mxu0 0.0
  %441 = vmatpush1.msra.mxu0 0.0
  %442 = vmatprep.mubr.f32.mxu0 0.0
  %443 = vmatmul.mubr.f32.gmra.mrb[0].mxu0 %v331
  %v444 = vpop.f32.mrb[0].mxu0
  %v445 = vadd.f32 %v328, %v444
  %v446 = vpop.f32.mrb[0].mxu0
  %447 = vmatprep.mubr.f32.mxu0 0.0
  %448 = vmatmul.mubr.f32.gmra.mrb[0].mxu0 %v334
  %v449 = vpop.f32.mrb[0].mxu0
  %v450 = vadd.f32 %v328, %v449
  %v451 = vpop.f32.mrb[0].mxu0
  %452 = vmatprep.mubr.f32.mxu0 0.0
  %453 = vmatmul.mubr.f32.gmra.mrb[0].mxu0 %v337
  %v454 = vpop.f32.mrb[0].mxu0
  %v455 = vadd.f32 %v328, %v454
  %v456 = vpop.f32.mrb[0].mxu0
  %457 = vmatprep.mubr.f32.mxu0 0.0
  %458 = vmatmul.mubr.f32.gmra.mrb[0].mxu0 %v340
  %v459 = vpop.f32.mrb[0].mxu0
  %v460 = vadd.f32 %v328, %v459
  %v461 = vpop.f32.mrb[0].mxu0
  %462 = vmatprep.mubr.f32.mxu0 0.0
  %463 = vmatmul.mubr.f32.gmra.mrb[0].mxu0 %v343
  %v464 = vpop.f32.mrb[0].mxu0
  %v465 = vadd.f32 %v328, %v464
  %v466 = vpop.f32.mrb[0].mxu0
  %467 = vmatprep.mubr.f32.mxu0 0.0
  %468 = vmatmul.mubr.f32.gmra.mrb[0].mxu0 %v346
  %v469 = vpop.f32.mrb[0].mxu0
  %v470 = vadd.f32 %v328, %v469
  %v471 = vpop.f32.mrb[0].mxu0
  %472 = vmatprep.mubr.f32.mxu0 0.0
  %473 = vmatmul.mubr.f32.gmra.mrb[0].mxu0 %v349
  %v474 = vpop.f32.mrb[0].mxu0
  %v475 = vadd.f32 %v328, %v474
  %v476 = vpop.f32.mrb[0].mxu0
  %477 = vmatprep.mubr.f32.mxu0 0.0
  %478 = vmatmul.mubr.f32.gmra.mrb[0].mxu0 %v352
  %v479 = vpop.f32.mrb[0].mxu0
  %v480 = vadd.f32 %v328, %v479
  %v481 = vpop.f32.mrb[0].mxu0
  %482 = vmatprep.mubr.f32.mxu0 0.0
  %483 = vmatmul.mubr.f32.gmra.mrb[0].mxu0 %v355
  %v484 = vpop.f32.mrb[0].mxu0
  %v485 = vadd.f32 %v328, %v484
  %v486 = vpop.f32.mrb[0].mxu0
  %487 = vmatprep.mubr.f32.mxu0 0.0
  %488 = vmatmul.mubr.f32.gmra.mrb[0].mxu0 %v358
  %v489 = vpop.f32.mrb[0].mxu0
  %v490 = vadd.f32 %v328, %v489
  %v491 = vpop.f32.mrb[0].mxu0
  %492 = vmatprep.mubr.f32.mxu0 0.0
  %493 = vmatmul.mubr.f32.gmra.mrb[0].mxu0 %v361
  %v494 = vpop.f32.mrb[0].mxu0
  %v495 = vadd.f32 %v328, %v494
  %v496 = vpop.f32.mrb[0].mxu0
  %497 = vmatprep.mubr.f32.mxu0 0.0
  %498 = vmatmul.mubr.f32.gmra.mrb[0].mxu0 %v364
  %v499 = vpop.f32.mrb[0].mxu0
  %v500 = vadd.f32 %v328, %v499
  %v501 = vpop.f32.mrb[0].mxu0
  %502 = vmatprep.mubr.f32.mxu0 0.0
  %503 = vmatmul.mubr.f32.gmra.mrb[0].mxu0 %v367
  %v504 = vpop.f32.mrb[0].mxu0
  %v505 = vadd.f32 %v328, %v504
  %v506 = vpop.f32.mrb[0].mxu0
  %507 = vmatprep.mubr.f32.mxu0 0.0
  %508 = vmatmul.mubr.f32.gmra.mrb[0].mxu0 %v370
  %v509 = vpop.f32.mrb[0].mxu0
  %v510 = vadd.f32 %v328, %v509
  %v511 = vpop.f32.mrb[0].mxu0
  %512 = vmatprep.mubr.f32.mxu0 0.0
  %513 = vmatmul.mubr.f32.gmra.mrb[0].mxu0 %v373
  %v514 = vpop.f32.mrb[0].mxu0
  %v515 = vadd.f32 %v328, %v514
  %v516 = vpop.f32.mrb[0].mxu0
  %517 = vmatprep.mubr.f32.mxu0 0.0
  %518 = vmatmul.mubr.f32.gmra.mrb[0].mxu0 %v376
  %v519 = vpop.f32.mrb[0].mxu0
  %v520 = vadd.f32 %v328, %v519
  %v521 = vpop.f32.mrb[0].mxu0
  %522 = vdwg.mxu0
  %v523 = vmul.f32 %v445, 0.35355338
  %v524 = vmul.f32 %v450, 0.35355338
  %v525 = vmul.f32 %v455, 0.35355338
  %v526 = vmul.f32 %v460, 0.35355338
  %v527 = vmul.f32 %v465, 0.35355338
  %v528 = vmul.f32 %v470, 0.35355338
  %v529 = vmul.f32 %v475, 0.35355338
  %v530 = vmul.f32 %v480, 0.35355338
  %v531 = vld [vmem:[%s7] sm:$0xff]
  %v532 = vld [vmem:[%s7 + $0x8] sm:$0xff]
  %v533 = vld [vmem:[%s7 + $0x10] sm:$0xff]
  %v534 = vld [vmem:[%s7 + $0x18] sm:$0xff]
  %v535 = vld [vmem:[%s7 + $0x20] sm:$0xff]
  %v536 = vld [vmem:[%s7 + $0x28] sm:$0xff]
  %v537 = vld [vmem:[%s7 + $0x30] sm:$0xff]
  %v538 = vld [vmem:[%s7 + $0x38] sm:$0xff]
  %547 = vrot.lane.b32.xlu0 %v445, 96
  %v548 = vpop.permute.xlu0 %547
  %549 = vrot.lane.b32.xlu0 %v450, 96
  %v550 = vpop.permute.xlu0 %549
  %551 = vrot.lane.b32.xlu0 %v455, 96
  %v552 = vpop.permute.xlu0 %551
  %553 = vrot.lane.b32.xlu0 %v460, 96
  %v554 = vpop.permute.xlu0 %553
  %555 = vrot.lane.b32.xlu0 %v465, 96
  %v556 = vpop.permute.xlu0 %555
  %557 = vrot.lane.b32.xlu0 %v470, 96
  %v558 = vpop.permute.xlu0 %557
  %559 = vrot.lane.b32.xlu0 %v475, 96
  %v560 = vpop.permute.xlu0 %559
  %561 = vrot.lane.b32.xlu0 %v480, 96
  %v562 = vpop.permute.xlu0 %561
  %vm563 = vcmask 64512
  %v565 = vsel %vm563, %v523, 0
  %v568 = vsel %vm563, %v524, 0
  %v571 = vsel %vm563, %v525, 0
  %v574 = vsel %vm563, %v526, 0
  %v577 = vsel %vm563, %v527, 0
  %v580 = vsel %vm563, %v528, 0
  %v583 = vsel %vm563, %v529, 0
  %v586 = vsel %vm563, %v530, 0
  %v588 = vsel %vm563, %v548, 0
  %v590 = vsel %vm563, %v550, 0
  %v592 = vsel %vm563, %v552, 0
  %v594 = vsel %vm563, %v554, 0
  %v596 = vsel %vm563, %v556, 0
  %v598 = vsel %vm563, %v558, 0
  %v600 = vsel %vm563, %v560, 0
  %v602 = vsel %vm563, %v562, 0
  %604 = vmatprep.subr.mxu0 0.0
  %605 = vmatpush1.xpose.msra.mxu0 %v588
  %606 = vmatprep.subr.mxu0 0.0
  %607 = vmatpush1.xpose.msra.mxu0 %v590
  %608 = vmatprep.subr.mxu0 0.0
  %609 = vmatpush1.xpose.msra.mxu0 %v592
  %610 = vmatprep.subr.mxu0 0.0
  %611 = vmatpush1.xpose.msra.mxu0 %v594
  %612 = vmatprep.subr.mxu0 0.0
  %613 = vmatpush1.xpose.msra.mxu0 %v596
  %614 = vmatprep.subr.mxu0 0.0
  %615 = vmatpush1.xpose.msra.mxu0 %v598
  %616 = vmatprep.subr.mxu0 0.0
  %617 = vmatpush1.xpose.msra.mxu0 %v600
  %618 = vmatprep.subr.mxu0 0.0
  %619 = vmatpush1.xpose.msra.mxu0 %v602
  %620 = vmatprep.subr.mxu0 0.0
  %621 = vmatpush1.xpose.msra.mxu0 0.0
  %622 = vmatprep.subr.mxu0 0.0
  %623 = vmatpush1.xpose.msra.mxu0 0.0
  %624 = vmatprep.subr.mxu0 0.0
  %625 = vmatpush1.xpose.msra.mxu0 0.0
  %626 = vmatprep.subr.mxu0 0.0
  %627 = vmatpush1.xpose.msra.mxu0 0.0
  %628 = vmatprep.subr.mxu0 0.0
  %629 = vmatpush1.xpose.msra.mxu0 0.0
  %630 = vmatprep.subr.mxu0 0.0
  %631 = vmatpush1.xpose.msra.mxu0 0.0
  %632 = vmatprep.subr.mxu0 0.0
  %633 = vmatpush1.xpose.msra.mxu0 0.0
  %634 = vmatprep.subr.mxu0 0.0
  %635 = vmatpush1.xpose.msra.mxu0 0.0
  %636 = vmatprep.subr.mxu0 0.0
  %637 = vmatpush1.xpose.msra.mxu0 0.0
  %638 = vmatprep.subr.mxu0 0.0
  %639 = vmatpush1.xpose.msra.mxu0 0.0
  %640 = vmatprep.subr.mxu0 0.0
  %641 = vmatpush1.xpose.msra.mxu0 0.0
  %642 = vmatprep.subr.mxu0 0.0
  %643 = vmatpush1.xpose.msra.mxu0 0.0
  %644 = vmatprep.subr.mxu0 0.0
  %645 = vmatpush1.xpose.msra.mxu0 0.0
  %646 = vmatprep.subr.mxu0 0.0
  %647 = vmatpush1.xpose.msra.mxu0 0.0
  %648 = vmatprep.subr.mxu0 0.0
  %649 = vmatpush1.xpose.msra.mxu0 0.0
  %650 = vmatprep.subr.mxu0 0.0
  %651 = vmatpush1.xpose.msra.mxu0 0.0
  %652 = vmatprep.subr.mxu0 0.0
  %653 = vmatpush1.xpose.msra.mxu0 0.0
  %654 = vmatprep.subr.mxu0 0.0
  %655 = vmatpush1.xpose.msra.mxu0 0.0
  %656 = vmatprep.subr.mxu0 0.0
  %657 = vmatpush1.xpose.msra.mxu0 0.0
  %658 = vmatprep.subr.mxu0 0.0
  %659 = vmatpush1.xpose.msra.mxu0 0.0
  %660 = vmatprep.subr.mxu0 0.0
  %661 = vmatpush1.xpose.msra.mxu0 0.0
  %662 = vmatprep.subr.mxu0 0.0
  %663 = vmatpush1.xpose.msra.mxu0 0.0
  %664 = vmatprep.subr.mxu0 0.0
  %665 = vmatpush1.xpose.msra.mxu0 0.0
  %666 = vmatprep.subr.mxu0 0.0
  %667 = vmatpush1.xpose.msra.mxu0 0.0
  %668 = vmatprep.mubr.f32.mxu0 0.0
  %669 = vmatmul.mubr.f32.gmra.mrb[0].mxu0 %v565
  %v670 = vpop.f32.mrb[0].mxu0
  %v671 = vadd.f32 %v531, %v670
  %v672 = vpop.f32.mrb[0].mxu0
  %673 = vmatprep.mubr.f32.mxu0 0.0
  %674 = vmatmul.mubr.f32.gmra.mrb[0].mxu0 %v568
  %v675 = vpop.f32.mrb[0].mxu0
  %v676 = vadd.f32 %v532, %v675
  %v677 = vpop.f32.mrb[0].mxu0
  %678 = vmatprep.mubr.f32.mxu0 0.0
  %679 = vmatmul.mubr.f32.gmra.mrb[0].mxu0 %v571
  %v680 = vpop.f32.mrb[0].mxu0
  %v681 = vadd.f32 %v533, %v680
  %v682 = vpop.f32.mrb[0].mxu0
  %683 = vmatprep.mubr.f32.mxu0 0.0
  %684 = vmatmul.mubr.f32.gmra.mrb[0].mxu0 %v574
  %v685 = vpop.f32.mrb[0].mxu0
  %v686 = vadd.f32 %v534, %v685
  %v687 = vpop.f32.mrb[0].mxu0
  %688 = vmatprep.mubr.f32.mxu0 0.0
  %689 = vmatmul.mubr.f32.gmra.mrb[0].mxu0 %v577
  %v690 = vpop.f32.mrb[0].mxu0
  %v691 = vadd.f32 %v535, %v690
  %v692 = vpop.f32.mrb[0].mxu0
  %693 = vmatprep.mubr.f32.mxu0 0.0
  %694 = vmatmul.mubr.f32.gmra.mrb[0].mxu0 %v580
  %v695 = vpop.f32.mrb[0].mxu0
  %v696 = vadd.f32 %v536, %v695
  %v697 = vpop.f32.mrb[0].mxu0
  %698 = vmatprep.mubr.f32.mxu0 0.0
  %699 = vmatmul.mubr.f32.gmra.mrb[0].mxu0 %v583
  %v700 = vpop.f32.mrb[0].mxu0
  %v701 = vadd.f32 %v537, %v700
  %v702 = vpop.f32.mrb[0].mxu0
  %703 = vmatprep.mubr.f32.mxu0 0.0
  %704 = vmatmul.mubr.f32.gmra.mrb[0].mxu0 %v586
  %v705 = vpop.f32.mrb[0].mxu0
  %v706 = vadd.f32 %v538, %v705
  %v707 = vpop.f32.mrb[0].mxu0
  %708 = vdwg.mxu0
  %vm709 = vcmask 523264
  %v710 = vsel %vm709, %v671, -inf
  %711 = vmax.xlane.f32.xlu0 %v710
  %v712 = vpop.xlane.xlu0 %711
  %v713 = vsel %vm709, %v676, -inf
  %714 = vmax.xlane.f32.xlu0 %v713
  %v715 = vpop.xlane.xlu0 %714
  %v716 = vsel %vm709, %v681, -inf
  %717 = vmax.xlane.f32.xlu0 %v716
  %v718 = vpop.xlane.xlu0 %717
  %v719 = vsel %vm709, %v686, -inf
  %720 = vmax.xlane.f32.xlu0 %v719
  %v721 = vpop.xlane.xlu0 %720
  %v722 = vsel %vm709, %v691, -inf
  %723 = vmax.xlane.f32.xlu0 %v722
  %v724 = vpop.xlane.xlu0 %723
  %v725 = vsel %vm709, %v696, -inf
  %726 = vmax.xlane.f32.xlu0 %v725
  %v727 = vpop.xlane.xlu0 %726
  %v728 = vsel %vm709, %v701, -inf
  %729 = vmax.xlane.f32.xlu0 %v728
  %v730 = vpop.xlane.xlu0 %729
  %v731 = vsel %vm709, %v706, -inf
  %732 = vmax.xlane.f32.xlu0 %v731
  %v733 = vpop.xlane.xlu0 %732
  %v734 = vsub.f32 %v671, %v712
  %v735 = vsub.f32 %v676, %v715
  %v736 = vsub.f32 %v681, %v718
  %v737 = vsub.f32 %v686, %v721
  %v738 = vsub.f32 %v691, %v724
  %v739 = vsub.f32 %v696, %v727
  %v740 = vsub.f32 %v701, %v730
  %v741 = vsub.f32 %v706, %v733
  %v742 = vmul.f32 %v734, 1.442695
  %v743 = vpow.pop %v742
  %v744 = vmul.f32 %v735, 1.442695
  %v745 = vpow.pop %v744
  %v746 = vmul.f32 %v736, 1.442695
  %v747 = vpow.pop %v746
  %v748 = vmul.f32 %v737, 1.442695
  %v749 = vpow.pop %v748
  %v750 = vmul.f32 %v738, 1.442695
  %v751 = vpow.pop %v750
  %v752 = vmul.f32 %v739, 1.442695
  %v753 = vpow.pop %v752
  %v754 = vmul.f32 %v740, 1.442695
  %v755 = vpow.pop %v754
  %v756 = vmul.f32 %v741, 1.442695
  %v757 = vpow.pop %v756
  %758 = vrot.lane.b32.xlu0 %v445, 64
  %v759 = vpop.permute.xlu0 %758
  %760 = vrot.lane.b32.xlu0 %v450, 64
  %v761 = vpop.permute.xlu0 %760
  %762 = vrot.lane.b32.xlu0 %v455, 64
  %v763 = vpop.permute.xlu0 %762
  %764 = vrot.lane.b32.xlu0 %v460, 64
  %v765 = vpop.permute.xlu0 %764
  %766 = vrot.lane.b32.xlu0 %v465, 64
  %v767 = vpop.permute.xlu0 %766
  %768 = vrot.lane.b32.xlu0 %v470, 64
  %v769 = vpop.permute.xlu0 %768
  %770 = vrot.lane.b32.xlu0 %v475, 64
  %v771 = vpop.permute.xlu0 %770
  %772 = vrot.lane.b32.xlu0 %v480, 64
  %v773 = vpop.permute.xlu0 %772
  %v783 = vsel %vm709, %v743, 0
  %v786 = vsel %vm709, %v745, 0
  %v789 = vsel %vm709, %v747, 0
  %v792 = vsel %vm709, %v749, 0
  %v795 = vsel %vm709, %v751, 0
  %v798 = vsel %vm709, %v753, 0
  %v801 = vsel %vm709, %v755, 0
  %v804 = vsel %vm709, %v757, 0
  %806 = vmatprep.subr.mxu0 0.0
  %807 = vmatpush1.msra.mxu0 %v759
  %808 = vmatprep.subr.mxu0 0.0
  %809 = vmatpush1.msra.mxu0 %v761
  %810 = vmatprep.subr.mxu0 0.0
  %811 = vmatpush1.msra.mxu0 %v763
  %812 = vmatprep.subr.mxu0 0.0
  %813 = vmatpush1.msra.mxu0 %v765
  %814 = vmatprep.subr.mxu0 0.0
  %815 = vmatpush1.msra.mxu0 %v767
  %816 = vmatprep.subr.mxu0 0.0
  %817 = vmatpush1.msra.mxu0 %v769
  %818 = vmatprep.subr.mxu0 0.0
  %819 = vmatpush1.msra.mxu0 %v771
  %820 = vmatprep.subr.mxu0 0.0
  %821 = vmatpush1.msra.mxu0 %v773
  %822 = vmatprep.subr.mxu0 0.0
  %823 = vmatpush1.msra.mxu0 0.0
  %824 = vmatprep.subr.mxu0 0.0
  %825 = vmatpush1.msra.mxu0 0.0
  %826 = vmatprep.subr.mxu0 0.0
  %827 = vmatpush1.msra.mxu0 0.0
  %828 = vmatprep.subr.mxu0 0.0
  %829 = vmatpush1.msra.mxu0 0.0
  %830 = vmatprep.subr.mxu0 0.0
  %831 = vmatpush1.msra.mxu0 0.0
  %832 = vmatprep.subr.mxu0 0.0
  %833 = vmatpush1.msra.mxu0 0.0
  %834 = vmatprep.subr.mxu0 0.0
  %835 = vmatpush1.msra.mxu0 0.0
  %836 = vmatprep.subr.mxu0 0.0
  %837 = vmatpush1.msra.mxu0 0.0
  %838 = vmatprep.subr.mxu0 0.0
  %839 = vmatpush1.msra.mxu0 0.0
  %840 = vmatprep.subr.mxu0 0.0
  %841 = vmatpush1.msra.mxu0 0.0
  %842 = vmatprep.subr.mxu0 0.0
  %843 = vmatpush1.msra.mxu0 0.0
  %844 = vmatprep.subr.mxu0 0.0
  %845 = vmatpush1.msra.mxu0 0.0
  %846 = vmatprep.subr.mxu0 0.0
  %847 = vmatpush1.msra.mxu0 0.0
  %848 = vmatprep.subr.mxu0 0.0
  %849 = vmatpush1.msra.mxu0 0.0
  %850 = vmatprep.subr.mxu0 0.0
  %851 = vmatpush1.msra.mxu0 0.0
  %852 = vmatprep.subr.mxu0 0.0
  %853 = vmatpush1.msra.mxu0 0.0
  %854 = vmatprep.subr.mxu0 0.0
  %855 = vmatpush1.msra.mxu0 0.0
  %856 = vmatprep.subr.mxu0 0.0
  %857 = vmatpush1.msra.mxu0 0.0
  %858 = vmatprep.subr.mxu0 0.0
  %859 = vmatpush1.msra.mxu0 0.0
  %860 = vmatprep.subr.mxu0 0.0
  %861 = vmatpush1.msra.mxu0 0.0
  %862 = vmatprep.subr.mxu0 0.0
  %863 = vmatpush1.msra.mxu0 0.0
  %864 = vmatprep.subr.mxu0 0.0
  %865 = vmatpush1.msra.mxu0 0.0
  %866 = vmatprep.subr.mxu0 0.0
  %867 = vmatpush1.msra.mxu0 0.0
  %868 = vmatprep.subr.mxu0 0.0
  %869 = vmatpush1.msra.mxu0 0.0
  %870 = vmatprep.mubr.f32.mxu0 0.0
  %871 = vmatmul.mubr.f32.gmra.mrb[0].mxu0 %v783
  %v872 = vpop.f32.mrb[0].mxu0
  %v873 = vadd.f32 0.0, %v872
  %v874 = vpop.f32.mrb[0].mxu0
  %875 = vmatprep.mubr.f32.mxu0 0.0
  %876 = vmatmul.mubr.f32.gmra.mrb[0].mxu0 %v786
  %v877 = vpop.f32.mrb[0].mxu0
  %v878 = vadd.f32 0.0, %v877
  %v879 = vpop.f32.mrb[0].mxu0
  %880 = vmatprep.mubr.f32.mxu0 0.0
  %881 = vmatmul.mubr.f32.gmra.mrb[0].mxu0 %v789
  %v882 = vpop.f32.mrb[0].mxu0
  %v883 = vadd.f32 0.0, %v882
  %v884 = vpop.f32.mrb[0].mxu0
  %885 = vmatprep.mubr.f32.mxu0 0.0
  %886 = vmatmul.mubr.f32.gmra.mrb[0].mxu0 %v792
  %v887 = vpop.f32.mrb[0].mxu0
  %v888 = vadd.f32 0.0, %v887
  %v889 = vpop.f32.mrb[0].mxu0
  %890 = vmatprep.mubr.f32.mxu0 0.0
  %891 = vmatmul.mubr.f32.gmra.mrb[0].mxu0 %v795
  %v892 = vpop.f32.mrb[0].mxu0
  %v893 = vadd.f32 0.0, %v892
  %v894 = vpop.f32.mrb[0].mxu0
  %895 = vmatprep.mubr.f32.mxu0 0.0
  %896 = vmatmul.mubr.f32.gmra.mrb[0].mxu0 %v798
  %v897 = vpop.f32.mrb[0].mxu0
  %v898 = vadd.f32 0.0, %v897
  %v899 = vpop.f32.mrb[0].mxu0
  %900 = vmatprep.mubr.f32.mxu0 0.0
  %901 = vmatmul.mubr.f32.gmra.mrb[0].mxu0 %v801
  %v902 = vpop.f32.mrb[0].mxu0
  %v903 = vadd.f32 0.0, %v902
  %v904 = vpop.f32.mrb[0].mxu0
  %905 = vmatprep.mubr.f32.mxu0 0.0
  %906 = vmatmul.mubr.f32.gmra.mrb[0].mxu0 %v804
  %v907 = vpop.f32.mrb[0].mxu0
  %v908 = vadd.f32 0.0, %v907
  %v909 = vpop.f32.mrb[0].mxu0
  %910 = vdwg.mxu0
  %v911 = vsel %vm709, %v743, 0.0
  %912 = vadd.xlane.f32.xlu0 %v911
  %v913 = vpop.xlane.xlu0 %912
  %v914 = vsel %vm709, %v745, 0.0
  %915 = vadd.xlane.f32.xlu0 %v914
  %v916 = vpop.xlane.xlu0 %915
  %v917 = vsel %vm709, %v747, 0.0
  %918 = vadd.xlane.f32.xlu0 %v917
  %v919 = vpop.xlane.xlu0 %918
  %v920 = vsel %vm709, %v749, 0.0
  %921 = vadd.xlane.f32.xlu0 %v920
  %v922 = vpop.xlane.xlu0 %921
  %v923 = vsel %vm709, %v751, 0.0
  %924 = vadd.xlane.f32.xlu0 %v923
  %v925 = vpop.xlane.xlu0 %924
  %v926 = vsel %vm709, %v753, 0.0
  %927 = vadd.xlane.f32.xlu0 %v926
  %v928 = vpop.xlane.xlu0 %927
  %v929 = vsel %vm709, %v755, 0.0
  %930 = vadd.xlane.f32.xlu0 %v929
  %v931 = vpop.xlane.xlu0 %930
  %v932 = vsel %vm709, %v757, 0.0
  %933 = vadd.xlane.f32.xlu0 %v932
  %v934 = vpop.xlane.xlu0 %933
  %v935 = vrcp.pop %v913
  %v936 = vrcp.pop %v916
  %v937 = vrcp.pop %v919
  %v938 = vrcp.pop %v922
  %v939 = vrcp.pop %v925
  %v940 = vrcp.pop %v928
  %v941 = vrcp.pop %v931
  %v942 = vrcp.pop %v934
  %v943 = vmul.f32 %v873, %v935
  %v944 = vmul.f32 %v878, %v936
  %v945 = vmul.f32 %v883, %v937
  %v946 = vmul.f32 %v888, %v938
  %v947 = vmul.f32 %v893, %v939
  %v948 = vmul.f32 %v898, %v940
  %v949 = vmul.f32 %v903, %v941
  %v950 = vmul.f32 %v908, %v942
  %951 = vst.msk [vmem:[#allocation2] sm:$0xff] %vm563, %v943
  %952 = vst.msk [vmem:[#allocation2 + $0x8] sm:$0xff] %vm563, %v944
  %953 = vst.msk [vmem:[#allocation2 + $0x10] sm:$0xff] %vm563, %v945
  %954 = vst.msk [vmem:[#allocation2 + $0x18] sm:$0xff] %vm563, %v946
  %955 = vst.msk [vmem:[#allocation2 + $0x20] sm:$0xff] %vm563, %v947
  %956 = vst.msk [vmem:[#allocation2 + $0x28] sm:$0xff] %vm563, %v948
  %957 = vst.msk [vmem:[#allocation2 + $0x30] sm:$0xff] %vm563, %v949
  %958 = vst.msk [vmem:[#allocation2 + $0x38] sm:$0xff] %vm563, %v950
  %s959 = scalar_lea.vmem %s7, 64
  %v960 = vld [vmem:[%s959] sm:$0xff]
  %v961 = vld [vmem:[%s959 + $0x8] sm:$0xff]
  %v962 = vld [vmem:[%s959 + $0x10] sm:$0xff]
  %v963 = vld [vmem:[%s959 + $0x18] sm:$0xff]
  %v964 = vld [vmem:[%s959 + $0x20] sm:$0xff]
  %v965 = vld [vmem:[%s959 + $0x28] sm:$0xff]
  %v966 = vld [vmem:[%s959 + $0x30] sm:$0xff]
  %v967 = vld [vmem:[%s959 + $0x38] sm:$0xff]
  %968 = vrot.lane.b32.xlu0 %v523, 120
  %v969 = vpop.permute.xlu0 %968
  %970 = vrot.lane.b32.xlu0 %v524, 120
  %v971 = vpop.permute.xlu0 %970
  %972 = vrot.lane.b32.xlu0 %v525, 120
  %v973 = vpop.permute.xlu0 %972
  %974 = vrot.lane.b32.xlu0 %v526, 120
  %v975 = vpop.permute.xlu0 %974
  %976 = vrot.lane.b32.xlu0 %v527, 120
  %v977 = vpop.permute.xlu0 %976
  %978 = vrot.lane.b32.xlu0 %v528, 120
  %v979 = vpop.permute.xlu0 %978
  %980 = vrot.lane.b32.xlu0 %v529, 120
  %v981 = vpop.permute.xlu0 %980
  %982 = vrot.lane.b32.xlu0 %v530, 120
  %v983 = vpop.permute.xlu0 %982
  %984 = vrot.lane.b32.xlu0 %v445, 88
  %v985 = vpop.permute.xlu0 %984
  %986 = vrot.lane.b32.xlu0 %v450, 88
  %v987 = vpop.permute.xlu0 %986
  %988 = vrot.lane.b32.xlu0 %v455, 88
  %v989 = vpop.permute.xlu0 %988
  %990 = vrot.lane.b32.xlu0 %v460, 88
  %v991 = vpop.permute.xlu0 %990
  %992 = vrot.lane.b32.xlu0 %v465, 88
  %v993 = vpop.permute.xlu0 %992
  %994 = vrot.lane.b32.xlu0 %v470, 88
  %v995 = vpop.permute.xlu0 %994
  %996 = vrot.lane.b32.xlu0 %v475, 88
  %v997 = vpop.permute.xlu0 %996
  %998 = vrot.lane.b32.xlu0 %v480, 88
  %v999 = vpop.permute.xlu0 %998
  %v1000 = vsel %vm563, %v969, 0
  %v1002 = vsel %vm563, %v971, 0
  %v1004 = vsel %vm563, %v973, 0
  %v1006 = vsel %vm563, %v975, 0
  %v1008 = vsel %vm563, %v977, 0
  %v1010 = vsel %vm563, %v979, 0
  %v1012 = vsel %vm563, %v981, 0
  %v1014 = vsel %vm563, %v983, 0
  %v1016 = vsel %vm563, %v985, 0
  %v1018 = vsel %vm563, %v987, 0
  %v1020 = vsel %vm563, %v989, 0
  %v1022 = vsel %vm563, %v991, 0
  %v1024 = vsel %vm563, %v993, 0
  %v1026 = vsel %vm563, %v995, 0
  %v1028 = vsel %vm563, %v997, 0
  %v1030 = vsel %vm563, %v999, 0
  %1032 = vmatprep.subr.mxu0 0.0
  %1033 = vmatpush1.xpose.msra.mxu0 %v1016
  %1034 = vmatprep.subr.mxu0 0.0
  %1035 = vmatpush1.xpose.msra.mxu0 %v1018
  %1036 = vmatprep.subr.mxu0 0.0
  %1037 = vmatpush1.xpose.msra.mxu0 %v1020
  %1038 = vmatprep.subr.mxu0 0.0
  %1039 = vmatpush1.xpose.msra.mxu0 %v1022
  %1040 = vmatprep.subr.mxu0 0.0
  %1041 = vmatpush1.xpose.msra.mxu0 %v1024
  %1042 = vmatprep.subr.mxu0 0.0
  %1043 = vmatpush1.xpose.msra.mxu0 %v1026
  %1044 = vmatprep.subr.mxu0 0.0
  %1045 = vmatpush1.xpose.msra.mxu0 %v1028
  %1046 = vmatprep.subr.mxu0 0.0
  %1047 = vmatpush1.xpose.msra.mxu0 %v1030
  %1048 = vmatprep.subr.mxu0 0.0
  %1049 = vmatpush1.xpose.msra.mxu0 0.0
  %1050 = vmatprep.subr.mxu0 0.0
  %1051 = vmatpush1.xpose.msra.mxu0 0.0
  %1052 = vmatprep.subr.mxu0 0.0
  %1053 = vmatpush1.xpose.msra.mxu0 0.0
  %1054 = vmatprep.subr.mxu0 0.0
  %1055 = vmatpush1.xpose.msra.mxu0 0.0
  %1056 = vmatprep.subr.mxu0 0.0
  %1057 = vmatpush1.xpose.msra.mxu0 0.0
  %1058 = vmatprep.subr.mxu0 0.0
  %1059 = vmatpush1.xpose.msra.mxu0 0.0
  %1060 = vmatprep.subr.mxu0 0.0
  %1061 = vmatpush1.xpose.msra.mxu0 0.0
  %1062 = vmatprep.subr.mxu0 0.0
  %1063 = vmatpush1.xpose.msra.mxu0 0.0
  %1064 = vmatprep.subr.mxu0 0.0
  %1065 = vmatpush1.xpose.msra.mxu0 0.0
  %1066 = vmatprep.subr.mxu0 0.0
  %1067 = vmatpush1.xpose.msra.mxu0 0.0
  %1068 = vmatprep.subr.mxu0 0.0
  %1069 = vmatpush1.xpose.msra.mxu0 0.0
  %1070 = vmatprep.subr.mxu0 0.0
  %1071 = vmatpush1.xpose.msra.mxu0 0.0
  %1072 = vmatprep.subr.mxu0 0.0
  %1073 = vmatpush1.xpose.msra.mxu0 0.0
  %1074 = vmatprep.subr.mxu0 0.0
  %1075 = vmatpush1.xpose.msra.mxu0 0.0
  %1076 = vmatprep.subr.mxu0 0.0
  %1077 = vmatpush1.xpose.msra.mxu0 0.0
  %1078 = vmatprep.subr.mxu0 0.0
  %1079 = vmatpush1.xpose.msra.mxu0 0.0
  %1080 = vmatprep.subr.mxu0 0.0
  %1081 = vmatpush1.xpose.msra.mxu0 0.0
  %1082 = vmatprep.subr.mxu0 0.0
  %1083 = vmatpush1.xpose.msra.mxu0 0.0
  %1084 = vmatprep.subr.mxu0 0.0
  %1085 = vmatpush1.xpose.msra.mxu0 0.0
  %1086 = vmatprep.subr.mxu0 0.0
  %1087 = vmatpush1.xpose.msra.mxu0 0.0
  %1088 = vmatprep.subr.mxu0 0.0
  %1089 = vmatpush1.xpose.msra.mxu0 0.0
  %1090 = vmatprep.subr.mxu0 0.0
  %1091 = vmatpush1.xpose.msra.mxu0 0.0
  %1092 = vmatprep.subr.mxu0 0.0
  %1093 = vmatpush1.xpose.msra.mxu0 0.0
  %1094 = vmatprep.subr.mxu0 0.0
  %1095 = vmatpush1.xpose.msra.mxu0 0.0
  %1096 = vmatprep.mubr.f32.mxu0 0.0
  %1097 = vmatmul.mubr.f32.gmra.mrb[0].mxu0 %v1000
  %v1098 = vpop.f32.mrb[0].mxu0
  %v1099 = vadd.f32 %v960, %v1098
  %v1100 = vpop.f32.mrb[0].mxu0
  %1101 = vmatprep.mubr.f32.mxu0 0.0
  %1102 = vmatmul.mubr.f32.gmra.mrb[0].mxu0 %v1002
  %v1103 = vpop.f32.mrb[0].mxu0
  %v1104 = vadd.f32 %v961, %v1103
  %v1105 = vpop.f32.mrb[0].mxu0
  %1106 = vmatprep.mubr.f32.mxu0 0.0
  %1107 = vmatmul.mubr.f32.gmra.mrb[0].mxu0 %v1004
  %v1108 = vpop.f32.mrb[0].mxu0
  %v1109 = vadd.f32 %v962, %v1108
  %v1110 = vpop.f32.mrb[0].mxu0
  %1111 = vmatprep.mubr.f32.mxu0 0.0
  %1112 = vmatmul.mubr.f32.gmra.mrb[0].mxu0 %v1006
  %v1113 = vpop.f32.mrb[0].mxu0
  %v1114 = vadd.f32 %v963, %v1113
  %v1115 = vpop.f32.mrb[0].mxu0
  %1116 = vmatprep.mubr.f32.mxu0 0.0
  %1117 = vmatmul.mubr.f32.gmra.mrb[0].mxu0 %v1008
  %v1118 = vpop.f32.mrb[0].mxu0
  %v1119 = vadd.f32 %v964, %v1118
  %v1120 = vpop.f32.mrb[0].mxu0
  %1121 = vmatprep.mubr.f32.mxu0 0.0
  %1122 = vmatmul.mubr.f32.gmra.mrb[0].mxu0 %v1010
  %v1123 = vpop.f32.mrb[0].mxu0
  %v1124 = vadd.f32 %v965, %v1123
  %v1125 = vpop.f32.mrb[0].mxu0
  %1126 = vmatprep.mubr.f32.mxu0 0.0
  %1127 = vmatmul.mubr.f32.gmra.mrb[0].mxu0 %v1012
  %v1128 = vpop.f32.mrb[0].mxu0
  %v1129 = vadd.f32 %v966, %v1128
  %v1130 = vpop.f32.mrb[0].mxu0
  %1131 = vmatprep.mubr.f32.mxu0 0.0
  %1132 = vmatmul.mubr.f32.gmra.mrb[0].mxu0 %v1014
  %v1133 = vpop.f32.mrb[0].mxu0
  %v1134 = vadd.f32 %v967, %v1133
  %v1135 = vpop.f32.mrb[0].mxu0
  %1136 = vdwg.mxu0
  %v1137 = vsel %vm709, %v1099, -inf
  %1138 = vmax.xlane.f32.xlu0 %v1137
  %v1139 = vpop.xlane.xlu0 %1138
  %v1140 = vsel %vm709, %v1104, -inf
  %1141 = vmax.xlane.f32.xlu0 %v1140
  %v1142 = vpop.xlane.xlu0 %1141
  %v1143 = vsel %vm709, %v1109, -inf
  %1144 = vmax.xlane.f32.xlu0 %v1143
  %v1145 = vpop.xlane.xlu0 %1144
  %v1146 = vsel %vm709, %v1114, -inf
  %1147 = vmax.xlane.f32.xlu0 %v1146
  %v1148 = vpop.xlane.xlu0 %1147
  %v1149 = vsel %vm709, %v1119, -inf
  %1150 = vmax.xlane.f32.xlu0 %v1149
  %v1151 = vpop.xlane.xlu0 %1150
  %v1152 = vsel %vm709, %v1124, -inf
  %1153 = vmax.xlane.f32.xlu0 %v1152
  %v1154 = vpop.xlane.xlu0 %1153
  %v1155 = vsel %vm709, %v1129, -inf
  %1156 = vmax.xlane.f32.xlu0 %v1155
  %v1157 = vpop.xlane.xlu0 %1156
  %v1158 = vsel %vm709, %v1134, -inf
  %1159 = vmax.xlane.f32.xlu0 %v1158
  %v1160 = vpop.xlane.xlu0 %1159
  %v1161 = vsub.f32 %v1099, %v1139
  %v1162 = vsub.f32 %v1104, %v1142
  %v1163 = vsub.f32 %v1109, %v1145
  %v1164 = vsub.f32 %v1114, %v1148
  %v1165 = vsub.f32 %v1119, %v1151
  %v1166 = vsub.f32 %v1124, %v1154
  %v1167 = vsub.f32 %v1129, %v1157
  %v1168 = vsub.f32 %v1134, %v1160
  %v1169 = vmul.f32 %v1161, 1.442695
  %v1170 = vpow.pop %v1169
  %v1171 = vmul.f32 %v1162, 1.442695
  %v1172 = vpow.pop %v1171
  %v1173 = vmul.f32 %v1163, 1.442695
  %v1174 = vpow.pop %v1173
  %v1175 = vmul.f32 %v1164, 1.442695
  %v1176 = vpow.pop %v1175
  %v1177 = vmul.f32 %v1165, 1.442695
  %v1178 = vpow.pop %v1177
  %v1179 = vmul.f32 %v1166, 1.442695
  %v1180 = vpow.pop %v1179
  %v1181 = vmul.f32 %v1167, 1.442695
  %v1182 = vpow.pop %v1181
  %v1183 = vmul.f32 %v1168, 1.442695
  %v1184 = vpow.pop %v1183
  %1185 = vrot.lane.b32.xlu0 %v445, 56
  %v1186 = vpop.permute.xlu0 %1185
  %1187 = vrot.lane.b32.xlu0 %v450, 56
  %v1188 = vpop.permute.xlu0 %1187
  %1189 = vrot.lane.b32.xlu0 %v455, 56
  %v1190 = vpop.permute.xlu0 %1189
  %1191 = vrot.lane.b32.xlu0 %v460, 56
  %v1192 = vpop.permute.xlu0 %1191
  %1193 = vrot.lane.b32.xlu0 %v465, 56
  %v1194 = vpop.permute.xlu0 %1193
  %1195 = vrot.lane.b32.xlu0 %v470, 56
  %v1196 = vpop.permute.xlu0 %1195
  %1197 = vrot.lane.b32.xlu0 %v475, 56
  %v1198 = vpop.permute.xlu0 %1197
  %1199 = vrot.lane.b32.xlu0 %v480, 56
  %v1200 = vpop.permute.xlu0 %1199
  %v1210 = vsel %vm709, %v1170, 0
  %v1213 = vsel %vm709, %v1172, 0
  %v1216 = vsel %vm709, %v1174, 0
  %v1219 = vsel %vm709, %v1176, 0
  %v1222 = vsel %vm709, %v1178, 0
  %v1225 = vsel %vm709, %v1180, 0
  %v1228 = vsel %vm709, %v1182, 0
  %v1231 = vsel %vm709, %v1184, 0
  %1233 = vmatprep.subr.mxu0 0.0
  %1234 = vmatpush1.msra.mxu0 %v1186
  %1235 = vmatprep.subr.mxu0 0.0
  %1236 = vmatpush1.msra.mxu0 %v1188
  %1237 = vmatprep.subr.mxu0 0.0
  %1238 = vmatpush1.msra.mxu0 %v1190
  %1239 = vmatprep.subr.mxu0 0.0
  %1240 = vmatpush1.msra.mxu0 %v1192
  %1241 = vmatprep.subr.mxu0 0.0
  %1242 = vmatpush1.msra.mxu0 %v1194
  %1243 = vmatprep.subr.mxu0 0.0
  %1244 = vmatpush1.msra.mxu0 %v1196
  %1245 = vmatprep.subr.mxu0 0.0
  %1246 = vmatpush1.msra.mxu0 %v1198
  %1247 = vmatprep.subr.mxu0 0.0
  %1248 = vmatpush1.msra.mxu0 %v1200
  %1249 = vmatprep.subr.mxu0 0.0
  %1250 = vmatpush1.msra.mxu0 0.0
  %1251 = vmatprep.subr.mxu0 0.0
  %1252 = vmatpush1.msra.mxu0 0.0
  %1253 = vmatprep.subr.mxu0 0.0
  %1254 = vmatpush1.msra.mxu0 0.0
  %1255 = vmatprep.subr.mxu0 0.0
  %1256 = vmatpush1.msra.mxu0 0.0
  %1257 = vmatprep.subr.mxu0 0.0
  %1258 = vmatpush1.msra.mxu0 0.0
  %1259 = vmatprep.subr.mxu0 0.0
  %1260 = vmatpush1.msra.mxu0 0.0
  %1261 = vmatprep.subr.mxu0 0.0
  %1262 = vmatpush1.msra.mxu0 0.0
  %1263 = vmatprep.subr.mxu0 0.0
  %1264 = vmatpush1.msra.mxu0 0.0
  %1265 = vmatprep.subr.mxu0 0.0
  %1266 = vmatpush1.msra.mxu0 0.0
  %1267 = vmatprep.subr.mxu0 0.0
  %1268 = vmatpush1.msra.mxu0 0.0
  %1269 = vmatprep.subr.mxu0 0.0
  %1270 = vmatpush1.msra.mxu0 0.0
  %1271 = vmatprep.subr.mxu0 0.0
  %1272 = vmatpush1.msra.mxu0 0.0
  %1273 = vmatprep.subr.mxu0 0.0
  %1274 = vmatpush1.msra.mxu0 0.0
  %1275 = vmatprep.subr.mxu0 0.0
  %1276 = vmatpush1.msra.mxu0 0.0
  %1277 = vmatprep.subr.mxu0 0.0
  %1278 = vmatpush1.msra.mxu0 0.0
  %1279 = vmatprep.subr.mxu0 0.0
  %1280 = vmatpush1.msra.mxu0 0.0
  %1281 = vmatprep.subr.mxu0 0.0
  %1282 = vmatpush1.msra.mxu0 0.0
  %1283 = vmatprep.subr.mxu0 0.0
  %1284 = vmatpush1.msra.mxu0 0.0
  %1285 = vmatprep.subr.mxu0 0.0
  %1286 = vmatpush1.msra.mxu0 0.0
  %1287 = vmatprep.subr.mxu0 0.0
  %1288 = vmatpush1.msra.mxu0 0.0
  %1289 = vmatprep.subr.mxu0 0.0
  %1290 = vmatpush1.msra.mxu0 0.0
  %1291 = vmatprep.subr.mxu0 0.0
  %1292 = vmatpush1.msra.mxu0 0.0
  %1293 = vmatprep.subr.mxu0 0.0
  %1294 = vmatpush1.msra.mxu0 0.0
  %1295 = vmatprep.subr.mxu0 0.0
  %1296 = vmatpush1.msra.mxu0 0.0
  %1297 = vmatprep.mubr.f32.mxu0 0.0
  %1298 = vmatmul.mubr.f32.gmra.mrb[0].mxu0 %v1210
  %v1299 = vpop.f32.mrb[0].mxu0
  %v1300 = vadd.f32 0.0, %v1299
  %v1301 = vpop.f32.mrb[0].mxu0
  %1302 = vmatprep.mubr.f32.mxu0 0.0
  %1303 = vmatmul.mubr.f32.gmra.mrb[0].mxu0 %v1213
  %v1304 = vpop.f32.mrb[0].mxu0
  %v1305 = vadd.f32 0.0, %v1304
  %v1306 = vpop.f32.mrb[0].mxu0
  %1307 = vmatprep.mubr.f32.mxu0 0.0
  %1308 = vmatmul.mubr.f32.gmra.mrb[0].mxu0 %v1216
  %v1309 = vpop.f32.mrb[0].mxu0
  %v1310 = vadd.f32 0.0, %v1309
  %v1311 = vpop.f32.mrb[0].mxu0
  %1312 = vmatprep.mubr.f32.mxu0 0.0
  %1313 = vmatmul.mubr.f32.gmra.mrb[0].mxu0 %v1219
  %v1314 = vpop.f32.mrb[0].mxu0
  %v1315 = vadd.f32 0.0, %v1314
  %v1316 = vpop.f32.mrb[0].mxu0
  %1317 = vmatprep.mubr.f32.mxu0 0.0
  %1318 = vmatmul.mubr.f32.gmra.mrb[0].mxu0 %v1222
  %v1319 = vpop.f32.mrb[0].mxu0
  %v1320 = vadd.f32 0.0, %v1319
  %v1321 = vpop.f32.mrb[0].mxu0
  %1322 = vmatprep.mubr.f32.mxu0 0.0
  %1323 = vmatmul.mubr.f32.gmra.mrb[0].mxu0 %v1225
  %v1324 = vpop.f32.mrb[0].mxu0
  %v1325 = vadd.f32 0.0, %v1324
  %v1326 = vpop.f32.mrb[0].mxu0
  %1327 = vmatprep.mubr.f32.mxu0 0.0
  %1328 = vmatmul.mubr.f32.gmra.mrb[0].mxu0 %v1228
  %v1329 = vpop.f32.mrb[0].mxu0
  %v1330 = vadd.f32 0.0, %v1329
  %v1331 = vpop.f32.mrb[0].mxu0
  %1332 = vmatprep.mubr.f32.mxu0 0.0
  %1333 = vmatmul.mubr.f32.gmra.mrb[0].mxu0 %v1231
  %v1334 = vpop.f32.mrb[0].mxu0
  %v1335 = vadd.f32 0.0, %v1334
  %v1336 = vpop.f32.mrb[0].mxu0
  %1337 = vdwg.mxu0
  %v1338 = vsel %vm709, %v1170, 0.0
  %1339 = vadd.xlane.f32.xlu0 %v1338
  %v1340 = vpop.xlane.xlu0 %1339
  %v1341 = vsel %vm709, %v1172, 0.0
  %1342 = vadd.xlane.f32.xlu0 %v1341
  %v1343 = vpop.xlane.xlu0 %1342
  %v1344 = vsel %vm709, %v1174, 0.0
  %1345 = vadd.xlane.f32.xlu0 %v1344
  %v1346 = vpop.xlane.xlu0 %1345
  %v1347 = vsel %vm709, %v1176, 0.0
  %1348 = vadd.xlane.f32.xlu0 %v1347
  %v1349 = vpop.xlane.xlu0 %1348
  %v1350 = vsel %vm709, %v1178, 0.0
  %1351 = vadd.xlane.f32.xlu0 %v1350
  %v1352 = vpop.xlane.xlu0 %1351
  %v1353 = vsel %vm709, %v1180, 0.0
  %1354 = vadd.xlane.f32.xlu0 %v1353
  %v1355 = vpop.xlane.xlu0 %1354
  %v1356 = vsel %vm709, %v1182, 0.0
  %1357 = vadd.xlane.f32.xlu0 %v1356
  %v1358 = vpop.xlane.xlu0 %1357
  %v1359 = vsel %vm709, %v1184, 0.0
  %1360 = vadd.xlane.f32.xlu0 %v1359
  %v1361 = vpop.xlane.xlu0 %1360
  %v1362 = vrcp.pop %v1340
  %v1363 = vrcp.pop %v1343
  %v1364 = vrcp.pop %v1346
  %v1365 = vrcp.pop %v1349
  %v1366 = vrcp.pop %v1352
  %v1367 = vrcp.pop %v1355
  %v1368 = vrcp.pop %v1358
  %v1369 = vrcp.pop %v1361
  %v1370 = vmul.f32 %v1300, %v1362
  %v1371 = vmul.f32 %v1305, %v1363
  %v1372 = vmul.f32 %v1310, %v1364
  %v1373 = vmul.f32 %v1315, %v1365
  %v1374 = vmul.f32 %v1320, %v1366
  %v1375 = vmul.f32 %v1325, %v1367
  %v1376 = vmul.f32 %v1330, %v1368
  %v1377 = vmul.f32 %v1335, %v1369
  %1386 = vrot.lane.b32.xlu0 %v1370, 8
  %v1387 = vpop.permute.xlu0 %1386
  %1388 = vrot.lane.b32.xlu0 %v1371, 8
  %v1389 = vpop.permute.xlu0 %1388
  %1390 = vrot.lane.b32.xlu0 %v1372, 8
  %v1391 = vpop.permute.xlu0 %1390
  %1392 = vrot.lane.b32.xlu0 %v1373, 8
  %v1393 = vpop.permute.xlu0 %1392
  %1394 = vrot.lane.b32.xlu0 %v1374, 8
  %v1395 = vpop.permute.xlu0 %1394
  %1396 = vrot.lane.b32.xlu0 %v1375, 8
  %v1397 = vpop.permute.xlu0 %1396
  %1398 = vrot.lane.b32.xlu0 %v1376, 8
  %v1399 = vpop.permute.xlu0 %1398
  %1400 = vrot.lane.b32.xlu0 %v1377, 8
  %v1401 = vpop.permute.xlu0 %1400
  %vm1410 = vcmask 130112
  %1411 = vst.msk [vmem:[#allocation2] sm:$0xff] %vm1410, %v1387
  %1412 = vst.msk [vmem:[#allocation2 + $0x8] sm:$0xff] %vm1410, %v1389
  %1413 = vst.msk [vmem:[#allocation2 + $0x10] sm:$0xff] %vm1410, %v1391
  %1414 = vst.msk [vmem:[#allocation2 + $0x18] sm:$0xff] %vm1410, %v1393
  %1415 = vst.msk [vmem:[#allocation2 + $0x20] sm:$0xff] %vm1410, %v1395
  %1416 = vst.msk [vmem:[#allocation2 + $0x28] sm:$0xff] %vm1410, %v1397
  %1417 = vst.msk [vmem:[#allocation2 + $0x30] sm:$0xff] %vm1410, %v1399
  %1418 = vst.msk [vmem:[#allocation2 + $0x38] sm:$0xff] %vm1410, %v1401
  %s1419 = scalar_lea.vmem %s7, 128
  %v1420 = vld [vmem:[%s1419] sm:$0xff]
  %v1421 = vld [vmem:[%s1419 + $0x8] sm:$0xff]
  %v1422 = vld [vmem:[%s1419 + $0x10] sm:$0xff]
  %v1423 = vld [vmem:[%s1419 + $0x18] sm:$0xff]
  %v1424 = vld [vmem:[%s1419 + $0x20] sm:$0xff]
  %v1425 = vld [vmem:[%s1419 + $0x28] sm:$0xff]
  %v1426 = vld [vmem:[%s1419 + $0x30] sm:$0xff]
  %v1427 = vld [vmem:[%s1419 + $0x38] sm:$0xff]
  %1428 = vrot.lane.b32.xlu0 %v523, 112
  %v1429 = vpop.permute.xlu0 %1428
  %1430 = vrot.lane.b32.xlu0 %v524, 112
  %v1431 = vpop.permute.xlu0 %1430
  %1432 = vrot.lane.b32.xlu0 %v525, 112
  %v1433 = vpop.permute.xlu0 %1432
  %1434 = vrot.lane.b32.xlu0 %v526, 112
  %v1435 = vpop.permute.xlu0 %1434
  %1436 = vrot.lane.b32.xlu0 %v527, 112
  %v1437 = vpop.permute.xlu0 %1436
  %1438 = vrot.lane.b32.xlu0 %v528, 112
  %v1439 = vpop.permute.xlu0 %1438
  %1440 = vrot.lane.b32.xlu0 %v529, 112
  %v1441 = vpop.permute.xlu0 %1440
  %1442 = vrot.lane.b32.xlu0 %v530, 112
  %v1443 = vpop.permute.xlu0 %1442
  %1444 = vrot.lane.b32.xlu0 %v445, 80
  %v1445 = vpop.permute.xlu0 %1444
  %1446 = vrot.lane.b32.xlu0 %v450, 80
  %v1447 = vpop.permute.xlu0 %1446
  %1448 = vrot.lane.b32.xlu0 %v455, 80
  %v1449 = vpop.permute.xlu0 %1448
  %1450 = vrot.lane.b32.xlu0 %v460, 80
  %v1451 = vpop.permute.xlu0 %1450
  %1452 = vrot.lane.b32.xlu0 %v465, 80
  %v1453 = vpop.permute.xlu0 %1452
  %1454 = vrot.lane.b32.xlu0 %v470, 80
  %v1455 = vpop.permute.xlu0 %1454
  %1456 = vrot.lane.b32.xlu0 %v475, 80
  %v1457 = vpop.permute.xlu0 %1456
  %1458 = vrot.lane.b32.xlu0 %v480, 80
  %v1459 = vpop.permute.xlu0 %1458
  %v1460 = vsel %vm563, %v1429, 0
  %v1462 = vsel %vm563, %v1431, 0
  %v1464 = vsel %vm563, %v1433, 0
  %v1466 = vsel %vm563, %v1435, 0
  %v1468 = vsel %vm563, %v1437, 0
  %v1470 = vsel %vm563, %v1439, 0
  %v1472 = vsel %vm563, %v1441, 0
  %v1474 = vsel %vm563, %v1443, 0
  %v1476 = vsel %vm563, %v1445, 0
  %v1478 = vsel %vm563, %v1447, 0
  %v1480 = vsel %vm563, %v1449, 0
  %v1482 = vsel %vm563, %v1451, 0
  %v1484 = vsel %vm563, %v1453, 0
  %v1486 = vsel %vm563, %v1455, 0
  %v1488 = vsel %vm563, %v1457, 0
  %v1490 = vsel %vm563, %v1459, 0
  %1492 = vmatprep.subr.mxu0 0.0
  %1493 = vmatpush1.xpose.msra.mxu0 %v1476
  %1494 = vmatprep.subr.mxu0 0.0
  %1495 = vmatpush1.xpose.msra.mxu0 %v1478
  %1496 = vmatprep.subr.mxu0 0.0
  %1497 = vmatpush1.xpose.msra.mxu0 %v1480
  %1498 = vmatprep.subr.mxu0 0.0
  %1499 = vmatpush1.xpose.msra.mxu0 %v1482
  %1500 = vmatprep.subr.mxu0 0.0
  %1501 = vmatpush1.xpose.msra.mxu0 %v1484
  %1502 = vmatprep.subr.mxu0 0.0
  %1503 = vmatpush1.xpose.msra.mxu0 %v1486
  %1504 = vmatprep.subr.mxu0 0.0
  %1505 = vmatpush1.xpose.msra.mxu0 %v1488
  %1506 = vmatprep.subr.mxu0 0.0
  %1507 = vmatpush1.xpose.msra.mxu0 %v1490
  %1508 = vmatprep.subr.mxu0 0.0
  %1509 = vmatpush1.xpose.msra.mxu0 0.0
  %1510 = vmatprep.subr.mxu0 0.0
  %1511 = vmatpush1.xpose.msra.mxu0 0.0
  %1512 = vmatprep.subr.mxu0 0.0
  %1513 = vmatpush1.xpose.msra.mxu0 0.0
  %1514 = vmatprep.subr.mxu0 0.0
  %1515 = vmatpush1.xpose.msra.mxu0 0.0
  %1516 = vmatprep.subr.mxu0 0.0
  %1517 = vmatpush1.xpose.msra.mxu0 0.0
  %1518 = vmatprep.subr.mxu0 0.0
  %1519 = vmatpush1.xpose.msra.mxu0 0.0
  %1520 = vmatprep.subr.mxu0 0.0
  %1521 = vmatpush1.xpose.msra.mxu0 0.0
  %1522 = vmatprep.subr.mxu0 0.0
  %1523 = vmatpush1.xpose.msra.mxu0 0.0
  %1524 = vmatprep.subr.mxu0 0.0
  %1525 = vmatpush1.xpose.msra.mxu0 0.0
  %1526 = vmatprep.subr.mxu0 0.0
  %1527 = vmatpush1.xpose.msra.mxu0 0.0
  %1528 = vmatprep.subr.mxu0 0.0
  %1529 = vmatpush1.xpose.msra.mxu0 0.0
  %1530 = vmatprep.subr.mxu0 0.0
  %1531 = vmatpush1.xpose.msra.mxu0 0.0
  %1532 = vmatprep.subr.mxu0 0.0
  %1533 = vmatpush1.xpose.msra.mxu0 0.0
  %1534 = vmatprep.subr.mxu0 0.0
  %1535 = vmatpush1.xpose.msra.mxu0 0.0
  %1536 = vmatprep.subr.mxu0 0.0
  %1537 = vmatpush1.xpose.msra.mxu0 0.0
  %1538 = vmatprep.subr.mxu0 0.0
  %1539 = vmatpush1.xpose.msra.mxu0 0.0
  %1540 = vmatprep.subr.mxu0 0.0
  %1541 = vmatpush1.xpose.msra.mxu0 0.0
  %1542 = vmatprep.subr.mxu0 0.0
  %1543 = vmatpush1.xpose.msra.mxu0 0.0
  %1544 = vmatprep.subr.mxu0 0.0
  %1545 = vmatpush1.xpose.msra.mxu0 0.0
  %1546 = vmatprep.subr.mxu0 0.0
  %1547 = vmatpush1.xpose.msra.mxu0 0.0
  %1548 = vmatprep.subr.mxu0 0.0
  %1549 = vmatpush1.xpose.msra.mxu0 0.0
  %1550 = vmatprep.subr.mxu0 0.0
  %1551 = vmatpush1.xpose.msra.mxu0 0.0
  %1552 = vmatprep.subr.mxu0 0.0
  %1553 = vmatpush1.xpose.msra.mxu0 0.0
  %1554 = vmatprep.subr.mxu0 0.0
  %1555 = vmatpush1.xpose.msra.mxu0 0.0
  %1556 = vmatprep.mubr.f32.mxu0 0.0
  %1557 = vmatmul.mubr.f32.gmra.mrb[0].mxu0 %v1460
  %v1558 = vpop.f32.mrb[0].mxu0
  %v1559 = vadd.f32 %v1420, %v1558
  %v1560 = vpop.f32.mrb[0].mxu0
  %1561 = vmatprep.mubr.f32.mxu0 0.0
  %1562 = vmatmul.mubr.f32.gmra.mrb[0].mxu0 %v1462
  %v1563 = vpop.f32.mrb[0].mxu0
  %v1564 = vadd.f32 %v1421, %v1563
  %v1565 = vpop.f32.mrb[0].mxu0
  %1566 = vmatprep.mubr.f32.mxu0 0.0
  %1567 = vmatmul.mubr.f32.gmra.mrb[0].mxu0 %v1464
  %v1568 = vpop.f32.mrb[0].mxu0
  %v1569 = vadd.f32 %v1422, %v1568
  %v1570 = vpop.f32.mrb[0].mxu0
  %1571 = vmatprep.mubr.f32.mxu0 0.0
  %1572 = vmatmul.mubr.f32.gmra.mrb[0].mxu0 %v1466
  %v1573 = vpop.f32.mrb[0].mxu0
  %v1574 = vadd.f32 %v1423, %v1573
  %v1575 = vpop.f32.mrb[0].mxu0
  %1576 = vmatprep.mubr.f32.mxu0 0.0
  %1577 = vmatmul.mubr.f32.gmra.mrb[0].mxu0 %v1468
  %v1578 = vpop.f32.mrb[0].mxu0
  %v1579 = vadd.f32 %v1424, %v1578
  %v1580 = vpop.f32.mrb[0].mxu0
  %1581 = vmatprep.mubr.f32.mxu0 0.0
  %1582 = vmatmul.mubr.f32.gmra.mrb[0].mxu0 %v1470
  %v1583 = vpop.f32.mrb[0].mxu0
  %v1584 = vadd.f32 %v1425, %v1583
  %v1585 = vpop.f32.mrb[0].mxu0
  %1586 = vmatprep.mubr.f32.mxu0 0.0
  %1587 = vmatmul.mubr.f32.gmra.mrb[0].mxu0 %v1472
  %v1588 = vpop.f32.mrb[0].mxu0
  %v1589 = vadd.f32 %v1426, %v1588
  %v1590 = vpop.f32.mrb[0].mxu0
  %1591 = vmatprep.mubr.f32.mxu0 0.0
  %1592 = vmatmul.mubr.f32.gmra.mrb[0].mxu0 %v1474
  %v1593 = vpop.f32.mrb[0].mxu0
  %v1594 = vadd.f32 %v1427, %v1593
  %v1595 = vpop.f32.mrb[0].mxu0
  %1596 = vdwg.mxu0
  %v1597 = vsel %vm709, %v1559, -inf
  %1598 = vmax.xlane.f32.xlu0 %v1597
  %v1599 = vpop.xlane.xlu0 %1598
  %v1600 = vsel %vm709, %v1564, -inf
  %1601 = vmax.xlane.f32.xlu0 %v1600
  %v1602 = vpop.xlane.xlu0 %1601
  %v1603 = vsel %vm709, %v1569, -inf
  %1604 = vmax.xlane.f32.xlu0 %v1603
  %v1605 = vpop.xlane.xlu0 %1604
  %v1606 = vsel %vm709, %v1574, -inf
  %1607 = vmax.xlane.f32.xlu0 %v1606
  %v1608 = vpop.xlane.xlu0 %1607
  %v1609 = vsel %vm709, %v1579, -inf
  %1610 = vmax.xlane.f32.xlu0 %v1609
  %v1611 = vpop.xlane.xlu0 %1610
  %v1612 = vsel %vm709, %v1584, -inf
  %1613 = vmax.xlane.f32.xlu0 %v1612
  %v1614 = vpop.xlane.xlu0 %1613
  %v1615 = vsel %vm709, %v1589, -inf
  %1616 = vmax.xlane.f32.xlu0 %v1615
  %v1617 = vpop.xlane.xlu0 %1616
  %v1618 = vsel %vm709, %v1594, -inf
  %1619 = vmax.xlane.f32.xlu0 %v1618
  %v1620 = vpop.xlane.xlu0 %1619
  %v1621 = vsub.f32 %v1559, %v1599
  %v1622 = vsub.f32 %v1564, %v1602
  %v1623 = vsub.f32 %v1569, %v1605
  %v1624 = vsub.f32 %v1574, %v1608
  %v1625 = vsub.f32 %v1579, %v1611
  %v1626 = vsub.f32 %v1584, %v1614
  %v1627 = vsub.f32 %v1589, %v1617
  %v1628 = vsub.f32 %v1594, %v1620
  %v1629 = vmul.f32 %v1621, 1.442695
  %v1630 = vpow.pop %v1629
  %v1631 = vmul.f32 %v1622, 1.442695
  %v1632 = vpow.pop %v1631
  %v1633 = vmul.f32 %v1623, 1.442695
  %v1634 = vpow.pop %v1633
  %v1635 = vmul.f32 %v1624, 1.442695
  %v1636 = vpow.pop %v1635
  %v1637 = vmul.f32 %v1625, 1.442695
  %v1638 = vpow.pop %v1637
  %v1639 = vmul.f32 %v1626, 1.442695
  %v1640 = vpow.pop %v1639
  %v1641 = vmul.f32 %v1627, 1.442695
  %v1642 = vpow.pop %v1641
  %v1643 = vmul.f32 %v1628, 1.442695
  %v1644 = vpow.pop %v1643
  %1645 = vrot.lane.b32.xlu0 %v445, 48
  %v1646 = vpop.permute.xlu0 %1645
  %1647 = vrot.lane.b32.xlu0 %v450, 48
  %v1648 = vpop.permute.xlu0 %1647
  %1649 = vrot.lane.b32.xlu0 %v455, 48
  %v1650 = vpop.permute.xlu0 %1649
  %1651 = vrot.lane.b32.xlu0 %v460, 48
  %v1652 = vpop.permute.xlu0 %1651
  %1653 = vrot.lane.b32.xlu0 %v465, 48
  %v1654 = vpop.permute.xlu0 %1653
  %1655 = vrot.lane.b32.xlu0 %v470, 48
  %v1656 = vpop.permute.xlu0 %1655
  %1657 = vrot.lane.b32.xlu0 %v475, 48
  %v1658 = vpop.permute.xlu0 %1657
  %1659 = vrot.lane.b32.xlu0 %v480, 48
  %v1660 = vpop.permute.xlu0 %1659
  %v1670 = vsel %vm709, %v1630, 0
  %v1673 = vsel %vm709, %v1632, 0
  %v1676 = vsel %vm709, %v1634, 0
  %v1679 = vsel %vm709, %v1636, 0
  %v1682 = vsel %vm709, %v1638, 0
  %v1685 = vsel %vm709, %v1640, 0
  %v1688 = vsel %vm709, %v1642, 0
  %v1691 = vsel %vm709, %v1644, 0
  %1693 = vmatprep.subr.mxu0 0.0
  %1694 = vmatpush1.msra.mxu0 %v1646
  %1695 = vmatprep.subr.mxu0 0.0
  %1696 = vmatpush1.msra.mxu0 %v1648
  %1697 = vmatprep.subr.mxu0 0.0
  %1698 = vmatpush1.msra.mxu0 %v1650
  %1699 = vmatprep.subr.mxu0 0.0
  %1700 = vmatpush1.msra.mxu0 %v1652
  %1701 = vmatprep.subr.mxu0 0.0
  %1702 = vmatpush1.msra.mxu0 %v1654
  %1703 = vmatprep.subr.mxu0 0.0
  %1704 = vmatpush1.msra.mxu0 %v1656
  %1705 = vmatprep.subr.mxu0 0.0
  %1706 = vmatpush1.msra.mxu0 %v1658
  %1707 = vmatprep.subr.mxu0 0.0
  %1708 = vmatpush1.msra.mxu0 %v1660
  %1709 = vmatprep.subr.mxu0 0.0
  %1710 = vmatpush1.msra.mxu0 0.0
  %1711 = vmatprep.subr.mxu0 0.0
  %1712 = vmatpush1.msra.mxu0 0.0
  %1713 = vmatprep.subr.mxu0 0.0
  %1714 = vmatpush1.msra.mxu0 0.0
  %1715 = vmatprep.subr.mxu0 0.0
  %1716 = vmatpush1.msra.mxu0 0.0
  %1717 = vmatprep.subr.mxu0 0.0
  %1718 = vmatpush1.msra.mxu0 0.0
  %1719 = vmatprep.subr.mxu0 0.0
  %1720 = vmatpush1.msra.mxu0 0.0
  %1721 = vmatprep.subr.mxu0 0.0
  %1722 = vmatpush1.msra.mxu0 0.0
  %1723 = vmatprep.subr.mxu0 0.0
  %1724 = vmatpush1.msra.mxu0 0.0
  %1725 = vmatprep.subr.mxu0 0.0
  %1726 = vmatpush1.msra.mxu0 0.0
  %1727 = vmatprep.subr.mxu0 0.0
  %1728 = vmatpush1.msra.mxu0 0.0
  %1729 = vmatprep.subr.mxu0 0.0
  %1730 = vmatpush1.msra.mxu0 0.0
  %1731 = vmatprep.subr.mxu0 0.0
  %1732 = vmatpush1.msra.mxu0 0.0
  %1733 = vmatprep.subr.mxu0 0.0
  %1734 = vmatpush1.msra.mxu0 0.0
  %1735 = vmatprep.subr.mxu0 0.0
  %1736 = vmatpush1.msra.mxu0 0.0
  %1737 = vmatprep.subr.mxu0 0.0
  %1738 = vmatpush1.msra.mxu0 0.0
  %1739 = vmatprep.subr.mxu0 0.0
  %1740 = vmatpush1.msra.mxu0 0.0
  %1741 = vmatprep.subr.mxu0 0.0
  %1742 = vmatpush1.msra.mxu0 0.0
  %1743 = vmatprep.subr.mxu0 0.0
  %1744 = vmatpush1.msra.mxu0 0.0
  %1745 = vmatprep.subr.mxu0 0.0
  %1746 = vmatpush1.msra.mxu0 0.0
  %1747 = vmatprep.subr.mxu0 0.0
  %1748 = vmatpush1.msra.mxu0 0.0
  %1749 = vmatprep.subr.mxu0 0.0
  %1750 = vmatpush1.msra.mxu0 0.0
  %1751 = vmatprep.subr.mxu0 0.0
  %1752 = vmatpush1.msra.mxu0 0.0
  %1753 = vmatprep.subr.mxu0 0.0
  %1754 = vmatpush1.msra.mxu0 0.0
  %1755 = vmatprep.subr.mxu0 0.0
  %1756 = vmatpush1.msra.mxu0 0.0
  %1757 = vmatprep.mubr.f32.mxu0 0.0
  %1758 = vmatmul.mubr.f32.gmra.mrb[0].mxu0 %v1670
  %v1759 = vpop.f32.mrb[0].mxu0
  %v1760 = vadd.f32 0.0, %v1759
  %v1761 = vpop.f32.mrb[0].mxu0
  %1762 = vmatprep.mubr.f32.mxu0 0.0
  %1763 = vmatmul.mubr.f32.gmra.mrb[0].mxu0 %v1673
  %v1764 = vpop.f32.mrb[0].mxu0
  %v1765 = vadd.f32 0.0, %v1764
  %v1766 = vpop.f32.mrb[0].mxu0
  %1767 = vmatprep.mubr.f32.mxu0 0.0
  %1768 = vmatmul.mubr.f32.gmra.mrb[0].mxu0 %v1676
  %v1769 = vpop.f32.mrb[0].mxu0
  %v1770 = vadd.f32 0.0, %v1769
  %v1771 = vpop.f32.mrb[0].mxu0
  %1772 = vmatprep.mubr.f32.mxu0 0.0
  %1773 = vmatmul.mubr.f32.gmra.mrb[0].mxu0 %v1679
  %v1774 = vpop.f32.mrb[0].mxu0
  %v1775 = vadd.f32 0.0, %v1774
  %v1776 = vpop.f32.mrb[0].mxu0
  %1777 = vmatprep.mubr.f32.mxu0 0.0
  %1778 = vmatmul.mubr.f32.gmra.mrb[0].mxu0 %v1682
  %v1779 = vpop.f32.mrb[0].mxu0
  %v1780 = vadd.f32 0.0, %v1779
  %v1781 = vpop.f32.mrb[0].mxu0
  %1782 = vmatprep.mubr.f32.mxu0 0.0
  %1783 = vmatmul.mubr.f32.gmra.mrb[0].mxu0 %v1685
  %v1784 = vpop.f32.mrb[0].mxu0
  %v1785 = vadd.f32 0.0, %v1784
  %v1786 = vpop.f32.mrb[0].mxu0
  %1787 = vmatprep.mubr.f32.mxu0 0.0
  %1788 = vmatmul.mubr.f32.gmra.mrb[0].mxu0 %v1688
  %v1789 = vpop.f32.mrb[0].mxu0
  %v1790 = vadd.f32 0.0, %v1789
  %v1791 = vpop.f32.mrb[0].mxu0
  %1792 = vmatprep.mubr.f32.mxu0 0.0
  %1793 = vmatmul.mubr.f32.gmra.mrb[0].mxu0 %v1691
  %v1794 = vpop.f32.mrb[0].mxu0
  %v1795 = vadd.f32 0.0, %v1794
  %v1796 = vpop.f32.mrb[0].mxu0
  %1797 = vdwg.mxu0
  %v1798 = vsel %vm709, %v1630, 0.0
  %1799 = vadd.xlane.f32.xlu0 %v1798
  %v1800 = vpop.xlane.xlu0 %1799
  %v1801 = vsel %vm709, %v1632, 0.0
  %1802 = vadd.xlane.f32.xlu0 %v1801
  %v1803 = vpop.xlane.xlu0 %1802
  %v1804 = vsel %vm709, %v1634, 0.0
  %1805 = vadd.xlane.f32.xlu0 %v1804
  %v1806 = vpop.xlane.xlu0 %1805
  %v1807 = vsel %vm709, %v1636, 0.0
  %1808 = vadd.xlane.f32.xlu0 %v1807
  %v1809 = vpop.xlane.xlu0 %1808
  %v1810 = vsel %vm709, %v1638, 0.0
  %1811 = vadd.xlane.f32.xlu0 %v1810
  %v1812 = vpop.xlane.xlu0 %1811
  %v1813 = vsel %vm709, %v1640, 0.0
  %1814 = vadd.xlane.f32.xlu0 %v1813
  %v1815 = vpop.xlane.xlu0 %1814
  %v1816 = vsel %vm709, %v1642, 0.0
  %1817 = vadd.xlane.f32.xlu0 %v1816
  %v1818 = vpop.xlane.xlu0 %1817
  %v1819 = vsel %vm709, %v1644, 0.0
  %1820 = vadd.xlane.f32.xlu0 %v1819
  %v1821 = vpop.xlane.xlu0 %1820
  %v1822 = vrcp.pop %v1800
  %v1823 = vrcp.pop %v1803
  %v1824 = vrcp.pop %v1806
  %v1825 = vrcp.pop %v1809
  %v1826 = vrcp.pop %v1812
  %v1827 = vrcp.pop %v1815
  %v1828 = vrcp.pop %v1818
  %v1829 = vrcp.pop %v1821
  %v1830 = vmul.f32 %v1760, %v1822
  %v1831 = vmul.f32 %v1765, %v1823
  %v1832 = vmul.f32 %v1770, %v1824
  %v1833 = vmul.f32 %v1775, %v1825
  %v1834 = vmul.f32 %v1780, %v1826
  %v1835 = vmul.f32 %v1785, %v1827
  %v1836 = vmul.f32 %v1790, %v1828
  %v1837 = vmul.f32 %v1795, %v1829
  %1846 = vrot.lane.b32.xlu0 %v1830, 16
  %v1847 = vpop.permute.xlu0 %1846
  %1848 = vrot.lane.b32.xlu0 %v1831, 16
  %v1849 = vpop.permute.xlu0 %1848
  %1850 = vrot.lane.b32.xlu0 %v1832, 16
  %v1851 = vpop.permute.xlu0 %1850
  %1852 = vrot.lane.b32.xlu0 %v1833, 16
  %v1853 = vpop.permute.xlu0 %1852
  %1854 = vrot.lane.b32.xlu0 %v1834, 16
  %v1855 = vpop.permute.xlu0 %1854
  %1856 = vrot.lane.b32.xlu0 %v1835, 16
  %v1857 = vpop.permute.xlu0 %1856
  %1858 = vrot.lane.b32.xlu0 %v1836, 16
  %v1859 = vpop.permute.xlu0 %1858
  %1860 = vrot.lane.b32.xlu0 %v1837, 16
  %v1861 = vpop.permute.xlu0 %1860
  %vm1870 = vcmask 195712
  %1871 = vst.msk [vmem:[#allocation2] sm:$0xff] %vm1870, %v1847
  %1872 = vst.msk [vmem:[#allocation2 + $0x8] sm:$0xff] %vm1870, %v1849
  %1873 = vst.msk [vmem:[#allocation2 + $0x10] sm:$0xff] %vm1870, %v1851
  %1874 = vst.msk [vmem:[#allocation2 + $0x18] sm:$0xff] %vm1870, %v1853
  %1875 = vst.msk [vmem:[#allocation2 + $0x20] sm:$0xff] %vm1870, %v1855
  %1876 = vst.msk [vmem:[#allocation2 + $0x28] sm:$0xff] %vm1870, %v1857
  %1877 = vst.msk [vmem:[#allocation2 + $0x30] sm:$0xff] %vm1870, %v1859
  %1878 = vst.msk [vmem:[#allocation2 + $0x38] sm:$0xff] %vm1870, %v1861
  %s1879 = scalar_lea.vmem %s7, 192
  %v1880 = vld [vmem:[%s1879] sm:$0xff]
  %v1881 = vld [vmem:[%s1879 + $0x8] sm:$0xff]
  %v1882 = vld [vmem:[%s1879 + $0x10] sm:$0xff]
  %v1883 = vld [vmem:[%s1879 + $0x18] sm:$0xff]
  %v1884 = vld [vmem:[%s1879 + $0x20] sm:$0xff]
  %v1885 = vld [vmem:[%s1879 + $0x28] sm:$0xff]
  %v1886 = vld [vmem:[%s1879 + $0x30] sm:$0xff]
  %v1887 = vld [vmem:[%s1879 + $0x38] sm:$0xff]
  %1888 = vrot.lane.b32.xlu0 %v523, 104
  %v1889 = vpop.permute.xlu0 %1888
  %1890 = vrot.lane.b32.xlu0 %v524, 104
  %v1891 = vpop.permute.xlu0 %1890
  %1892 = vrot.lane.b32.xlu0 %v525, 104
  %v1893 = vpop.permute.xlu0 %1892
  %1894 = vrot.lane.b32.xlu0 %v526, 104
  %v1895 = vpop.permute.xlu0 %1894
  %1896 = vrot.lane.b32.xlu0 %v527, 104
  %v1897 = vpop.permute.xlu0 %1896
  %1898 = vrot.lane.b32.xlu0 %v528, 104
  %v1899 = vpop.permute.xlu0 %1898
  %1900 = vrot.lane.b32.xlu0 %v529, 104
  %v1901 = vpop.permute.xlu0 %1900
  %1902 = vrot.lane.b32.xlu0 %v530, 104
  %v1903 = vpop.permute.xlu0 %1902
  %1904 = vrot.lane.b32.xlu0 %v445, 72
  %v1905 = vpop.permute.xlu0 %1904
  %1906 = vrot.lane.b32.xlu0 %v450, 72
  %v1907 = vpop.permute.xlu0 %1906
  %1908 = vrot.lane.b32.xlu0 %v455, 72
  %v1909 = vpop.permute.xlu0 %1908
  %1910 = vrot.lane.b32.xlu0 %v460, 72
  %v1911 = vpop.permute.xlu0 %1910
  %1912 = vrot.lane.b32.xlu0 %v465, 72
  %v1913 = vpop.permute.xlu0 %1912
  %1914 = vrot.lane.b32.xlu0 %v470, 72
  %v1915 = vpop.permute.xlu0 %1914
  %1916 = vrot.lane.b32.xlu0 %v475, 72
  %v1917 = vpop.permute.xlu0 %1916
  %1918 = vrot.lane.b32.xlu0 %v480, 72
  %v1919 = vpop.permute.xlu0 %1918
  %v1920 = vsel %vm563, %v1889, 0
  %v1922 = vsel %vm563, %v1891, 0
  %v1924 = vsel %vm563, %v1893, 0
  %v1926 = vsel %vm563, %v1895, 0
  %v1928 = vsel %vm563, %v1897, 0
  %v1930 = vsel %vm563, %v1899, 0
  %v1932 = vsel %vm563, %v1901, 0
  %v1934 = vsel %vm563, %v1903, 0
  %v1936 = vsel %vm563, %v1905, 0
  %v1938 = vsel %vm563, %v1907, 0
  %v1940 = vsel %vm563, %v1909, 0
  %v1942 = vsel %vm563, %v1911, 0
  %v1944 = vsel %vm563, %v1913, 0
  %v1946 = vsel %vm563, %v1915, 0
  %v1948 = vsel %vm563, %v1917, 0
  %v1950 = vsel %vm563, %v1919, 0
  %1952 = vmatprep.subr.mxu0 0.0
  %1953 = vmatpush1.xpose.msra.mxu0 %v1936
  %1954 = vmatprep.subr.mxu0 0.0
  %1955 = vmatpush1.xpose.msra.mxu0 %v1938
  %1956 = vmatprep.subr.mxu0 0.0
  %1957 = vmatpush1.xpose.msra.mxu0 %v1940
  %1958 = vmatprep.subr.mxu0 0.0
  %1959 = vmatpush1.xpose.msra.mxu0 %v1942
  %1960 = vmatprep.subr.mxu0 0.0
  %1961 = vmatpush1.xpose.msra.mxu0 %v1944
  %1962 = vmatprep.subr.mxu0 0.0
  %1963 = vmatpush1.xpose.msra.mxu0 %v1946
  %1964 = vmatprep.subr.mxu0 0.0
  %1965 = vmatpush1.xpose.msra.mxu0 %v1948
  %1966 = vmatprep.subr.mxu0 0.0
  %1967 = vmatpush1.xpose.msra.mxu0 %v1950
  %1968 = vmatprep.subr.mxu0 0.0
  %1969 = vmatpush1.xpose.msra.mxu0 0.0
  %1970 = vmatprep.subr.mxu0 0.0
  %1971 = vmatpush1.xpose.msra.mxu0 0.0
  %1972 = vmatprep.subr.mxu0 0.0
  %1973 = vmatpush1.xpose.msra.mxu0 0.0
  %1974 = vmatprep.subr.mxu0 0.0
  %1975 = vmatpush1.xpose.msra.mxu0 0.0
  %1976 = vmatprep.subr.mxu0 0.0
  %1977 = vmatpush1.xpose.msra.mxu0 0.0
  %1978 = vmatprep.subr.mxu0 0.0
  %1979 = vmatpush1.xpose.msra.mxu0 0.0
  %1980 = vmatprep.subr.mxu0 0.0
  %1981 = vmatpush1.xpose.msra.mxu0 0.0
  %1982 = vmatprep.subr.mxu0 0.0
  %1983 = vmatpush1.xpose.msra.mxu0 0.0
  %1984 = vmatprep.subr.mxu0 0.0
  %1985 = vmatpush1.xpose.msra.mxu0 0.0
  %1986 = vmatprep.subr.mxu0 0.0
  %1987 = vmatpush1.xpose.msra.mxu0 0.0
  %1988 = vmatprep.subr.mxu0 0.0
  %1989 = vmatpush1.xpose.msra.mxu0 0.0
  %1990 = vmatprep.subr.mxu0 0.0
  %1991 = vmatpush1.xpose.msra.mxu0 0.0
  %1992 = vmatprep.subr.mxu0 0.0
  %1993 = vmatpush1.xpose.msra.mxu0 0.0
  %1994 = vmatprep.subr.mxu0 0.0
  %1995 = vmatpush1.xpose.msra.mxu0 0.0
  %1996 = vmatprep.subr.mxu0 0.0
  %1997 = vmatpush1.xpose.msra.mxu0 0.0
  %1998 = vmatprep.subr.mxu0 0.0
  %1999 = vmatpush1.xpose.msra.mxu0 0.0
  %2000 = vmatprep.subr.mxu0 0.0
  %2001 = vmatpush1.xpose.msra.mxu0 0.0
  %2002 = vmatprep.subr.mxu0 0.0
  %2003 = vmatpush1.xpose.msra.mxu0 0.0
  %2004 = vmatprep.subr.mxu0 0.0
  %2005 = vmatpush1.xpose.msra.mxu0 0.0
  %2006 = vmatprep.subr.mxu0 0.0
  %2007 = vmatpush1.xpose.msra.mxu0 0.0
  %2008 = vmatprep.subr.mxu0 0.0
  %2009 = vmatpush1.xpose.msra.mxu0 0.0
  %2010 = vmatprep.subr.mxu0 0.0
  %2011 = vmatpush1.xpose.msra.mxu0 0.0
  %2012 = vmatprep.subr.mxu0 0.0
  %2013 = vmatpush1.xpose.msra.mxu0 0.0
  %2014 = vmatprep.subr.mxu0 0.0
  %2015 = vmatpush1.xpose.msra.mxu0 0.0
  %2016 = vmatprep.mubr.f32.mxu0 0.0
  %2017 = vmatmul.mubr.f32.gmra.mrb[0].mxu0 %v1920
  %v2018 = vpop.f32.mrb[0].mxu0
  %v2019 = vadd.f32 %v1880, %v2018
  %v2020 = vpop.f32.mrb[0].mxu0
  %2021 = vmatprep.mubr.f32.mxu0 0.0
  %2022 = vmatmul.mubr.f32.gmra.mrb[0].mxu0 %v1922
  %v2023 = vpop.f32.mrb[0].mxu0
  %v2024 = vadd.f32 %v1881, %v2023
  %v2025 = vpop.f32.mrb[0].mxu0
  %2026 = vmatprep.mubr.f32.mxu0 0.0
  %2027 = vmatmul.mubr.f32.gmra.mrb[0].mxu0 %v1924
  %v2028 = vpop.f32.mrb[0].mxu0
  %v2029 = vadd.f32 %v1882, %v2028
  %v2030 = vpop.f32.mrb[0].mxu0
  %2031 = vmatprep.mubr.f32.mxu0 0.0
  %2032 = vmatmul.mubr.f32.gmra.mrb[0].mxu0 %v1926
  %v2033 = vpop.f32.mrb[0].mxu0
  %v2034 = vadd.f32 %v1883, %v2033
  %v2035 = vpop.f32.mrb[0].mxu0
  %2036 = vmatprep.mubr.f32.mxu0 0.0
  %2037 = vmatmul.mubr.f32.gmra.mrb[0].mxu0 %v1928
  %v2038 = vpop.f32.mrb[0].mxu0
  %v2039 = vadd.f32 %v1884, %v2038
  %v2040 = vpop.f32.mrb[0].mxu0
  %2041 = vmatprep.mubr.f32.mxu0 0.0
  %2042 = vmatmul.mubr.f32.gmra.mrb[0].mxu0 %v1930
  %v2043 = vpop.f32.mrb[0].mxu0
  %v2044 = vadd.f32 %v1885, %v2043
  %v2045 = vpop.f32.mrb[0].mxu0
  %2046 = vmatprep.mubr.f32.mxu0 0.0
  %2047 = vmatmul.mubr.f32.gmra.mrb[0].mxu0 %v1932
  %v2048 = vpop.f32.mrb[0].mxu0
  %v2049 = vadd.f32 %v1886, %v2048
  %v2050 = vpop.f32.mrb[0].mxu0
  %2051 = vmatprep.mubr.f32.mxu0 0.0
  %2052 = vmatmul.mubr.f32.gmra.mrb[0].mxu0 %v1934
  %v2053 = vpop.f32.mrb[0].mxu0
  %v2054 = vadd.f32 %v1887, %v2053
  %v2055 = vpop.f32.mrb[0].mxu0
  %2056 = vdwg.mxu0
  %v2057 = vsel %vm709, %v2019, -inf
  %2058 = vmax.xlane.f32.xlu0 %v2057
  %v2059 = vpop.xlane.xlu0 %2058
  %v2060 = vsel %vm709, %v2024, -inf
  %2061 = vmax.xlane.f32.xlu0 %v2060
  %v2062 = vpop.xlane.xlu0 %2061
  %v2063 = vsel %vm709, %v2029, -inf
  %2064 = vmax.xlane.f32.xlu0 %v2063
  %v2065 = vpop.xlane.xlu0 %2064
  %v2066 = vsel %vm709, %v2034, -inf
  %2067 = vmax.xlane.f32.xlu0 %v2066
  %v2068 = vpop.xlane.xlu0 %2067
  %v2069 = vsel %vm709, %v2039, -inf
  %2070 = vmax.xlane.f32.xlu0 %v2069
  %v2071 = vpop.xlane.xlu0 %2070
  %v2072 = vsel %vm709, %v2044, -inf
  %2073 = vmax.xlane.f32.xlu0 %v2072
  %v2074 = vpop.xlane.xlu0 %2073
  %v2075 = vsel %vm709, %v2049, -inf
  %2076 = vmax.xlane.f32.xlu0 %v2075
  %v2077 = vpop.xlane.xlu0 %2076
  %v2078 = vsel %vm709, %v2054, -inf
  %2079 = vmax.xlane.f32.xlu0 %v2078
  %v2080 = vpop.xlane.xlu0 %2079
  %v2081 = vsub.f32 %v2019, %v2059
  %v2082 = vsub.f32 %v2024, %v2062
  %v2083 = vsub.f32 %v2029, %v2065
  %v2084 = vsub.f32 %v2034, %v2068
  %v2085 = vsub.f32 %v2039, %v2071
  %v2086 = vsub.f32 %v2044, %v2074
  %v2087 = vsub.f32 %v2049, %v2077
  %v2088 = vsub.f32 %v2054, %v2080
  %v2089 = vmul.f32 %v2081, 1.442695
  %v2090 = vpow.pop %v2089
  %v2091 = vmul.f32 %v2082, 1.442695
  %v2092 = vpow.pop %v2091
  %v2093 = vmul.f32 %v2083, 1.442695
  %v2094 = vpow.pop %v2093
  %v2095 = vmul.f32 %v2084, 1.442695
  %v2096 = vpow.pop %v2095
  %v2097 = vmul.f32 %v2085, 1.442695
  %v2098 = vpow.pop %v2097
  %v2099 = vmul.f32 %v2086, 1.442695
  %v2100 = vpow.pop %v2099
  %v2101 = vmul.f32 %v2087, 1.442695
  %v2102 = vpow.pop %v2101
  %v2103 = vmul.f32 %v2088, 1.442695
  %v2104 = vpow.pop %v2103
  %2105 = vrot.lane.b32.xlu0 %v445, 40
  %v2106 = vpop.permute.xlu0 %2105
  %2107 = vrot.lane.b32.xlu0 %v450, 40
  %v2108 = vpop.permute.xlu0 %2107
  %2109 = vrot.lane.b32.xlu0 %v455, 40
  %v2110 = vpop.permute.xlu0 %2109
  %2111 = vrot.lane.b32.xlu0 %v460, 40
  %v2112 = vpop.permute.xlu0 %2111
  %2113 = vrot.lane.b32.xlu0 %v465, 40
  %v2114 = vpop.permute.xlu0 %2113
  %2115 = vrot.lane.b32.xlu0 %v470, 40
  %v2116 = vpop.permute.xlu0 %2115
  %2117 = vrot.lane.b32.xlu0 %v475, 40
  %v2118 = vpop.permute.xlu0 %2117
  %2119 = vrot.lane.b32.xlu0 %v480, 40
  %v2120 = vpop.permute.xlu0 %2119
  %v2130 = vsel %vm709, %v2090, 0
  %v2133 = vsel %vm709, %v2092, 0
  %v2136 = vsel %vm709, %v2094, 0
  %v2139 = vsel %vm709, %v2096, 0
  %v2142 = vsel %vm709, %v2098, 0
  %v2145 = vsel %vm709, %v2100, 0
  %v2148 = vsel %vm709, %v2102, 0
  %v2151 = vsel %vm709, %v2104, 0
  %2153 = vmatprep.subr.mxu0 0.0
  %2154 = vmatpush1.msra.mxu0 %v2106
  %2155 = vmatprep.subr.mxu0 0.0
  %2156 = vmatpush1.msra.mxu0 %v2108
  %2157 = vmatprep.subr.mxu0 0.0
  %2158 = vmatpush1.msra.mxu0 %v2110
  %2159 = vmatprep.subr.mxu0 0.0
  %2160 = vmatpush1.msra.mxu0 %v2112
  %2161 = vmatprep.subr.mxu0 0.0
  %2162 = vmatpush1.msra.mxu0 %v2114
  %2163 = vmatprep.subr.mxu0 0.0
  %2164 = vmatpush1.msra.mxu0 %v2116
  %2165 = vmatprep.subr.mxu0 0.0
  %2166 = vmatpush1.msra.mxu0 %v2118
  %2167 = vmatprep.subr.mxu0 0.0
  %2168 = vmatpush1.msra.mxu0 %v2120
  %2169 = vmatprep.subr.mxu0 0.0
  %2170 = vmatpush1.msra.mxu0 0.0
  %2171 = vmatprep.subr.mxu0 0.0
  %2172 = vmatpush1.msra.mxu0 0.0
  %2173 = vmatprep.subr.mxu0 0.0
  %2174 = vmatpush1.msra.mxu0 0.0
  %2175 = vmatprep.subr.mxu0 0.0
  %2176 = vmatpush1.msra.mxu0 0.0
  %2177 = vmatprep.subr.mxu0 0.0
  %2178 = vmatpush1.msra.mxu0 0.0
  %2179 = vmatprep.subr.mxu0 0.0
  %2180 = vmatpush1.msra.mxu0 0.0
  %2181 = vmatprep.subr.mxu0 0.0
  %2182 = vmatpush1.msra.mxu0 0.0
  %2183 = vmatprep.subr.mxu0 0.0
  %2184 = vmatpush1.msra.mxu0 0.0
  %2185 = vmatprep.subr.mxu0 0.0
  %2186 = vmatpush1.msra.mxu0 0.0
  %2187 = vmatprep.subr.mxu0 0.0
  %2188 = vmatpush1.msra.mxu0 0.0
  %2189 = vmatprep.subr.mxu0 0.0
  %2190 = vmatpush1.msra.mxu0 0.0
  %2191 = vmatprep.subr.mxu0 0.0
  %2192 = vmatpush1.msra.mxu0 0.0
  %2193 = vmatprep.subr.mxu0 0.0
  %2194 = vmatpush1.msra.mxu0 0.0
  %2195 = vmatprep.subr.mxu0 0.0
  %2196 = vmatpush1.msra.mxu0 0.0
  %2197 = vmatprep.subr.mxu0 0.0
  %2198 = vmatpush1.msra.mxu0 0.0
  %2199 = vmatprep.subr.mxu0 0.0
  %2200 = vmatpush1.msra.mxu0 0.0
  %2201 = vmatprep.subr.mxu0 0.0
  %2202 = vmatpush1.msra.mxu0 0.0
  %2203 = vmatprep.subr.mxu0 0.0
  %2204 = vmatpush1.msra.mxu0 0.0
  %2205 = vmatprep.subr.mxu0 0.0
  %2206 = vmatpush1.msra.mxu0 0.0
  %2207 = vmatprep.subr.mxu0 0.0
  %2208 = vmatpush1.msra.mxu0 0.0
  %2209 = vmatprep.subr.mxu0 0.0
  %2210 = vmatpush1.msra.mxu0 0.0
  %2211 = vmatprep.subr.mxu0 0.0
  %2212 = vmatpush1.msra.mxu0 0.0
  %2213 = vmatprep.subr.mxu0 0.0
  %2214 = vmatpush1.msra.mxu0 0.0
  %2215 = vmatprep.subr.mxu0 0.0
  %2216 = vmatpush1.msra.mxu0 0.0
  %2217 = vmatprep.mubr.f32.mxu0 0.0
  %2218 = vmatmul.mubr.f32.gmra.mrb[0].mxu0 %v2130
  %v2219 = vpop.f32.mrb[0].mxu0
  %v2220 = vadd.f32 0.0, %v2219
  %v2221 = vpop.f32.mrb[0].mxu0
  %2222 = vmatprep.mubr.f32.mxu0 0.0
  %2223 = vmatmul.mubr.f32.gmra.mrb[0].mxu0 %v2133
  %v2224 = vpop.f32.mrb[0].mxu0
  %v2225 = vadd.f32 0.0, %v2224
  %v2226 = vpop.f32.mrb[0].mxu0
  %2227 = vmatprep.mubr.f32.mxu0 0.0
  %2228 = vmatmul.mubr.f32.gmra.mrb[0].mxu0 %v2136
  %v2229 = vpop.f32.mrb[0].mxu0
  %v2230 = vadd.f32 0.0, %v2229
  %v2231 = vpop.f32.mrb[0].mxu0
  %2232 = vmatprep.mubr.f32.mxu0 0.0
  %2233 = vmatmul.mubr.f32.gmra.mrb[0].mxu0 %v2139
  %v2234 = vpop.f32.mrb[0].mxu0
  %v2235 = vadd.f32 0.0, %v2234
  %v2236 = vpop.f32.mrb[0].mxu0
  %2237 = vmatprep.mubr.f32.mxu0 0.0
  %2238 = vmatmul.mubr.f32.gmra.mrb[0].mxu0 %v2142
  %v2239 = vpop.f32.mrb[0].mxu0
  %v2240 = vadd.f32 0.0, %v2239
  %v2241 = vpop.f32.mrb[0].mxu0
  %2242 = vmatprep.mubr.f32.mxu0 0.0
  %2243 = vmatmul.mubr.f32.gmra.mrb[0].mxu0 %v2145
  %v2244 = vpop.f32.mrb[0].mxu0
  %v2245 = vadd.f32 0.0, %v2244
  %v2246 = vpop.f32.mrb[0].mxu0
  %2247 = vmatprep.mubr.f32.mxu0 0.0
  %2248 = vmatmul.mubr.f32.gmra.mrb[0].mxu0 %v2148
  %v2249 = vpop.f32.mrb[0].mxu0
  %v2250 = vadd.f32 0.0, %v2249
  %v2251 = vpop.f32.mrb[0].mxu0
  %2252 = vmatprep.mubr.f32.mxu0 0.0
  %2253 = vmatmul.mubr.f32.gmra.mrb[0].mxu0 %v2151
  %v2254 = vpop.f32.mrb[0].mxu0
  %v2255 = vadd.f32 0.0, %v2254
  %v2256 = vpop.f32.mrb[0].mxu0
  %2257 = vdwg.mxu0
  %v2258 = vsel %vm709, %v2090, 0.0
  %2259 = vadd.xlane.f32.xlu0 %v2258
  %v2260 = vpop.xlane.xlu0 %2259
  %v2261 = vsel %vm709, %v2092, 0.0
  %2262 = vadd.xlane.f32.xlu0 %v2261
  %v2263 = vpop.xlane.xlu0 %2262
  %v2264 = vsel %vm709, %v2094, 0.0
  %2265 = vadd.xlane.f32.xlu0 %v2264
  %v2266 = vpop.xlane.xlu0 %2265
  %v2267 = vsel %vm709, %v2096, 0.0
  %2268 = vadd.xlane.f32.xlu0 %v2267
  %v2269 = vpop.xlane.xlu0 %2268
  %v2270 = vsel %vm709, %v2098, 0.0
  %2271 = vadd.xlane.f32.xlu0 %v2270
  %v2272 = vpop.xlane.xlu0 %2271
  %v2273 = vsel %vm709, %v2100, 0.0
  %2274 = vadd.xlane.f32.xlu0 %v2273
  %v2275 = vpop.xlane.xlu0 %2274
  %v2276 = vsel %vm709, %v2102, 0.0
  %2277 = vadd.xlane.f32.xlu0 %v2276
  %v2278 = vpop.xlane.xlu0 %2277
  %v2279 = vsel %vm709, %v2104, 0.0
  %2280 = vadd.xlane.f32.xlu0 %v2279
  %v2281 = vpop.xlane.xlu0 %2280
  %v2282 = vrcp.pop %v2260
  %v2283 = vrcp.pop %v2263
  %v2284 = vrcp.pop %v2266
  %v2285 = vrcp.pop %v2269
  %v2286 = vrcp.pop %v2272
  %v2287 = vrcp.pop %v2275
  %v2288 = vrcp.pop %v2278
  %v2289 = vrcp.pop %v2281
  %v2290 = vmul.f32 %v2220, %v2282
  %v2291 = vmul.f32 %v2225, %v2283
  %v2292 = vmul.f32 %v2230, %v2284
  %v2293 = vmul.f32 %v2235, %v2285
  %v2294 = vmul.f32 %v2240, %v2286
  %v2295 = vmul.f32 %v2245, %v2287
  %v2296 = vmul.f32 %v2250, %v2288
  %v2297 = vmul.f32 %v2255, %v2289
  %2306 = vrot.lane.b32.xlu0 %v2290, 24
  %v2307 = vpop.permute.xlu0 %2306
  %2308 = vrot.lane.b32.xlu0 %v2291, 24
  %v2309 = vpop.permute.xlu0 %2308
  %2310 = vrot.lane.b32.xlu0 %v2292, 24
  %v2311 = vpop.permute.xlu0 %2310
  %2312 = vrot.lane.b32.xlu0 %v2293, 24
  %v2313 = vpop.permute.xlu0 %2312
  %2314 = vrot.lane.b32.xlu0 %v2294, 24
  %v2315 = vpop.permute.xlu0 %2314
  %2316 = vrot.lane.b32.xlu0 %v2295, 24
  %v2317 = vpop.permute.xlu0 %2316
  %2318 = vrot.lane.b32.xlu0 %v2296, 24
  %v2319 = vpop.permute.xlu0 %2318
  %2320 = vrot.lane.b32.xlu0 %v2297, 24
  %v2321 = vpop.permute.xlu0 %2320
  %vm2330 = vcmask 261312
  %2331 = vst.msk [vmem:[#allocation2] sm:$0xff] %vm2330, %v2307
  %2332 = vst.msk [vmem:[#allocation2 + $0x8] sm:$0xff] %vm2330, %v2309
  %2333 = vst.msk [vmem:[#allocation2 + $0x10] sm:$0xff] %vm2330, %v2311
  %2334 = vst.msk [vmem:[#allocation2 + $0x18] sm:$0xff] %vm2330, %v2313
  %2335 = vst.msk [vmem:[#allocation2 + $0x20] sm:$0xff] %vm2330, %v2315
  %2336 = vst.msk [vmem:[#allocation2 + $0x28] sm:$0xff] %vm2330, %v2317
  %2337 = vst.msk [vmem:[#allocation2 + $0x30] sm:$0xff] %vm2330, %v2319
  %2338 = vst.msk [vmem:[#allocation2 + $0x38] sm:$0xff] %vm2330, %v2321
  %v2339 = vmul.f32 %v485, 0.35355338
  %v2340 = vmul.f32 %v490, 0.35355338
  %v2341 = vmul.f32 %v495, 0.35355338
  %v2342 = vmul.f32 %v500, 0.35355338
  %v2343 = vmul.f32 %v505, 0.35355338
  %v2344 = vmul.f32 %v510, 0.35355338
  %v2345 = vmul.f32 %v515, 0.35355338
  %v2346 = vmul.f32 %v520, 0.35355338
  %v2347 = vld [vmem:[%s7] sm:$0xff]
  %v2348 = vld [vmem:[%s7 + $0x8] sm:$0xff]
  %v2349 = vld [vmem:[%s7 + $0x10] sm:$0xff]
  %v2350 = vld [vmem:[%s7 + $0x18] sm:$0xff]
  %v2351 = vld [vmem:[%s7 + $0x20] sm:$0xff]
  %v2352 = vld [vmem:[%s7 + $0x28] sm:$0xff]
  %v2353 = vld [vmem:[%s7 + $0x30] sm:$0xff]
  %v2354 = vld [vmem:[%s7 + $0x38] sm:$0xff]
  %2363 = vrot.lane.b32.xlu0 %v485, 96
  %v2364 = vpop.permute.xlu0 %2363
  %2365 = vrot.lane.b32.xlu0 %v490, 96
  %v2366 = vpop.permute.xlu0 %2365
  %2367 = vrot.lane.b32.xlu0 %v495, 96
  %v2368 = vpop.permute.xlu0 %2367
  %2369 = vrot.lane.b32.xlu0 %v500, 96
  %v2370 = vpop.permute.xlu0 %2369
  %2371 = vrot.lane.b32.xlu0 %v505, 96
  %v2372 = vpop.permute.xlu0 %2371
  %2373 = vrot.lane.b32.xlu0 %v510, 96
  %v2374 = vpop.permute.xlu0 %2373
  %2375 = vrot.lane.b32.xlu0 %v515, 96
  %v2376 = vpop.permute.xlu0 %2375
  %2377 = vrot.lane.b32.xlu0 %v520, 96
  %v2378 = vpop.permute.xlu0 %2377
  %v2380 = vsel %vm563, %v2339, 0
  %v2383 = vsel %vm563, %v2340, 0
  %v2386 = vsel %vm563, %v2341, 0
  %v2389 = vsel %vm563, %v2342, 0
  %v2392 = vsel %vm563, %v2343, 0
  %v2395 = vsel %vm563, %v2344, 0
  %v2398 = vsel %vm563, %v2345, 0
  %v2401 = vsel %vm563, %v2346, 0
  %v2403 = vsel %vm563, %v2364, 0
  %v2405 = vsel %vm563, %v2366, 0
  %v2407 = vsel %vm563, %v2368, 0
  %v2409 = vsel %vm563, %v2370, 0
  %v2411 = vsel %vm563, %v2372, 0
  %v2413 = vsel %vm563, %v2374, 0
  %v2415 = vsel %vm563, %v2376, 0
  %v2417 = vsel %vm563, %v2378, 0
  %2419 = vmatprep.subr.mxu0 0.0
  %2420 = vmatpush1.xpose.msra.mxu0 %v2403
  %2421 = vmatprep.subr.mxu0 0.0
  %2422 = vmatpush1.xpose.msra.mxu0 %v2405
  %2423 = vmatprep.subr.mxu0 0.0
  %2424 = vmatpush1.xpose.msra.mxu0 %v2407
  %2425 = vmatprep.subr.mxu0 0.0
  %2426 = vmatpush1.xpose.msra.mxu0 %v2409
  %2427 = vmatprep.subr.mxu0 0.0
  %2428 = vmatpush1.xpose.msra.mxu0 %v2411
  %2429 = vmatprep.subr.mxu0 0.0
  %2430 = vmatpush1.xpose.msra.mxu0 %v2413
  %2431 = vmatprep.subr.mxu0 0.0
  %2432 = vmatpush1.xpose.msra.mxu0 %v2415
  %2433 = vmatprep.subr.mxu0 0.0
  %2434 = vmatpush1.xpose.msra.mxu0 %v2417
  %2435 = vmatprep.subr.mxu0 0.0
  %2436 = vmatpush1.xpose.msra.mxu0 0.0
  %2437 = vmatprep.subr.mxu0 0.0
  %2438 = vmatpush1.xpose.msra.mxu0 0.0
  %2439 = vmatprep.subr.mxu0 0.0
  %2440 = vmatpush1.xpose.msra.mxu0 0.0
  %2441 = vmatprep.subr.mxu0 0.0
  %2442 = vmatpush1.xpose.msra.mxu0 0.0
  %2443 = vmatprep.subr.mxu0 0.0
  %2444 = vmatpush1.xpose.msra.mxu0 0.0
  %2445 = vmatprep.subr.mxu0 0.0
  %2446 = vmatpush1.xpose.msra.mxu0 0.0
  %2447 = vmatprep.subr.mxu0 0.0
  %2448 = vmatpush1.xpose.msra.mxu0 0.0
  %2449 = vmatprep.subr.mxu0 0.0
  %2450 = vmatpush1.xpose.msra.mxu0 0.0
  %2451 = vmatprep.subr.mxu0 0.0
  %2452 = vmatpush1.xpose.msra.mxu0 0.0
  %2453 = vmatprep.subr.mxu0 0.0
  %2454 = vmatpush1.xpose.msra.mxu0 0.0
  %2455 = vmatprep.subr.mxu0 0.0
  %2456 = vmatpush1.xpose.msra.mxu0 0.0
  %2457 = vmatprep.subr.mxu0 0.0
  %2458 = vmatpush1.xpose.msra.mxu0 0.0
  %2459 = vmatprep.subr.mxu0 0.0
  %2460 = vmatpush1.xpose.msra.mxu0 0.0
  %2461 = vmatprep.subr.mxu0 0.0
  %2462 = vmatpush1.xpose.msra.mxu0 0.0
  %2463 = vmatprep.subr.mxu0 0.0
  %2464 = vmatpush1.xpose.msra.mxu0 0.0
  %2465 = vmatprep.subr.mxu0 0.0
  %2466 = vmatpush1.xpose.msra.mxu0 0.0
  %2467 = vmatprep.subr.mxu0 0.0
  %2468 = vmatpush1.xpose.msra.mxu0 0.0
  %2469 = vmatprep.subr.mxu0 0.0
  %2470 = vmatpush1.xpose.msra.mxu0 0.0
  %2471 = vmatprep.subr.mxu0 0.0
  %2472 = vmatpush1.xpose.msra.mxu0 0.0
  %2473 = vmatprep.subr.mxu0 0.0
  %2474 = vmatpush1.xpose.msra.mxu0 0.0
  %2475 = vmatprep.subr.mxu0 0.0
  %2476 = vmatpush1.xpose.msra.mxu0 0.0
  %2477 = vmatprep.subr.mxu0 0.0
  %2478 = vmatpush1.xpose.msra.mxu0 0.0
  %2479 = vmatprep.subr.mxu0 0.0
  %2480 = vmatpush1.xpose.msra.mxu0 0.0
  %2481 = vmatprep.subr.mxu0 0.0
  %2482 = vmatpush1.xpose.msra.mxu0 0.0
  %2483 = vmatprep.mubr.f32.mxu0 0.0
  %2484 = vmatmul.mubr.f32.gmra.mrb[0].mxu0 %v2380
  %v2485 = vpop.f32.mrb[0].mxu0
  %v2486 = vadd.f32 %v2347, %v2485
  %v2487 = vpop.f32.mrb[0].mxu0
  %2488 = vmatprep.mubr.f32.mxu0 0.0
  %2489 = vmatmul.mubr.f32.gmra.mrb[0].mxu0 %v2383
  %v2490 = vpop.f32.mrb[0].mxu0
  %v2491 = vadd.f32 %v2348, %v2490
  %v2492 = vpop.f32.mrb[0].mxu0
  %2493 = vmatprep.mubr.f32.mxu0 0.0
  %2494 = vmatmul.mubr.f32.gmra.mrb[0].mxu0 %v2386
  %v2495 = vpop.f32.mrb[0].mxu0
  %v2496 = vadd.f32 %v2349, %v2495
  %v2497 = vpop.f32.mrb[0].mxu0
  %2498 = vmatprep.mubr.f32.mxu0 0.0
  %2499 = vmatmul.mubr.f32.gmra.mrb[0].mxu0 %v2389
  %v2500 = vpop.f32.mrb[0].mxu0
  %v2501 = vadd.f32 %v2350, %v2500
  %v2502 = vpop.f32.mrb[0].mxu0
  %2503 = vmatprep.mubr.f32.mxu0 0.0
  %2504 = vmatmul.mubr.f32.gmra.mrb[0].mxu0 %v2392
  %v2505 = vpop.f32.mrb[0].mxu0
  %v2506 = vadd.f32 %v2351, %v2505
  %v2507 = vpop.f32.mrb[0].mxu0
  %2508 = vmatprep.mubr.f32.mxu0 0.0
  %2509 = vmatmul.mubr.f32.gmra.mrb[0].mxu0 %v2395
  %v2510 = vpop.f32.mrb[0].mxu0
  %v2511 = vadd.f32 %v2352, %v2510
  %v2512 = vpop.f32.mrb[0].mxu0
  %2513 = vmatprep.mubr.f32.mxu0 0.0
  %2514 = vmatmul.mubr.f32.gmra.mrb[0].mxu0 %v2398
  %v2515 = vpop.f32.mrb[0].mxu0
  %v2516 = vadd.f32 %v2353, %v2515
  %v2517 = vpop.f32.mrb[0].mxu0
  %2518 = vmatprep.mubr.f32.mxu0 0.0
  %2519 = vmatmul.mubr.f32.gmra.mrb[0].mxu0 %v2401
  %v2520 = vpop.f32.mrb[0].mxu0
  %v2521 = vadd.f32 %v2354, %v2520
  %v2522 = vpop.f32.mrb[0].mxu0
  %2523 = vdwg.mxu0
  %v2524 = vsel %vm709, %v2486, -inf
  %2525 = vmax.xlane.f32.xlu0 %v2524
  %v2526 = vpop.xlane.xlu0 %2525
  %v2527 = vsel %vm709, %v2491, -inf
  %2528 = vmax.xlane.f32.xlu0 %v2527
  %v2529 = vpop.xlane.xlu0 %2528
  %v2530 = vsel %vm709, %v2496, -inf
  %2531 = vmax.xlane.f32.xlu0 %v2530
  %v2532 = vpop.xlane.xlu0 %2531
  %v2533 = vsel %vm709, %v2501, -inf
  %2534 = vmax.xlane.f32.xlu0 %v2533
  %v2535 = vpop.xlane.xlu0 %2534
  %v2536 = vsel %vm709, %v2506, -inf
  %2537 = vmax.xlane.f32.xlu0 %v2536
  %v2538 = vpop.xlane.xlu0 %2537
  %v2539 = vsel %vm709, %v2511, -inf
  %2540 = vmax.xlane.f32.xlu0 %v2539
  %v2541 = vpop.xlane.xlu0 %2540
  %v2542 = vsel %vm709, %v2516, -inf
  %2543 = vmax.xlane.f32.xlu0 %v2542
  %v2544 = vpop.xlane.xlu0 %2543
  %v2545 = vsel %vm709, %v2521, -inf
  %2546 = vmax.xlane.f32.xlu0 %v2545
  %v2547 = vpop.xlane.xlu0 %2546
  %v2548 = vsub.f32 %v2486, %v2526
  %v2549 = vsub.f32 %v2491, %v2529
  %v2550 = vsub.f32 %v2496, %v2532
  %v2551 = vsub.f32 %v2501, %v2535
  %v2552 = vsub.f32 %v2506, %v2538
  %v2553 = vsub.f32 %v2511, %v2541
  %v2554 = vsub.f32 %v2516, %v2544
  %v2555 = vsub.f32 %v2521, %v2547
  %v2556 = vmul.f32 %v2548, 1.442695
  %v2557 = vpow.pop %v2556
  %v2558 = vmul.f32 %v2549, 1.442695
  %v2559 = vpow.pop %v2558
  %v2560 = vmul.f32 %v2550, 1.442695
  %v2561 = vpow.pop %v2560
  %v2562 = vmul.f32 %v2551, 1.442695
  %v2563 = vpow.pop %v2562
  %v2564 = vmul.f32 %v2552, 1.442695
  %v2565 = vpow.pop %v2564
  %v2566 = vmul.f32 %v2553, 1.442695
  %v2567 = vpow.pop %v2566
  %v2568 = vmul.f32 %v2554, 1.442695
  %v2569 = vpow.pop %v2568
  %v2570 = vmul.f32 %v2555, 1.442695
  %v2571 = vpow.pop %v2570
  %2572 = vrot.lane.b32.xlu0 %v485, 64
  %v2573 = vpop.permute.xlu0 %2572
  %2574 = vrot.lane.b32.xlu0 %v490, 64
  %v2575 = vpop.permute.xlu0 %2574
  %2576 = vrot.lane.b32.xlu0 %v495, 64
  %v2577 = vpop.permute.xlu0 %2576
  %2578 = vrot.lane.b32.xlu0 %v500, 64
  %v2579 = vpop.permute.xlu0 %2578
  %2580 = vrot.lane.b32.xlu0 %v505, 64
  %v2581 = vpop.permute.xlu0 %2580
  %2582 = vrot.lane.b32.xlu0 %v510, 64
  %v2583 = vpop.permute.xlu0 %2582
  %2584 = vrot.lane.b32.xlu0 %v515, 64
  %v2585 = vpop.permute.xlu0 %2584
  %2586 = vrot.lane.b32.xlu0 %v520, 64
  %v2587 = vpop.permute.xlu0 %2586
  %v2597 = vsel %vm709, %v2557, 0
  %v2600 = vsel %vm709, %v2559, 0
  %v2603 = vsel %vm709, %v2561, 0
  %v2606 = vsel %vm709, %v2563, 0
  %v2609 = vsel %vm709, %v2565, 0
  %v2612 = vsel %vm709, %v2567, 0
  %v2615 = vsel %vm709, %v2569, 0
  %v2618 = vsel %vm709, %v2571, 0
  %2620 = vmatprep.subr.mxu0 0.0
  %2621 = vmatpush1.msra.mxu0 %v2573
  %2622 = vmatprep.subr.mxu0 0.0
  %2623 = vmatpush1.msra.mxu0 %v2575
  %2624 = vmatprep.subr.mxu0 0.0
  %2625 = vmatpush1.msra.mxu0 %v2577
  %2626 = vmatprep.subr.mxu0 0.0
  %2627 = vmatpush1.msra.mxu0 %v2579
  %2628 = vmatprep.subr.mxu0 0.0
  %2629 = vmatpush1.msra.mxu0 %v2581
  %2630 = vmatprep.subr.mxu0 0.0
  %2631 = vmatpush1.msra.mxu0 %v2583
  %2632 = vmatprep.subr.mxu0 0.0
  %2633 = vmatpush1.msra.mxu0 %v2585
  %2634 = vmatprep.subr.mxu0 0.0
  %2635 = vmatpush1.msra.mxu0 %v2587
  %2636 = vmatprep.subr.mxu0 0.0
  %2637 = vmatpush1.msra.mxu0 0.0
  %2638 = vmatprep.subr.mxu0 0.0
  %2639 = vmatpush1.msra.mxu0 0.0
  %2640 = vmatprep.subr.mxu0 0.0
  %2641 = vmatpush1.msra.mxu0 0.0
  %2642 = vmatprep.subr.mxu0 0.0
  %2643 = vmatpush1.msra.mxu0 0.0
  %2644 = vmatprep.subr.mxu0 0.0
  %2645 = vmatpush1.msra.mxu0 0.0
  %2646 = vmatprep.subr.mxu0 0.0
  %2647 = vmatpush1.msra.mxu0 0.0
  %2648 = vmatprep.subr.mxu0 0.0
  %2649 = vmatpush1.msra.mxu0 0.0
  %2650 = vmatprep.subr.mxu0 0.0
  %2651 = vmatpush1.msra.mxu0 0.0
  %2652 = vmatprep.subr.mxu0 0.0
  %2653 = vmatpush1.msra.mxu0 0.0
  %2654 = vmatprep.subr.mxu0 0.0
  %2655 = vmatpush1.msra.mxu0 0.0
  %2656 = vmatprep.subr.mxu0 0.0
  %2657 = vmatpush1.msra.mxu0 0.0
  %2658 = vmatprep.subr.mxu0 0.0
  %2659 = vmatpush1.msra.mxu0 0.0
  %2660 = vmatprep.subr.mxu0 0.0
  %2661 = vmatpush1.msra.mxu0 0.0
  %2662 = vmatprep.subr.mxu0 0.0
  %2663 = vmatpush1.msra.mxu0 0.0
  %2664 = vmatprep.subr.mxu0 0.0
  %2665 = vmatpush1.msra.mxu0 0.0
  %2666 = vmatprep.subr.mxu0 0.0
  %2667 = vmatpush1.msra.mxu0 0.0
  %2668 = vmatprep.subr.mxu0 0.0
  %2669 = vmatpush1.msra.mxu0 0.0
  %2670 = vmatprep.subr.mxu0 0.0
  %2671 = vmatpush1.msra.mxu0 0.0
  %2672 = vmatprep.subr.mxu0 0.0
  %2673 = vmatpush1.msra.mxu0 0.0
  %2674 = vmatprep.subr.mxu0 0.0
  %2675 = vmatpush1.msra.mxu0 0.0
  %2676 = vmatprep.subr.mxu0 0.0
  %2677 = vmatpush1.msra.mxu0 0.0
  %2678 = vmatprep.subr.mxu0 0.0
  %2679 = vmatpush1.msra.mxu0 0.0
  %2680 = vmatprep.subr.mxu0 0.0
  %2681 = vmatpush1.msra.mxu0 0.0
  %2682 = vmatprep.subr.mxu0 0.0
  %2683 = vmatpush1.msra.mxu0 0.0
  %2684 = vmatprep.mubr.f32.mxu0 0.0
  %2685 = vmatmul.mubr.f32.gmra.mrb[0].mxu0 %v2597
  %v2686 = vpop.f32.mrb[0].mxu0
  %v2687 = vadd.f32 0.0, %v2686
  %v2688 = vpop.f32.mrb[0].mxu0
  %2689 = vmatprep.mubr.f32.mxu0 0.0
  %2690 = vmatmul.mubr.f32.gmra.mrb[0].mxu0 %v2600
  %v2691 = vpop.f32.mrb[0].mxu0
  %v2692 = vadd.f32 0.0, %v2691
  %v2693 = vpop.f32.mrb[0].mxu0
  %2694 = vmatprep.mubr.f32.mxu0 0.0
  %2695 = vmatmul.mubr.f32.gmra.mrb[0].mxu0 %v2603
  %v2696 = vpop.f32.mrb[0].mxu0
  %v2697 = vadd.f32 0.0, %v2696
  %v2698 = vpop.f32.mrb[0].mxu0
  %2699 = vmatprep.mubr.f32.mxu0 0.0
  %2700 = vmatmul.mubr.f32.gmra.mrb[0].mxu0 %v2606
  %v2701 = vpop.f32.mrb[0].mxu0
  %v2702 = vadd.f32 0.0, %v2701
  %v2703 = vpop.f32.mrb[0].mxu0
  %2704 = vmatprep.mubr.f32.mxu0 0.0
  %2705 = vmatmul.mubr.f32.gmra.mrb[0].mxu0 %v2609
  %v2706 = vpop.f32.mrb[0].mxu0
  %v2707 = vadd.f32 0.0, %v2706
  %v2708 = vpop.f32.mrb[0].mxu0
  %2709 = vmatprep.mubr.f32.mxu0 0.0
  %2710 = vmatmul.mubr.f32.gmra.mrb[0].mxu0 %v2612
  %v2711 = vpop.f32.mrb[0].mxu0
  %v2712 = vadd.f32 0.0, %v2711
  %v2713 = vpop.f32.mrb[0].mxu0
  %2714 = vmatprep.mubr.f32.mxu0 0.0
  %2715 = vmatmul.mubr.f32.gmra.mrb[0].mxu0 %v2615
  %v2716 = vpop.f32.mrb[0].mxu0
  %v2717 = vadd.f32 0.0, %v2716
  %v2718 = vpop.f32.mrb[0].mxu0
  %2719 = vmatprep.mubr.f32.mxu0 0.0
  %2720 = vmatmul.mubr.f32.gmra.mrb[0].mxu0 %v2618
  %v2721 = vpop.f32.mrb[0].mxu0
  %v2722 = vadd.f32 0.0, %v2721
  %v2723 = vpop.f32.mrb[0].mxu0
  %2724 = vdwg.mxu0
  %v2725 = vsel %vm709, %v2557, 0.0
  %2726 = vadd.xlane.f32.xlu0 %v2725
  %v2727 = vpop.xlane.xlu0 %2726
  %v2728 = vsel %vm709, %v2559, 0.0
  %2729 = vadd.xlane.f32.xlu0 %v2728
  %v2730 = vpop.xlane.xlu0 %2729
  %v2731 = vsel %vm709, %v2561, 0.0
  %2732 = vadd.xlane.f32.xlu0 %v2731
  %v2733 = vpop.xlane.xlu0 %2732
  %v2734 = vsel %vm709, %v2563, 0.0
  %2735 = vadd.xlane.f32.xlu0 %v2734
  %v2736 = vpop.xlane.xlu0 %2735
  %v2737 = vsel %vm709, %v2565, 0.0
  %2738 = vadd.xlane.f32.xlu0 %v2737
  %v2739 = vpop.xlane.xlu0 %2738
  %v2740 = vsel %vm709, %v2567, 0.0
  %2741 = vadd.xlane.f32.xlu0 %v2740
  %v2742 = vpop.xlane.xlu0 %2741
  %v2743 = vsel %vm709, %v2569, 0.0
  %2744 = vadd.xlane.f32.xlu0 %v2743
  %v2745 = vpop.xlane.xlu0 %2744
  %v2746 = vsel %vm709, %v2571, 0.0
  %2747 = vadd.xlane.f32.xlu0 %v2746
  %v2748 = vpop.xlane.xlu0 %2747
  %v2749 = vrcp.pop %v2727
  %v2750 = vrcp.pop %v2730
  %v2751 = vrcp.pop %v2733
  %v2752 = vrcp.pop %v2736
  %v2753 = vrcp.pop %v2739
  %v2754 = vrcp.pop %v2742
  %v2755 = vrcp.pop %v2745
  %v2756 = vrcp.pop %v2748
  %v2757 = vmul.f32 %v2687, %v2749
  %v2758 = vmul.f32 %v2692, %v2750
  %v2759 = vmul.f32 %v2697, %v2751
  %v2760 = vmul.f32 %v2702, %v2752
  %v2761 = vmul.f32 %v2707, %v2753
  %v2762 = vmul.f32 %v2712, %v2754
  %v2763 = vmul.f32 %v2717, %v2755
  %v2764 = vmul.f32 %v2722, %v2756
  %2765 = vst.msk [vmem:[#allocation2 + $0x40] sm:$0xff] %vm563, %v2757
  %2766 = vst.msk [vmem:[#allocation2 + $0x48] sm:$0xff] %vm563, %v2758
  %2767 = vst.msk [vmem:[#allocation2 + $0x50] sm:$0xff] %vm563, %v2759
  %2768 = vst.msk [vmem:[#allocation2 + $0x58] sm:$0xff] %vm563, %v2760
  %2769 = vst.msk [vmem:[#allocation2 + $0x60] sm:$0xff] %vm563, %v2761
  %2770 = vst.msk [vmem:[#allocation2 + $0x68] sm:$0xff] %vm563, %v2762
  %2771 = vst.msk [vmem:[#allocation2 + $0x70] sm:$0xff] %vm563, %v2763
  %2772 = vst.msk [vmem:[#allocation2 + $0x78] sm:$0xff] %vm563, %v2764
  %v2773 = vld [vmem:[%s959] sm:$0xff]
  %v2774 = vld [vmem:[%s959 + $0x8] sm:$0xff]
  %v2775 = vld [vmem:[%s959 + $0x10] sm:$0xff]
  %v2776 = vld [vmem:[%s959 + $0x18] sm:$0xff]
  %v2777 = vld [vmem:[%s959 + $0x20] sm:$0xff]
  %v2778 = vld [vmem:[%s959 + $0x28] sm:$0xff]
  %v2779 = vld [vmem:[%s959 + $0x30] sm:$0xff]
  %v2780 = vld [vmem:[%s959 + $0x38] sm:$0xff]
  %2781 = vrot.lane.b32.xlu0 %v2339, 120
  %v2782 = vpop.permute.xlu0 %2781
  %2783 = vrot.lane.b32.xlu0 %v2340, 120
  %v2784 = vpop.permute.xlu0 %2783
  %2785 = vrot.lane.b32.xlu0 %v2341, 120
  %v2786 = vpop.permute.xlu0 %2785
  %2787 = vrot.lane.b32.xlu0 %v2342, 120
  %v2788 = vpop.permute.xlu0 %2787
  %2789 = vrot.lane.b32.xlu0 %v2343, 120
  %v2790 = vpop.permute.xlu0 %2789
  %2791 = vrot.lane.b32.xlu0 %v2344, 120
  %v2792 = vpop.permute.xlu0 %2791
  %2793 = vrot.lane.b32.xlu0 %v2345, 120
  %v2794 = vpop.permute.xlu0 %2793
  %2795 = vrot.lane.b32.xlu0 %v2346, 120
  %v2796 = vpop.permute.xlu0 %2795
  %2797 = vrot.lane.b32.xlu0 %v485, 88
  %v2798 = vpop.permute.xlu0 %2797
  %2799 = vrot.lane.b32.xlu0 %v490, 88
  %v2800 = vpop.permute.xlu0 %2799
  %2801 = vrot.lane.b32.xlu0 %v495, 88
  %v2802 = vpop.permute.xlu0 %2801
  %2803 = vrot.lane.b32.xlu0 %v500, 88
  %v2804 = vpop.permute.xlu0 %2803
  %2805 = vrot.lane.b32.xlu0 %v505, 88
  %v2806 = vpop.permute.xlu0 %2805
  %2807 = vrot.lane.b32.xlu0 %v510, 88
  %v2808 = vpop.permute.xlu0 %2807
  %2809 = vrot.lane.b32.xlu0 %v515, 88
  %v2810 = vpop.permute.xlu0 %2809
  %2811 = vrot.lane.b32.xlu0 %v520, 88
  %v2812 = vpop.permute.xlu0 %2811
  %v2813 = vsel %vm563, %v2782, 0
  %v2815 = vsel %vm563, %v2784, 0
  %v2817 = vsel %vm563, %v2786, 0
  %v2819 = vsel %vm563, %v2788, 0
  %v2821 = vsel %vm563, %v2790, 0
  %v2823 = vsel %vm563, %v2792, 0
  %v2825 = vsel %vm563, %v2794, 0
  %v2827 = vsel %vm563, %v2796, 0
  %v2829 = vsel %vm563, %v2798, 0
  %v2831 = vsel %vm563, %v2800, 0
  %v2833 = vsel %vm563, %v2802, 0
  %v2835 = vsel %vm563, %v2804, 0
  %v2837 = vsel %vm563, %v2806, 0
  %v2839 = vsel %vm563, %v2808, 0
  %v2841 = vsel %vm563, %v2810, 0
  %v2843 = vsel %vm563, %v2812, 0
  %2845 = vmatprep.subr.mxu0 0.0
  %2846 = vmatpush1.xpose.msra.mxu0 %v2829
  %2847 = vmatprep.subr.mxu0 0.0
  %2848 = vmatpush1.xpose.msra.mxu0 %v2831
  %2849 = vmatprep.subr.mxu0 0.0
  %2850 = vmatpush1.xpose.msra.mxu0 %v2833
  %2851 = vmatprep.subr.mxu0 0.0
  %2852 = vmatpush1.xpose.msra.mxu0 %v2835
  %2853 = vmatprep.subr.mxu0 0.0
  %2854 = vmatpush1.xpose.msra.mxu0 %v2837
  %2855 = vmatprep.subr.mxu0 0.0
  %2856 = vmatpush1.xpose.msra.mxu0 %v2839
  %2857 = vmatprep.subr.mxu0 0.0
  %2858 = vmatpush1.xpose.msra.mxu0 %v2841
  %2859 = vmatprep.subr.mxu0 0.0
  %2860 = vmatpush1.xpose.msra.mxu0 %v2843
  %2861 = vmatprep.subr.mxu0 0.0
  %2862 = vmatpush1.xpose.msra.mxu0 0.0
  %2863 = vmatprep.subr.mxu0 0.0
  %2864 = vmatpush1.xpose.msra.mxu0 0.0
  %2865 = vmatprep.subr.mxu0 0.0
  %2866 = vmatpush1.xpose.msra.mxu0 0.0
  %2867 = vmatprep.subr.mxu0 0.0
  %2868 = vmatpush1.xpose.msra.mxu0 0.0
  %2869 = vmatprep.subr.mxu0 0.0
  %2870 = vmatpush1.xpose.msra.mxu0 0.0
  %2871 = vmatprep.subr.mxu0 0.0
  %2872 = vmatpush1.xpose.msra.mxu0 0.0
  %2873 = vmatprep.subr.mxu0 0.0
  %2874 = vmatpush1.xpose.msra.mxu0 0.0
  %2875 = vmatprep.subr.mxu0 0.0
  %2876 = vmatpush1.xpose.msra.mxu0 0.0
  %2877 = vmatprep.subr.mxu0 0.0
  %2878 = vmatpush1.xpose.msra.mxu0 0.0
  %2879 = vmatprep.subr.mxu0 0.0
  %2880 = vmatpush1.xpose.msra.mxu0 0.0
  %2881 = vmatprep.subr.mxu0 0.0
  %2882 = vmatpush1.xpose.msra.mxu0 0.0
  %2883 = vmatprep.subr.mxu0 0.0
  %2884 = vmatpush1.xpose.msra.mxu0 0.0
  %2885 = vmatprep.subr.mxu0 0.0
  %2886 = vmatpush1.xpose.msra.mxu0 0.0
  %2887 = vmatprep.subr.mxu0 0.0
  %2888 = vmatpush1.xpose.msra.mxu0 0.0
  %2889 = vmatprep.subr.mxu0 0.0
  %2890 = vmatpush1.xpose.msra.mxu0 0.0
  %2891 = vmatprep.subr.mxu0 0.0
  %2892 = vmatpush1.xpose.msra.mxu0 0.0
  %2893 = vmatprep.subr.mxu0 0.0
  %2894 = vmatpush1.xpose.msra.mxu0 0.0
  %2895 = vmatprep.subr.mxu0 0.0
  %2896 = vmatpush1.xpose.msra.mxu0 0.0
  %2897 = vmatprep.subr.mxu0 0.0
  %2898 = vmatpush1.xpose.msra.mxu0 0.0
  %2899 = vmatprep.subr.mxu0 0.0
  %2900 = vmatpush1.xpose.msra.mxu0 0.0
  %2901 = vmatprep.subr.mxu0 0.0
  %2902 = vmatpush1.xpose.msra.mxu0 0.0
  %2903 = vmatprep.subr.mxu0 0.0
  %2904 = vmatpush1.xpose.msra.mxu0 0.0
  %2905 = vmatprep.subr.mxu0 0.0
  %2906 = vmatpush1.xpose.msra.mxu0 0.0
  %2907 = vmatprep.subr.mxu0 0.0
  %2908 = vmatpush1.xpose.msra.mxu0 0.0
  %2909 = vmatprep.mubr.f32.mxu0 0.0
  %2910 = vmatmul.mubr.f32.gmra.mrb[0].mxu0 %v2813
  %v2911 = vpop.f32.mrb[0].mxu0
  %v2912 = vadd.f32 %v2773, %v2911
  %v2913 = vpop.f32.mrb[0].mxu0
  %2914 = vmatprep.mubr.f32.mxu0 0.0
  %2915 = vmatmul.mubr.f32.gmra.mrb[0].mxu0 %v2815
  %v2916 = vpop.f32.mrb[0].mxu0
  %v2917 = vadd.f32 %v2774, %v2916
  %v2918 = vpop.f32.mrb[0].mxu0
  %2919 = vmatprep.mubr.f32.mxu0 0.0
  %2920 = vmatmul.mubr.f32.gmra.mrb[0].mxu0 %v2817
  %v2921 = vpop.f32.mrb[0].mxu0
  %v2922 = vadd.f32 %v2775, %v2921
  %v2923 = vpop.f32.mrb[0].mxu0
  %2924 = vmatprep.mubr.f32.mxu0 0.0
  %2925 = vmatmul.mubr.f32.gmra.mrb[0].mxu0 %v2819
  %v2926 = vpop.f32.mrb[0].mxu0
  %v2927 = vadd.f32 %v2776, %v2926
  %v2928 = vpop.f32.mrb[0].mxu0
  %2929 = vmatprep.mubr.f32.mxu0 0.0
  %2930 = vmatmul.mubr.f32.gmra.mrb[0].mxu0 %v2821
  %v2931 = vpop.f32.mrb[0].mxu0
  %v2932 = vadd.f32 %v2777, %v2931
  %v2933 = vpop.f32.mrb[0].mxu0
  %2934 = vmatprep.mubr.f32.mxu0 0.0
  %2935 = vmatmul.mubr.f32.gmra.mrb[0].mxu0 %v2823
  %v2936 = vpop.f32.mrb[0].mxu0
  %v2937 = vadd.f32 %v2778, %v2936
  %v2938 = vpop.f32.mrb[0].mxu0
  %2939 = vmatprep.mubr.f32.mxu0 0.0
  %2940 = vmatmul.mubr.f32.gmra.mrb[0].mxu0 %v2825
  %v2941 = vpop.f32.mrb[0].mxu0
  %v2942 = vadd.f32 %v2779, %v2941
  %v2943 = vpop.f32.mrb[0].mxu0
  %2944 = vmatprep.mubr.f32.mxu0 0.0
  %2945 = vmatmul.mubr.f32.gmra.mrb[0].mxu0 %v2827
  %v2946 = vpop.f32.mrb[0].mxu0
  %v2947 = vadd.f32 %v2780, %v2946
  %v2948 = vpop.f32.mrb[0].mxu0
  %2949 = vdwg.mxu0
  %v2950 = vsel %vm709, %v2912, -inf
  %2951 = vmax.xlane.f32.xlu0 %v2950
  %v2952 = vpop.xlane.xlu0 %2951
  %v2953 = vsel %vm709, %v2917, -inf
  %2954 = vmax.xlane.f32.xlu0 %v2953
  %v2955 = vpop.xlane.xlu0 %2954
  %v2956 = vsel %vm709, %v2922, -inf
  %2957 = vmax.xlane.f32.xlu0 %v2956
  %v2958 = vpop.xlane.xlu0 %2957
  %v2959 = vsel %vm709, %v2927, -inf
  %2960 = vmax.xlane.f32.xlu0 %v2959
  %v2961 = vpop.xlane.xlu0 %2960
  %v2962 = vsel %vm709, %v2932, -inf
  %2963 = vmax.xlane.f32.xlu0 %v2962
  %v2964 = vpop.xlane.xlu0 %2963
  %v2965 = vsel %vm709, %v2937, -inf
  %2966 = vmax.xlane.f32.xlu0 %v2965
  %v2967 = vpop.xlane.xlu0 %2966
  %v2968 = vsel %vm709, %v2942, -inf
  %2969 = vmax.xlane.f32.xlu0 %v2968
  %v2970 = vpop.xlane.xlu0 %2969
  %v2971 = vsel %vm709, %v2947, -inf
  %2972 = vmax.xlane.f32.xlu0 %v2971
  %v2973 = vpop.xlane.xlu0 %2972
  %v2974 = vsub.f32 %v2912, %v2952
  %v2975 = vsub.f32 %v2917, %v2955
  %v2976 = vsub.f32 %v2922, %v2958
  %v2977 = vsub.f32 %v2927, %v2961
  %v2978 = vsub.f32 %v2932, %v2964
  %v2979 = vsub.f32 %v2937, %v2967
  %v2980 = vsub.f32 %v2942, %v2970
  %v2981 = vsub.f32 %v2947, %v2973
  %v2982 = vmul.f32 %v2974, 1.442695
  %v2983 = vpow.pop %v2982
  %v2984 = vmul.f32 %v2975, 1.442695
  %v2985 = vpow.pop %v2984
  %v2986 = vmul.f32 %v2976, 1.442695
  %v2987 = vpow.pop %v2986
  %v2988 = vmul.f32 %v2977, 1.442695
  %v2989 = vpow.pop %v2988
  %v2990 = vmul.f32 %v2978, 1.442695
  %v2991 = vpow.pop %v2990
  %v2992 = vmul.f32 %v2979, 1.442695
  %v2993 = vpow.pop %v2992
  %v2994 = vmul.f32 %v2980, 1.442695
  %v2995 = vpow.pop %v2994
  %v2996 = vmul.f32 %v2981, 1.442695
  %v2997 = vpow.pop %v2996
  %2998 = vrot.lane.b32.xlu0 %v485, 56
  %v2999 = vpop.permute.xlu0 %2998
  %3000 = vrot.lane.b32.xlu0 %v490, 56
  %v3001 = vpop.permute.xlu0 %3000
  %3002 = vrot.lane.b32.xlu0 %v495, 56
  %v3003 = vpop.permute.xlu0 %3002
  %3004 = vrot.lane.b32.xlu0 %v500, 56
  %v3005 = vpop.permute.xlu0 %3004
  %3006 = vrot.lane.b32.xlu0 %v505, 56
  %v3007 = vpop.permute.xlu0 %3006
  %3008 = vrot.lane.b32.xlu0 %v510, 56
  %v3009 = vpop.permute.xlu0 %3008
  %3010 = vrot.lane.b32.xlu0 %v515, 56
  %v3011 = vpop.permute.xlu0 %3010
  %3012 = vrot.lane.b32.xlu0 %v520, 56
  %v3013 = vpop.permute.xlu0 %3012
  %v3023 = vsel %vm709, %v2983, 0
  %v3026 = vsel %vm709, %v2985, 0
  %v3029 = vsel %vm709, %v2987, 0
  %v3032 = vsel %vm709, %v2989, 0
  %v3035 = vsel %vm709, %v2991, 0
  %v3038 = vsel %vm709, %v2993, 0
  %v3041 = vsel %vm709, %v2995, 0
  %v3044 = vsel %vm709, %v2997, 0
  %3046 = vmatprep.subr.mxu0 0.0
  %3047 = vmatpush1.msra.mxu0 %v2999
  %3048 = vmatprep.subr.mxu0 0.0
  %3049 = vmatpush1.msra.mxu0 %v3001
  %3050 = vmatprep.subr.mxu0 0.0
  %3051 = vmatpush1.msra.mxu0 %v3003
  %3052 = vmatprep.subr.mxu0 0.0
  %3053 = vmatpush1.msra.mxu0 %v3005
  %3054 = vmatprep.subr.mxu0 0.0
  %3055 = vmatpush1.msra.mxu0 %v3007
  %3056 = vmatprep.subr.mxu0 0.0
  %3057 = vmatpush1.msra.mxu0 %v3009
  %3058 = vmatprep.subr.mxu0 0.0
  %3059 = vmatpush1.msra.mxu0 %v3011
  %3060 = vmatprep.subr.mxu0 0.0
  %3061 = vmatpush1.msra.mxu0 %v3013
  %3062 = vmatprep.subr.mxu0 0.0
  %3063 = vmatpush1.msra.mxu0 0.0
  %3064 = vmatprep.subr.mxu0 0.0
  %3065 = vmatpush1.msra.mxu0 0.0
  %3066 = vmatprep.subr.mxu0 0.0
  %3067 = vmatpush1.msra.mxu0 0.0
  %3068 = vmatprep.subr.mxu0 0.0
  %3069 = vmatpush1.msra.mxu0 0.0
  %3070 = vmatprep.subr.mxu0 0.0
  %3071 = vmatpush1.msra.mxu0 0.0
  %3072 = vmatprep.subr.mxu0 0.0
  %3073 = vmatpush1.msra.mxu0 0.0
  %3074 = vmatprep.subr.mxu0 0.0
  %3075 = vmatpush1.msra.mxu0 0.0
  %3076 = vmatprep.subr.mxu0 0.0
  %3077 = vmatpush1.msra.mxu0 0.0
  %3078 = vmatprep.subr.mxu0 0.0
  %3079 = vmatpush1.msra.mxu0 0.0
  %3080 = vmatprep.subr.mxu0 0.0
  %3081 = vmatpush1.msra.mxu0 0.0
  %3082 = vmatprep.subr.mxu0 0.0
  %3083 = vmatpush1.msra.mxu0 0.0
  %3084 = vmatprep.subr.mxu0 0.0
  %3085 = vmatpush1.msra.mxu0 0.0
  %3086 = vmatprep.subr.mxu0 0.0
  %3087 = vmatpush1.msra.mxu0 0.0
  %3088 = vmatprep.subr.mxu0 0.0
  %3089 = vmatpush1.msra.mxu0 0.0
  %3090 = vmatprep.subr.mxu0 0.0
  %3091 = vmatpush1.msra.mxu0 0.0
  %3092 = vmatprep.subr.mxu0 0.0
  %3093 = vmatpush1.msra.mxu0 0.0
  %3094 = vmatprep.subr.mxu0 0.0
  %3095 = vmatpush1.msra.mxu0 0.0
  %3096 = vmatprep.subr.mxu0 0.0
  %3097 = vmatpush1.msra.mxu0 0.0
  %3098 = vmatprep.subr.mxu0 0.0
  %3099 = vmatpush1.msra.mxu0 0.0
  %3100 = vmatprep.subr.mxu0 0.0
  %3101 = vmatpush1.msra.mxu0 0.0
  %3102 = vmatprep.subr.mxu0 0.0
  %3103 = vmatpush1.msra.mxu0 0.0
  %3104 = vmatprep.subr.mxu0 0.0
  %3105 = vmatpush1.msra.mxu0 0.0
  %3106 = vmatprep.subr.mxu0 0.0
  %3107 = vmatpush1.msra.mxu0 0.0
  %3108 = vmatprep.subr.mxu0 0.0
  %3109 = vmatpush1.msra.mxu0 0.0
  %3110 = vmatprep.mubr.f32.mxu0 0.0
  %3111 = vmatmul.mubr.f32.gmra.mrb[0].mxu0 %v3023
  %v3112 = vpop.f32.mrb[0].mxu0
  %v3113 = vadd.f32 0.0, %v3112
  %v3114 = vpop.f32.mrb[0].mxu0
  %3115 = vmatprep.mubr.f32.mxu0 0.0
  %3116 = vmatmul.mubr.f32.gmra.mrb[0].mxu0 %v3026
  %v3117 = vpop.f32.mrb[0].mxu0
  %v3118 = vadd.f32 0.0, %v3117
  %v3119 = vpop.f32.mrb[0].mxu0
  %3120 = vmatprep.mubr.f32.mxu0 0.0
  %3121 = vmatmul.mubr.f32.gmra.mrb[0].mxu0 %v3029
  %v3122 = vpop.f32.mrb[0].mxu0
  %v3123 = vadd.f32 0.0, %v3122
  %v3124 = vpop.f32.mrb[0].mxu0
  %3125 = vmatprep.mubr.f32.mxu0 0.0
  %3126 = vmatmul.mubr.f32.gmra.mrb[0].mxu0 %v3032
  %v3127 = vpop.f32.mrb[0].mxu0
  %v3128 = vadd.f32 0.0, %v3127
  %v3129 = vpop.f32.mrb[0].mxu0
  %3130 = vmatprep.mubr.f32.mxu0 0.0
  %3131 = vmatmul.mubr.f32.gmra.mrb[0].mxu0 %v3035
  %v3132 = vpop.f32.mrb[0].mxu0
  %v3133 = vadd.f32 0.0, %v3132
  %v3134 = vpop.f32.mrb[0].mxu0
  %3135 = vmatprep.mubr.f32.mxu0 0.0
  %3136 = vmatmul.mubr.f32.gmra.mrb[0].mxu0 %v3038
  %v3137 = vpop.f32.mrb[0].mxu0
  %v3138 = vadd.f32 0.0, %v3137
  %v3139 = vpop.f32.mrb[0].mxu0
  %3140 = vmatprep.mubr.f32.mxu0 0.0
  %3141 = vmatmul.mubr.f32.gmra.mrb[0].mxu0 %v3041
  %v3142 = vpop.f32.mrb[0].mxu0
  %v3143 = vadd.f32 0.0, %v3142
  %v3144 = vpop.f32.mrb[0].mxu0
  %3145 = vmatprep.mubr.f32.mxu0 0.0
  %3146 = vmatmul.mubr.f32.gmra.mrb[0].mxu0 %v3044
  %v3147 = vpop.f32.mrb[0].mxu0
  %v3148 = vadd.f32 0.0, %v3147
  %v3149 = vpop.f32.mrb[0].mxu0
  %3150 = vdwg.mxu0
  %v3151 = vsel %vm709, %v2983, 0.0
  %3152 = vadd.xlane.f32.xlu0 %v3151
  %v3153 = vpop.xlane.xlu0 %3152
  %v3154 = vsel %vm709, %v2985, 0.0
  %3155 = vadd.xlane.f32.xlu0 %v3154
  %v3156 = vpop.xlane.xlu0 %3155
  %v3157 = vsel %vm709, %v2987, 0.0
  %3158 = vadd.xlane.f32.xlu0 %v3157
  %v3159 = vpop.xlane.xlu0 %3158
  %v3160 = vsel %vm709, %v2989, 0.0
  %3161 = vadd.xlane.f32.xlu0 %v3160
  %v3162 = vpop.xlane.xlu0 %3161
  %v3163 = vsel %vm709, %v2991, 0.0
  %3164 = vadd.xlane.f32.xlu0 %v3163
  %v3165 = vpop.xlane.xlu0 %3164
  %v3166 = vsel %vm709, %v2993, 0.0
  %3167 = vadd.xlane.f32.xlu0 %v3166
  %v3168 = vpop.xlane.xlu0 %3167
  %v3169 = vsel %vm709, %v2995, 0.0
  %3170 = vadd.xlane.f32.xlu0 %v3169
  %v3171 = vpop.xlane.xlu0 %3170
  %v3172 = vsel %vm709, %v2997, 0.0
  %3173 = vadd.xlane.f32.xlu0 %v3172
  %v3174 = vpop.xlane.xlu0 %3173
  %v3175 = vrcp.pop %v3153
  %v3176 = vrcp.pop %v3156
  %v3177 = vrcp.pop %v3159
  %v3178 = vrcp.pop %v3162
  %v3179 = vrcp.pop %v3165
  %v3180 = vrcp.pop %v3168
  %v3181 = vrcp.pop %v3171
  %v3182 = vrcp.pop %v3174
  %v3183 = vmul.f32 %v3113, %v3175
  %v3184 = vmul.f32 %v3118, %v3176
  %v3185 = vmul.f32 %v3123, %v3177
  %v3186 = vmul.f32 %v3128, %v3178
  %v3187 = vmul.f32 %v3133, %v3179
  %v3188 = vmul.f32 %v3138, %v3180
  %v3189 = vmul.f32 %v3143, %v3181
  %v3190 = vmul.f32 %v3148, %v3182
  %3199 = vrot.lane.b32.xlu0 %v3183, 8
  %v3200 = vpop.permute.xlu0 %3199
  %3201 = vrot.lane.b32.xlu0 %v3184, 8
  %v3202 = vpop.permute.xlu0 %3201
  %3203 = vrot.lane.b32.xlu0 %v3185, 8
  %v3204 = vpop.permute.xlu0 %3203
  %3205 = vrot.lane.b32.xlu0 %v3186, 8
  %v3206 = vpop.permute.xlu0 %3205
  %3207 = vrot.lane.b32.xlu0 %v3187, 8
  %v3208 = vpop.permute.xlu0 %3207
  %3209 = vrot.lane.b32.xlu0 %v3188, 8
  %v3210 = vpop.permute.xlu0 %3209
  %3211 = vrot.lane.b32.xlu0 %v3189, 8
  %v3212 = vpop.permute.xlu0 %3211
  %3213 = vrot.lane.b32.xlu0 %v3190, 8
  %v3214 = vpop.permute.xlu0 %3213
  %3223 = vst.msk [vmem:[#allocation2 + $0x40] sm:$0xff] %vm1410, %v3200
  %3224 = vst.msk [vmem:[#allocation2 + $0x48] sm:$0xff] %vm1410, %v3202
  %3225 = vst.msk [vmem:[#allocation2 + $0x50] sm:$0xff] %vm1410, %v3204
  %3226 = vst.msk [vmem:[#allocation2 + $0x58] sm:$0xff] %vm1410, %v3206
  %3227 = vst.msk [vmem:[#allocation2 + $0x60] sm:$0xff] %vm1410, %v3208
  %3228 = vst.msk [vmem:[#allocation2 + $0x68] sm:$0xff] %vm1410, %v3210
  %3229 = vst.msk [vmem:[#allocation2 + $0x70] sm:$0xff] %vm1410, %v3212
  %3230 = vst.msk [vmem:[#allocation2 + $0x78] sm:$0xff] %vm1410, %v3214
  %v3231 = vld [vmem:[%s1419] sm:$0xff]
  %v3232 = vld [vmem:[%s1419 + $0x8] sm:$0xff]
  %v3233 = vld [vmem:[%s1419 + $0x10] sm:$0xff]
  %v3234 = vld [vmem:[%s1419 + $0x18] sm:$0xff]
  %v3235 = vld [vmem:[%s1419 + $0x20] sm:$0xff]
  %v3236 = vld [vmem:[%s1419 + $0x28] sm:$0xff]
  %v3237 = vld [vmem:[%s1419 + $0x30] sm:$0xff]
  %v3238 = vld [vmem:[%s1419 + $0x38] sm:$0xff]
  %3239 = vrot.lane.b32.xlu0 %v2339, 112
  %v3240 = vpop.permute.xlu0 %3239
  %3241 = vrot.lane.b32.xlu0 %v2340, 112
  %v3242 = vpop.permute.xlu0 %3241
  %3243 = vrot.lane.b32.xlu0 %v2341, 112
  %v3244 = vpop.permute.xlu0 %3243
  %3245 = vrot.lane.b32.xlu0 %v2342, 112
  %v3246 = vpop.permute.xlu0 %3245
  %3247 = vrot.lane.b32.xlu0 %v2343, 112
  %v3248 = vpop.permute.xlu0 %3247
  %3249 = vrot.lane.b32.xlu0 %v2344, 112
  %v3250 = vpop.permute.xlu0 %3249
  %3251 = vrot.lane.b32.xlu0 %v2345, 112
  %v3252 = vpop.permute.xlu0 %3251
  %3253 = vrot.lane.b32.xlu0 %v2346, 112
  %v3254 = vpop.permute.xlu0 %3253
  %3255 = vrot.lane.b32.xlu0 %v485, 80
  %v3256 = vpop.permute.xlu0 %3255
  %3257 = vrot.lane.b32.xlu0 %v490, 80
  %v3258 = vpop.permute.xlu0 %3257
  %3259 = vrot.lane.b32.xlu0 %v495, 80
  %v3260 = vpop.permute.xlu0 %3259
  %3261 = vrot.lane.b32.xlu0 %v500, 80
  %v3262 = vpop.permute.xlu0 %3261
  %3263 = vrot.lane.b32.xlu0 %v505, 80
  %v3264 = vpop.permute.xlu0 %3263
  %3265 = vrot.lane.b32.xlu0 %v510, 80
  %v3266 = vpop.permute.xlu0 %3265
  %3267 = vrot.lane.b32.xlu0 %v515, 80
  %v3268 = vpop.permute.xlu0 %3267
  %3269 = vrot.lane.b32.xlu0 %v520, 80
  %v3270 = vpop.permute.xlu0 %3269
  %v3271 = vsel %vm563, %v3240, 0
  %v3273 = vsel %vm563, %v3242, 0
  %v3275 = vsel %vm563, %v3244, 0
  %v3277 = vsel %vm563, %v3246, 0
  %v3279 = vsel %vm563, %v3248, 0
  %v3281 = vsel %vm563, %v3250, 0
  %v3283 = vsel %vm563, %v3252, 0
  %v3285 = vsel %vm563, %v3254, 0
  %v3287 = vsel %vm563, %v3256, 0
  %v3289 = vsel %vm563, %v3258, 0
  %v3291 = vsel %vm563, %v3260, 0
  %v3293 = vsel %vm563, %v3262, 0
  %v3295 = vsel %vm563, %v3264, 0
  %v3297 = vsel %vm563, %v3266, 0
  %v3299 = vsel %vm563, %v3268, 0
  %v3301 = vsel %vm563, %v3270, 0
  %3303 = vmatprep.subr.mxu0 0.0
  %3304 = vmatpush1.xpose.msra.mxu0 %v3287
  %3305 = vmatprep.subr.mxu0 0.0
  %3306 = vmatpush1.xpose.msra.mxu0 %v3289
  %3307 = vmatprep.subr.mxu0 0.0
  %3308 = vmatpush1.xpose.msra.mxu0 %v3291
  %3309 = vmatprep.subr.mxu0 0.0
  %3310 = vmatpush1.xpose.msra.mxu0 %v3293
  %3311 = vmatprep.subr.mxu0 0.0
  %3312 = vmatpush1.xpose.msra.mxu0 %v3295
  %3313 = vmatprep.subr.mxu0 0.0
  %3314 = vmatpush1.xpose.msra.mxu0 %v3297
  %3315 = vmatprep.subr.mxu0 0.0
  %3316 = vmatpush1.xpose.msra.mxu0 %v3299
  %3317 = vmatprep.subr.mxu0 0.0
  %3318 = vmatpush1.xpose.msra.mxu0 %v3301
  %3319 = vmatprep.subr.mxu0 0.0
  %3320 = vmatpush1.xpose.msra.mxu0 0.0
  %3321 = vmatprep.subr.mxu0 0.0
  %3322 = vmatpush1.xpose.msra.mxu0 0.0
  %3323 = vmatprep.subr.mxu0 0.0
  %3324 = vmatpush1.xpose.msra.mxu0 0.0
  %3325 = vmatprep.subr.mxu0 0.0
  %3326 = vmatpush1.xpose.msra.mxu0 0.0
  %3327 = vmatprep.subr.mxu0 0.0
  %3328 = vmatpush1.xpose.msra.mxu0 0.0
  %3329 = vmatprep.subr.mxu0 0.0
  %3330 = vmatpush1.xpose.msra.mxu0 0.0
  %3331 = vmatprep.subr.mxu0 0.0
  %3332 = vmatpush1.xpose.msra.mxu0 0.0
  %3333 = vmatprep.subr.mxu0 0.0
  %3334 = vmatpush1.xpose.msra.mxu0 0.0
  %3335 = vmatprep.subr.mxu0 0.0
  %3336 = vmatpush1.xpose.msra.mxu0 0.0
  %3337 = vmatprep.subr.mxu0 0.0
  %3338 = vmatpush1.xpose.msra.mxu0 0.0
  %3339 = vmatprep.subr.mxu0 0.0
  %3340 = vmatpush1.xpose.msra.mxu0 0.0
  %3341 = vmatprep.subr.mxu0 0.0
  %3342 = vmatpush1.xpose.msra.mxu0 0.0
  %3343 = vmatprep.subr.mxu0 0.0
  %3344 = vmatpush1.xpose.msra.mxu0 0.0
  %3345 = vmatprep.subr.mxu0 0.0
  %3346 = vmatpush1.xpose.msra.mxu0 0.0
  %3347 = vmatprep.subr.mxu0 0.0
  %3348 = vmatpush1.xpose.msra.mxu0 0.0
  %3349 = vmatprep.subr.mxu0 0.0
  %3350 = vmatpush1.xpose.msra.mxu0 0.0
  %3351 = vmatprep.subr.mxu0 0.0
  %3352 = vmatpush1.xpose.msra.mxu0 0.0
  %3353 = vmatprep.subr.mxu0 0.0
  %3354 = vmatpush1.xpose.msra.mxu0 0.0
  %3355 = vmatprep.subr.mxu0 0.0
  %3356 = vmatpush1.xpose.msra.mxu0 0.0
  %3357 = vmatprep.subr.mxu0 0.0
  %3358 = vmatpush1.xpose.msra.mxu0 0.0
  %3359 = vmatprep.subr.mxu0 0.0
  %3360 = vmatpush1.xpose.msra.mxu0 0.0
  %3361 = vmatprep.subr.mxu0 0.0
  %3362 = vmatpush1.xpose.msra.mxu0 0.0
  %3363 = vmatprep.subr.mxu0 0.0
  %3364 = vmatpush1.xpose.msra.mxu0 0.0
  %3365 = vmatprep.subr.mxu0 0.0
  %3366 = vmatpush1.xpose.msra.mxu0 0.0
  %3367 = vmatprep.mubr.f32.mxu0 0.0
  %3368 = vmatmul.mubr.f32.gmra.mrb[0].mxu0 %v3271
  %v3369 = vpop.f32.mrb[0].mxu0
  %v3370 = vadd.f32 %v3231, %v3369
  %v3371 = vpop.f32.mrb[0].mxu0
  %3372 = vmatprep.mubr.f32.mxu0 0.0
  %3373 = vmatmul.mubr.f32.gmra.mrb[0].mxu0 %v3273
  %v3374 = vpop.f32.mrb[0].mxu0
  %v3375 = vadd.f32 %v3232, %v3374
  %v3376 = vpop.f32.mrb[0].mxu0
  %3377 = vmatprep.mubr.f32.mxu0 0.0
  %3378 = vmatmul.mubr.f32.gmra.mrb[0].mxu0 %v3275
  %v3379 = vpop.f32.mrb[0].mxu0
  %v3380 = vadd.f32 %v3233, %v3379
  %v3381 = vpop.f32.mrb[0].mxu0
  %3382 = vmatprep.mubr.f32.mxu0 0.0
  %3383 = vmatmul.mubr.f32.gmra.mrb[0].mxu0 %v3277
  %v3384 = vpop.f32.mrb[0].mxu0
  %v3385 = vadd.f32 %v3234, %v3384
  %v3386 = vpop.f32.mrb[0].mxu0
  %3387 = vmatprep.mubr.f32.mxu0 0.0
  %3388 = vmatmul.mubr.f32.gmra.mrb[0].mxu0 %v3279
  %v3389 = vpop.f32.mrb[0].mxu0
  %v3390 = vadd.f32 %v3235, %v3389
  %v3391 = vpop.f32.mrb[0].mxu0
  %3392 = vmatprep.mubr.f32.mxu0 0.0
  %3393 = vmatmul.mubr.f32.gmra.mrb[0].mxu0 %v3281
  %v3394 = vpop.f32.mrb[0].mxu0
  %v3395 = vadd.f32 %v3236, %v3394
  %v3396 = vpop.f32.mrb[0].mxu0
  %3397 = vmatprep.mubr.f32.mxu0 0.0
  %3398 = vmatmul.mubr.f32.gmra.mrb[0].mxu0 %v3283
  %v3399 = vpop.f32.mrb[0].mxu0
  %v3400 = vadd.f32 %v3237, %v3399
  %v3401 = vpop.f32.mrb[0].mxu0
  %3402 = vmatprep.mubr.f32.mxu0 0.0
  %3403 = vmatmul.mubr.f32.gmra.mrb[0].mxu0 %v3285
  %v3404 = vpop.f32.mrb[0].mxu0
  %v3405 = vadd.f32 %v3238, %v3404
  %v3406 = vpop.f32.mrb[0].mxu0
  %3407 = vdwg.mxu0
  %v3408 = vsel %vm709, %v3370, -inf
  %3409 = vmax.xlane.f32.xlu0 %v3408
  %v3410 = vpop.xlane.xlu0 %3409
  %v3411 = vsel %vm709, %v3375, -inf
  %3412 = vmax.xlane.f32.xlu0 %v3411
  %v3413 = vpop.xlane.xlu0 %3412
  %v3414 = vsel %vm709, %v3380, -inf
  %3415 = vmax.xlane.f32.xlu0 %v3414
  %v3416 = vpop.xlane.xlu0 %3415
  %v3417 = vsel %vm709, %v3385, -inf
  %3418 = vmax.xlane.f32.xlu0 %v3417
  %v3419 = vpop.xlane.xlu0 %3418
  %v3420 = vsel %vm709, %v3390, -inf
  %3421 = vmax.xlane.f32.xlu0 %v3420
  %v3422 = vpop.xlane.xlu0 %3421
  %v3423 = vsel %vm709, %v3395, -inf
  %3424 = vmax.xlane.f32.xlu0 %v3423
  %v3425 = vpop.xlane.xlu0 %3424
  %v3426 = vsel %vm709, %v3400, -inf
  %3427 = vmax.xlane.f32.xlu0 %v3426
  %v3428 = vpop.xlane.xlu0 %3427
  %v3429 = vsel %vm709, %v3405, -inf
  %3430 = vmax.xlane.f32.xlu0 %v3429
  %v3431 = vpop.xlane.xlu0 %3430
  %v3432 = vsub.f32 %v3370, %v3410
  %v3433 = vsub.f32 %v3375, %v3413
  %v3434 = vsub.f32 %v3380, %v3416
  %v3435 = vsub.f32 %v3385, %v3419
  %v3436 = vsub.f32 %v3390, %v3422
  %v3437 = vsub.f32 %v3395, %v3425
  %v3438 = vsub.f32 %v3400, %v3428
  %v3439 = vsub.f32 %v3405, %v3431
  %v3440 = vmul.f32 %v3432, 1.442695
  %v3441 = vpow.pop %v3440
  %v3442 = vmul.f32 %v3433, 1.442695
  %v3443 = vpow.pop %v3442
  %v3444 = vmul.f32 %v3434, 1.442695
  %v3445 = vpow.pop %v3444
  %v3446 = vmul.f32 %v3435, 1.442695
  %v3447 = vpow.pop %v3446
  %v3448 = vmul.f32 %v3436, 1.442695
  %v3449 = vpow.pop %v3448
  %v3450 = vmul.f32 %v3437, 1.442695
  %v3451 = vpow.pop %v3450
  %v3452 = vmul.f32 %v3438, 1.442695
  %v3453 = vpow.pop %v3452
  %v3454 = vmul.f32 %v3439, 1.442695
  %v3455 = vpow.pop %v3454
  %3456 = vrot.lane.b32.xlu0 %v485, 48
  %v3457 = vpop.permute.xlu0 %3456
  %3458 = vrot.lane.b32.xlu0 %v490, 48
  %v3459 = vpop.permute.xlu0 %3458
  %3460 = vrot.lane.b32.xlu0 %v495, 48
  %v3461 = vpop.permute.xlu0 %3460
  %3462 = vrot.lane.b32.xlu0 %v500, 48
  %v3463 = vpop.permute.xlu0 %3462
  %3464 = vrot.lane.b32.xlu0 %v505, 48
  %v3465 = vpop.permute.xlu0 %3464
  %3466 = vrot.lane.b32.xlu0 %v510, 48
  %v3467 = vpop.permute.xlu0 %3466
  %3468 = vrot.lane.b32.xlu0 %v515, 48
  %v3469 = vpop.permute.xlu0 %3468
  %3470 = vrot.lane.b32.xlu0 %v520, 48
  %v3471 = vpop.permute.xlu0 %3470
  %v3481 = vsel %vm709, %v3441, 0
  %v3484 = vsel %vm709, %v3443, 0
  %v3487 = vsel %vm709, %v3445, 0
  %v3490 = vsel %vm709, %v3447, 0
  %v3493 = vsel %vm709, %v3449, 0
  %v3496 = vsel %vm709, %v3451, 0
  %v3499 = vsel %vm709, %v3453, 0
  %v3502 = vsel %vm709, %v3455, 0
  %3504 = vmatprep.subr.mxu0 0.0
  %3505 = vmatpush1.msra.mxu0 %v3457
  %3506 = vmatprep.subr.mxu0 0.0
  %3507 = vmatpush1.msra.mxu0 %v3459
  %3508 = vmatprep.subr.mxu0 0.0
  %3509 = vmatpush1.msra.mxu0 %v3461
  %3510 = vmatprep.subr.mxu0 0.0
  %3511 = vmatpush1.msra.mxu0 %v3463
  %3512 = vmatprep.subr.mxu0 0.0
  %3513 = vmatpush1.msra.mxu0 %v3465
  %3514 = vmatprep.subr.mxu0 0.0
  %3515 = vmatpush1.msra.mxu0 %v3467
  %3516 = vmatprep.subr.mxu0 0.0
  %3517 = vmatpush1.msra.mxu0 %v3469
  %3518 = vmatprep.subr.mxu0 0.0
  %3519 = vmatpush1.msra.mxu0 %v3471
  %3520 = vmatprep.subr.mxu0 0.0
  %3521 = vmatpush1.msra.mxu0 0.0
  %3522 = vmatprep.subr.mxu0 0.0
  %3523 = vmatpush1.msra.mxu0 0.0
  %3524 = vmatprep.subr.mxu0 0.0
  %3525 = vmatpush1.msra.mxu0 0.0
  %3526 = vmatprep.subr.mxu0 0.0
  %3527 = vmatpush1.msra.mxu0 0.0
  %3528 = vmatprep.subr.mxu0 0.0
  %3529 = vmatpush1.msra.mxu0 0.0
  %3530 = vmatprep.subr.mxu0 0.0
  %3531 = vmatpush1.msra.mxu0 0.0
  %3532 = vmatprep.subr.mxu0 0.0
  %3533 = vmatpush1.msra.mxu0 0.0
  %3534 = vmatprep.subr.mxu0 0.0
  %3535 = vmatpush1.msra.mxu0 0.0
  %3536 = vmatprep.subr.mxu0 0.0
  %3537 = vmatpush1.msra.mxu0 0.0
  %3538 = vmatprep.subr.mxu0 0.0
  %3539 = vmatpush1.msra.mxu0 0.0
  %3540 = vmatprep.subr.mxu0 0.0
  %3541 = vmatpush1.msra.mxu0 0.0
  %3542 = vmatprep.subr.mxu0 0.0
  %3543 = vmatpush1.msra.mxu0 0.0
  %3544 = vmatprep.subr.mxu0 0.0
  %3545 = vmatpush1.msra.mxu0 0.0
  %3546 = vmatprep.subr.mxu0 0.0
  %3547 = vmatpush1.msra.mxu0 0.0
  %3548 = vmatprep.subr.mxu0 0.0
  %3549 = vmatpush1.msra.mxu0 0.0
  %3550 = vmatprep.subr.mxu0 0.0
  %3551 = vmatpush1.msra.mxu0 0.0
  %3552 = vmatprep.subr.mxu0 0.0
  %3553 = vmatpush1.msra.mxu0 0.0
  %3554 = vmatprep.subr.mxu0 0.0
  %3555 = vmatpush1.msra.mxu0 0.0
  %3556 = vmatprep.subr.mxu0 0.0
  %3557 = vmatpush1.msra.mxu0 0.0
  %3558 = vmatprep.subr.mxu0 0.0
  %3559 = vmatpush1.msra.mxu0 0.0
  %3560 = vmatprep.subr.mxu0 0.0
  %3561 = vmatpush1.msra.mxu0 0.0
  %3562 = vmatprep.subr.mxu0 0.0
  %3563 = vmatpush1.msra.mxu0 0.0
  %3564 = vmatprep.subr.mxu0 0.0
  %3565 = vmatpush1.msra.mxu0 0.0
  %3566 = vmatprep.subr.mxu0 0.0
  %3567 = vmatpush1.msra.mxu0 0.0
  %3568 = vmatprep.mubr.f32.mxu0 0.0
  %3569 = vmatmul.mubr.f32.gmra.mrb[0].mxu0 %v3481
  %v3570 = vpop.f32.mrb[0].mxu0
  %v3571 = vadd.f32 0.0, %v3570
  %v3572 = vpop.f32.mrb[0].mxu0
  %3573 = vmatprep.mubr.f32.mxu0 0.0
  %3574 = vmatmul.mubr.f32.gmra.mrb[0].mxu0 %v3484
  %v3575 = vpop.f32.mrb[0].mxu0
  %v3576 = vadd.f32 0.0, %v3575
  %v3577 = vpop.f32.mrb[0].mxu0
  %3578 = vmatprep.mubr.f32.mxu0 0.0
  %3579 = vmatmul.mubr.f32.gmra.mrb[0].mxu0 %v3487
  %v3580 = vpop.f32.mrb[0].mxu0
  %v3581 = vadd.f32 0.0, %v3580
  %v3582 = vpop.f32.mrb[0].mxu0
  %3583 = vmatprep.mubr.f32.mxu0 0.0
  %3584 = vmatmul.mubr.f32.gmra.mrb[0].mxu0 %v3490
  %v3585 = vpop.f32.mrb[0].mxu0
  %v3586 = vadd.f32 0.0, %v3585
  %v3587 = vpop.f32.mrb[0].mxu0
  %3588 = vmatprep.mubr.f32.mxu0 0.0
  %3589 = vmatmul.mubr.f32.gmra.mrb[0].mxu0 %v3493
  %v3590 = vpop.f32.mrb[0].mxu0
  %v3591 = vadd.f32 0.0, %v3590
  %v3592 = vpop.f32.mrb[0].mxu0
  %3593 = vmatprep.mubr.f32.mxu0 0.0
  %3594 = vmatmul.mubr.f32.gmra.mrb[0].mxu0 %v3496
  %v3595 = vpop.f32.mrb[0].mxu0
  %v3596 = vadd.f32 0.0, %v3595
  %v3597 = vpop.f32.mrb[0].mxu0
  %3598 = vmatprep.mubr.f32.mxu0 0.0
  %3599 = vmatmul.mubr.f32.gmra.mrb[0].mxu0 %v3499
  %v3600 = vpop.f32.mrb[0].mxu0
  %v3601 = vadd.f32 0.0, %v3600
  %v3602 = vpop.f32.mrb[0].mxu0
  %3603 = vmatprep.mubr.f32.mxu0 0.0
  %3604 = vmatmul.mubr.f32.gmra.mrb[0].mxu0 %v3502
  %v3605 = vpop.f32.mrb[0].mxu0
  %v3606 = vadd.f32 0.0, %v3605
  %v3607 = vpop.f32.mrb[0].mxu0
  %3608 = vdwg.mxu0
  %v3609 = vsel %vm709, %v3441, 0.0
  %3610 = vadd.xlane.f32.xlu0 %v3609
  %v3611 = vpop.xlane.xlu0 %3610
  %v3612 = vsel %vm709, %v3443, 0.0
  %3613 = vadd.xlane.f32.xlu0 %v3612
  %v3614 = vpop.xlane.xlu0 %3613
  %v3615 = vsel %vm709, %v3445, 0.0
  %3616 = vadd.xlane.f32.xlu0 %v3615
  %v3617 = vpop.xlane.xlu0 %3616
  %v3618 = vsel %vm709, %v3447, 0.0
  %3619 = vadd.xlane.f32.xlu0 %v3618
  %v3620 = vpop.xlane.xlu0 %3619
  %v3621 = vsel %vm709, %v3449, 0.0
  %3622 = vadd.xlane.f32.xlu0 %v3621
  %v3623 = vpop.xlane.xlu0 %3622
  %v3624 = vsel %vm709, %v3451, 0.0
  %3625 = vadd.xlane.f32.xlu0 %v3624
  %v3626 = vpop.xlane.xlu0 %3625
  %v3627 = vsel %vm709, %v3453, 0.0
  %3628 = vadd.xlane.f32.xlu0 %v3627
  %v3629 = vpop.xlane.xlu0 %3628
  %v3630 = vsel %vm709, %v3455, 0.0
  %3631 = vadd.xlane.f32.xlu0 %v3630
  %v3632 = vpop.xlane.xlu0 %3631
  %v3633 = vrcp.pop %v3611
  %v3634 = vrcp.pop %v3614
  %v3635 = vrcp.pop %v3617
  %v3636 = vrcp.pop %v3620
  %v3637 = vrcp.pop %v3623
  %v3638 = vrcp.pop %v3626
  %v3639 = vrcp.pop %v3629
  %v3640 = vrcp.pop %v3632
  %v3641 = vmul.f32 %v3571, %v3633
  %v3642 = vmul.f32 %v3576, %v3634
  %v3643 = vmul.f32 %v3581, %v3635
  %v3644 = vmul.f32 %v3586, %v3636
  %v3645 = vmul.f32 %v3591, %v3637
  %v3646 = vmul.f32 %v3596, %v3638
  %v3647 = vmul.f32 %v3601, %v3639
  %v3648 = vmul.f32 %v3606, %v3640
  %3657 = vrot.lane.b32.xlu0 %v3641, 16
  %v3658 = vpop.permute.xlu0 %3657
  %3659 = vrot.lane.b32.xlu0 %v3642, 16
  %v3660 = vpop.permute.xlu0 %3659
  %3661 = vrot.lane.b32.xlu0 %v3643, 16
  %v3662 = vpop.permute.xlu0 %3661
  %3663 = vrot.lane.b32.xlu0 %v3644, 16
  %v3664 = vpop.permute.xlu0 %3663
  %3665 = vrot.lane.b32.xlu0 %v3645, 16
  %v3666 = vpop.permute.xlu0 %3665
  %3667 = vrot.lane.b32.xlu0 %v3646, 16
  %v3668 = vpop.permute.xlu0 %3667
  %3669 = vrot.lane.b32.xlu0 %v3647, 16
  %v3670 = vpop.permute.xlu0 %3669
  %3671 = vrot.lane.b32.xlu0 %v3648, 16
  %v3672 = vpop.permute.xlu0 %3671
  %3681 = vst.msk [vmem:[#allocation2 + $0x40] sm:$0xff] %vm1870, %v3658
  %3682 = vst.msk [vmem:[#allocation2 + $0x48] sm:$0xff] %vm1870, %v3660
  %3683 = vst.msk [vmem:[#allocation2 + $0x50] sm:$0xff] %vm1870, %v3662
  %3684 = vst.msk [vmem:[#allocation2 + $0x58] sm:$0xff] %vm1870, %v3664
  %3685 = vst.msk [vmem:[#allocation2 + $0x60] sm:$0xff] %vm1870, %v3666
  %3686 = vst.msk [vmem:[#allocation2 + $0x68] sm:$0xff] %vm1870, %v3668
  %3687 = vst.msk [vmem:[#allocation2 + $0x70] sm:$0xff] %vm1870, %v3670
  %3688 = vst.msk [vmem:[#allocation2 + $0x78] sm:$0xff] %vm1870, %v3672
  %v3689 = vld [vmem:[%s1879] sm:$0xff]
  %v3690 = vld [vmem:[%s1879 + $0x8] sm:$0xff]
  %v3691 = vld [vmem:[%s1879 + $0x10] sm:$0xff]
  %v3692 = vld [vmem:[%s1879 + $0x18] sm:$0xff]
  %v3693 = vld [vmem:[%s1879 + $0x20] sm:$0xff]
  %v3694 = vld [vmem:[%s1879 + $0x28] sm:$0xff]
  %v3695 = vld [vmem:[%s1879 + $0x30] sm:$0xff]
  %v3696 = vld [vmem:[%s1879 + $0x38] sm:$0xff]
  %3697 = vrot.lane.b32.xlu0 %v2339, 104
  %v3698 = vpop.permute.xlu0 %3697
  %3699 = vrot.lane.b32.xlu0 %v2340, 104
  %v3700 = vpop.permute.xlu0 %3699
  %3701 = vrot.lane.b32.xlu0 %v2341, 104
  %v3702 = vpop.permute.xlu0 %3701
  %3703 = vrot.lane.b32.xlu0 %v2342, 104
  %v3704 = vpop.permute.xlu0 %3703
  %3705 = vrot.lane.b32.xlu0 %v2343, 104
  %v3706 = vpop.permute.xlu0 %3705
  %3707 = vrot.lane.b32.xlu0 %v2344, 104
  %v3708 = vpop.permute.xlu0 %3707
  %3709 = vrot.lane.b32.xlu0 %v2345, 104
  %v3710 = vpop.permute.xlu0 %3709
  %3711 = vrot.lane.b32.xlu0 %v2346, 104
  %v3712 = vpop.permute.xlu0 %3711
  %3713 = vrot.lane.b32.xlu0 %v485, 72
  %v3714 = vpop.permute.xlu0 %3713
  %3715 = vrot.lane.b32.xlu0 %v490, 72
  %v3716 = vpop.permute.xlu0 %3715
  %3717 = vrot.lane.b32.xlu0 %v495, 72
  %v3718 = vpop.permute.xlu0 %3717
  %3719 = vrot.lane.b32.xlu0 %v500, 72
  %v3720 = vpop.permute.xlu0 %3719
  %3721 = vrot.lane.b32.xlu0 %v505, 72
  %v3722 = vpop.permute.xlu0 %3721
  %3723 = vrot.lane.b32.xlu0 %v510, 72
  %v3724 = vpop.permute.xlu0 %3723
  %3725 = vrot.lane.b32.xlu0 %v515, 72
  %v3726 = vpop.permute.xlu0 %3725
  %3727 = vrot.lane.b32.xlu0 %v520, 72
  %v3728 = vpop.permute.xlu0 %3727
  %v3729 = vsel %vm563, %v3698, 0
  %v3731 = vsel %vm563, %v3700, 0
  %v3733 = vsel %vm563, %v3702, 0
  %v3735 = vsel %vm563, %v3704, 0
  %v3737 = vsel %vm563, %v3706, 0
  %v3739 = vsel %vm563, %v3708, 0
  %v3741 = vsel %vm563, %v3710, 0
  %v3743 = vsel %vm563, %v3712, 0
  %v3745 = vsel %vm563, %v3714, 0
  %v3747 = vsel %vm563, %v3716, 0
  %v3749 = vsel %vm563, %v3718, 0
  %v3751 = vsel %vm563, %v3720, 0
  %v3753 = vsel %vm563, %v3722, 0
  %v3755 = vsel %vm563, %v3724, 0
  %v3757 = vsel %vm563, %v3726, 0
  %v3759 = vsel %vm563, %v3728, 0
  %3761 = vmatprep.subr.mxu0 0.0
  %3762 = vmatpush1.xpose.msra.mxu0 %v3745
  %3763 = vmatprep.subr.mxu0 0.0
  %3764 = vmatpush1.xpose.msra.mxu0 %v3747
  %3765 = vmatprep.subr.mxu0 0.0
  %3766 = vmatpush1.xpose.msra.mxu0 %v3749
  %3767 = vmatprep.subr.mxu0 0.0
  %3768 = vmatpush1.xpose.msra.mxu0 %v3751
  %3769 = vmatprep.subr.mxu0 0.0
  %3770 = vmatpush1.xpose.msra.mxu0 %v3753
  %3771 = vmatprep.subr.mxu0 0.0
  %3772 = vmatpush1.xpose.msra.mxu0 %v3755
  %3773 = vmatprep.subr.mxu0 0.0
  %3774 = vmatpush1.xpose.msra.mxu0 %v3757
  %3775 = vmatprep.subr.mxu0 0.0
  %3776 = vmatpush1.xpose.msra.mxu0 %v3759
  %3777 = vmatprep.subr.mxu0 0.0
  %3778 = vmatpush1.xpose.msra.mxu0 0.0
  %3779 = vmatprep.subr.mxu0 0.0
  %3780 = vmatpush1.xpose.msra.mxu0 0.0
  %3781 = vmatprep.subr.mxu0 0.0
  %3782 = vmatpush1.xpose.msra.mxu0 0.0
  %3783 = vmatprep.subr.mxu0 0.0
  %3784 = vmatpush1.xpose.msra.mxu0 0.0
  %3785 = vmatprep.subr.mxu0 0.0
  %3786 = vmatpush1.xpose.msra.mxu0 0.0
  %3787 = vmatprep.subr.mxu0 0.0
  %3788 = vmatpush1.xpose.msra.mxu0 0.0
  %3789 = vmatprep.subr.mxu0 0.0
  %3790 = vmatpush1.xpose.msra.mxu0 0.0
  %3791 = vmatprep.subr.mxu0 0.0
  %3792 = vmatpush1.xpose.msra.mxu0 0.0
  %3793 = vmatprep.subr.mxu0 0.0
  %3794 = vmatpush1.xpose.msra.mxu0 0.0
  %3795 = vmatprep.subr.mxu0 0.0
  %3796 = vmatpush1.xpose.msra.mxu0 0.0
  %3797 = vmatprep.subr.mxu0 0.0
  %3798 = vmatpush1.xpose.msra.mxu0 0.0
  %3799 = vmatprep.subr.mxu0 0.0
  %3800 = vmatpush1.xpose.msra.mxu0 0.0
  %3801 = vmatprep.subr.mxu0 0.0
  %3802 = vmatpush1.xpose.msra.mxu0 0.0
  %3803 = vmatprep.subr.mxu0 0.0
  %3804 = vmatpush1.xpose.msra.mxu0 0.0
  %3805 = vmatprep.subr.mxu0 0.0
  %3806 = vmatpush1.xpose.msra.mxu0 0.0
  %3807 = vmatprep.subr.mxu0 0.0
  %3808 = vmatpush1.xpose.msra.mxu0 0.0
  %3809 = vmatprep.subr.mxu0 0.0
  %3810 = vmatpush1.xpose.msra.mxu0 0.0
  %3811 = vmatprep.subr.mxu0 0.0
  %3812 = vmatpush1.xpose.msra.mxu0 0.0
  %3813 = vmatprep.subr.mxu0 0.0
  %3814 = vmatpush1.xpose.msra.mxu0 0.0
  %3815 = vmatprep.subr.mxu0 0.0
  %3816 = vmatpush1.xpose.msra.mxu0 0.0
  %3817 = vmatprep.subr.mxu0 0.0
  %3818 = vmatpush1.xpose.msra.mxu0 0.0
  %3819 = vmatprep.subr.mxu0 0.0
  %3820 = vmatpush1.xpose.msra.mxu0 0.0
  %3821 = vmatprep.subr.mxu0 0.0
  %3822 = vmatpush1.xpose.msra.mxu0 0.0
  %3823 = vmatprep.subr.mxu0 0.0
  %3824 = vmatpush1.xpose.msra.mxu0 0.0
  %3825 = vmatprep.mubr.f32.mxu0 0.0
  %3826 = vmatmul.mubr.f32.gmra.mrb[0].mxu0 %v3729
  %v3827 = vpop.f32.mrb[0].mxu0
  %v3828 = vadd.f32 %v3689, %v3827
  %v3829 = vpop.f32.mrb[0].mxu0
  %3830 = vmatprep.mubr.f32.mxu0 0.0
  %3831 = vmatmul.mubr.f32.gmra.mrb[0].mxu0 %v3731
  %v3832 = vpop.f32.mrb[0].mxu0
  %v3833 = vadd.f32 %v3690, %v3832
  %v3834 = vpop.f32.mrb[0].mxu0
  %3835 = vmatprep.mubr.f32.mxu0 0.0
  %3836 = vmatmul.mubr.f32.gmra.mrb[0].mxu0 %v3733
  %v3837 = vpop.f32.mrb[0].mxu0
  %v3838 = vadd.f32 %v3691, %v3837
  %v3839 = vpop.f32.mrb[0].mxu0
  %3840 = vmatprep.mubr.f32.mxu0 0.0
  %3841 = vmatmul.mubr.f32.gmra.mrb[0].mxu0 %v3735
  %v3842 = vpop.f32.mrb[0].mxu0
  %v3843 = vadd.f32 %v3692, %v3842
  %v3844 = vpop.f32.mrb[0].mxu0
  %3845 = vmatprep.mubr.f32.mxu0 0.0
  %3846 = vmatmul.mubr.f32.gmra.mrb[0].mxu0 %v3737
  %v3847 = vpop.f32.mrb[0].mxu0
  %v3848 = vadd.f32 %v3693, %v3847
  %v3849 = vpop.f32.mrb[0].mxu0
  %3850 = vmatprep.mubr.f32.mxu0 0.0
  %3851 = vmatmul.mubr.f32.gmra.mrb[0].mxu0 %v3739
  %v3852 = vpop.f32.mrb[0].mxu0
  %v3853 = vadd.f32 %v3694, %v3852
  %v3854 = vpop.f32.mrb[0].mxu0
  %3855 = vmatprep.mubr.f32.mxu0 0.0
  %3856 = vmatmul.mubr.f32.gmra.mrb[0].mxu0 %v3741
  %v3857 = vpop.f32.mrb[0].mxu0
  %v3858 = vadd.f32 %v3695, %v3857
  %v3859 = vpop.f32.mrb[0].mxu0
  %3860 = vmatprep.mubr.f32.mxu0 0.0
  %3861 = vmatmul.mubr.f32.gmra.mrb[0].mxu0 %v3743
  %v3862 = vpop.f32.mrb[0].mxu0
  %v3863 = vadd.f32 %v3696, %v3862
  %v3864 = vpop.f32.mrb[0].mxu0
  %3865 = vdwg.mxu0
  %v3866 = vsel %vm709, %v3828, -inf
  %3867 = vmax.xlane.f32.xlu0 %v3866
  %v3868 = vpop.xlane.xlu0 %3867
  %v3869 = vsel %vm709, %v3833, -inf
  %3870 = vmax.xlane.f32.xlu0 %v3869
  %v3871 = vpop.xlane.xlu0 %3870
  %v3872 = vsel %vm709, %v3838, -inf
  %3873 = vmax.xlane.f32.xlu0 %v3872
  %v3874 = vpop.xlane.xlu0 %3873
  %v3875 = vsel %vm709, %v3843, -inf
  %3876 = vmax.xlane.f32.xlu0 %v3875
  %v3877 = vpop.xlane.xlu0 %3876
  %v3878 = vsel %vm709, %v3848, -inf
  %3879 = vmax.xlane.f32.xlu0 %v3878
  %v3880 = vpop.xlane.xlu0 %3879
  %v3881 = vsel %vm709, %v3853, -inf
  %3882 = vmax.xlane.f32.xlu0 %v3881
  %v3883 = vpop.xlane.xlu0 %3882
  %v3884 = vsel %vm709, %v3858, -inf
  %3885 = vmax.xlane.f32.xlu0 %v3884
  %v3886 = vpop.xlane.xlu0 %3885
  %v3887 = vsel %vm709, %v3863, -inf
  %3888 = vmax.xlane.f32.xlu0 %v3887
  %v3889 = vpop.xlane.xlu0 %3888
  %v3890 = vsub.f32 %v3828, %v3868
  %v3891 = vsub.f32 %v3833, %v3871
  %v3892 = vsub.f32 %v3838, %v3874
  %v3893 = vsub.f32 %v3843, %v3877
  %v3894 = vsub.f32 %v3848, %v3880
  %v3895 = vsub.f32 %v3853, %v3883
  %v3896 = vsub.f32 %v3858, %v3886
  %v3897 = vsub.f32 %v3863, %v3889
  %v3898 = vmul.f32 %v3890, 1.442695
  %v3899 = vpow.pop %v3898
  %v3900 = vmul.f32 %v3891, 1.442695
  %v3901 = vpow.pop %v3900
  %v3902 = vmul.f32 %v3892, 1.442695
  %v3903 = vpow.pop %v3902
  %v3904 = vmul.f32 %v3893, 1.442695
  %v3905 = vpow.pop %v3904
  %v3906 = vmul.f32 %v3894, 1.442695
  %v3907 = vpow.pop %v3906
  %v3908 = vmul.f32 %v3895, 1.442695
  %v3909 = vpow.pop %v3908
  %v3910 = vmul.f32 %v3896, 1.442695
  %v3911 = vpow.pop %v3910
  %v3912 = vmul.f32 %v3897, 1.442695
  %v3913 = vpow.pop %v3912
  %3914 = vrot.lane.b32.xlu0 %v485, 40
  %v3915 = vpop.permute.xlu0 %3914
  %3916 = vrot.lane.b32.xlu0 %v490, 40
  %v3917 = vpop.permute.xlu0 %3916
  %3918 = vrot.lane.b32.xlu0 %v495, 40
  %v3919 = vpop.permute.xlu0 %3918
  %3920 = vrot.lane.b32.xlu0 %v500, 40
  %v3921 = vpop.permute.xlu0 %3920
  %3922 = vrot.lane.b32.xlu0 %v505, 40
  %v3923 = vpop.permute.xlu0 %3922
  %3924 = vrot.lane.b32.xlu0 %v510, 40
  %v3925 = vpop.permute.xlu0 %3924
  %3926 = vrot.lane.b32.xlu0 %v515, 40
  %v3927 = vpop.permute.xlu0 %3926
  %3928 = vrot.lane.b32.xlu0 %v520, 40
  %v3929 = vpop.permute.xlu0 %3928
  %v3939 = vsel %vm709, %v3899, 0
  %v3942 = vsel %vm709, %v3901, 0
  %v3945 = vsel %vm709, %v3903, 0
  %v3948 = vsel %vm709, %v3905, 0
  %v3951 = vsel %vm709, %v3907, 0
  %v3954 = vsel %vm709, %v3909, 0
  %v3957 = vsel %vm709, %v3911, 0
  %v3960 = vsel %vm709, %v3913, 0
  %3962 = vmatprep.subr.mxu0 0.0
  %3963 = vmatpush1.msra.mxu0 %v3915
  %3964 = vmatprep.subr.mxu0 0.0
  %3965 = vmatpush1.msra.mxu0 %v3917
  %3966 = vmatprep.subr.mxu0 0.0
  %3967 = vmatpush1.msra.mxu0 %v3919
  %3968 = vmatprep.subr.mxu0 0.0
  %3969 = vmatpush1.msra.mxu0 %v3921
  %3970 = vmatprep.subr.mxu0 0.0
  %3971 = vmatpush1.msra.mxu0 %v3923
  %3972 = vmatprep.subr.mxu0 0.0
  %3973 = vmatpush1.msra.mxu0 %v3925
  %3974 = vmatprep.subr.mxu0 0.0
  %3975 = vmatpush1.msra.mxu0 %v3927
  %3976 = vmatprep.subr.mxu0 0.0
  %3977 = vmatpush1.msra.mxu0 %v3929
  %3978 = vmatprep.subr.mxu0 0.0
  %3979 = vmatpush1.msra.mxu0 0.0
  %3980 = vmatprep.subr.mxu0 0.0
  %3981 = vmatpush1.msra.mxu0 0.0
  %3982 = vmatprep.subr.mxu0 0.0
  %3983 = vmatpush1.msra.mxu0 0.0
  %3984 = vmatprep.subr.mxu0 0.0
  %3985 = vmatpush1.msra.mxu0 0.0
  %3986 = vmatprep.subr.mxu0 0.0
  %3987 = vmatpush1.msra.mxu0 0.0
  %3988 = vmatprep.subr.mxu0 0.0
  %3989 = vmatpush1.msra.mxu0 0.0
  %3990 = vmatprep.subr.mxu0 0.0
  %3991 = vmatpush1.msra.mxu0 0.0
  %3992 = vmatprep.subr.mxu0 0.0
  %3993 = vmatpush1.msra.mxu0 0.0
  %3994 = vmatprep.subr.mxu0 0.0
  %3995 = vmatpush1.msra.mxu0 0.0
  %3996 = vmatprep.subr.mxu0 0.0
  %3997 = vmatpush1.msra.mxu0 0.0
  %3998 = vmatprep.subr.mxu0 0.0
  %3999 = vmatpush1.msra.mxu0 0.0
  %4000 = vmatprep.subr.mxu0 0.0
  %4001 = vmatpush1.msra.mxu0 0.0
  %4002 = vmatprep.subr.mxu0 0.0
  %4003 = vmatpush1.msra.mxu0 0.0
  %4004 = vmatprep.subr.mxu0 0.0
  %4005 = vmatpush1.msra.mxu0 0.0
  %4006 = vmatprep.subr.mxu0 0.0
  %4007 = vmatpush1.msra.mxu0 0.0
  %4008 = vmatprep.subr.mxu0 0.0
  %4009 = vmatpush1.msra.mxu0 0.0
  %4010 = vmatprep.subr.mxu0 0.0
  %4011 = vmatpush1.msra.mxu0 0.0
  %4012 = vmatprep.subr.mxu0 0.0
  %4013 = vmatpush1.msra.mxu0 0.0
  %4014 = vmatprep.subr.mxu0 0.0
  %4015 = vmatpush1.msra.mxu0 0.0
  %4016 = vmatprep.subr.mxu0 0.0
  %4017 = vmatpush1.msra.mxu0 0.0
  %4018 = vmatprep.subr.mxu0 0.0
  %4019 = vmatpush1.msra.mxu0 0.0
  %4020 = vmatprep.subr.mxu0 0.0
  %4021 = vmatpush1.msra.mxu0 0.0
  %4022 = vmatprep.subr.mxu0 0.0
  %4023 = vmatpush1.msra.mxu0 0.0
  %4024 = vmatprep.subr.mxu0 0.0
  %4025 = vmatpush1.msra.mxu0 0.0
  %4026 = vmatprep.mubr.f32.mxu0 0.0
  %4027 = vmatmul.mubr.f32.gmra.mrb[0].mxu0 %v3939
  %v4028 = vpop.f32.mrb[0].mxu0
  %v4029 = vadd.f32 0.0, %v4028
  %v4030 = vpop.f32.mrb[0].mxu0
  %4031 = vmatprep.mubr.f32.mxu0 0.0
  %4032 = vmatmul.mubr.f32.gmra.mrb[0].mxu0 %v3942
  %v4033 = vpop.f32.mrb[0].mxu0
  %v4034 = vadd.f32 0.0, %v4033
  %v4035 = vpop.f32.mrb[0].mxu0
  %4036 = vmatprep.mubr.f32.mxu0 0.0
  %4037 = vmatmul.mubr.f32.gmra.mrb[0].mxu0 %v3945
  %v4038 = vpop.f32.mrb[0].mxu0
  %v4039 = vadd.f32 0.0, %v4038
  %v4040 = vpop.f32.mrb[0].mxu0
  %4041 = vmatprep.mubr.f32.mxu0 0.0
  %4042 = vmatmul.mubr.f32.gmra.mrb[0].mxu0 %v3948
  %v4043 = vpop.f32.mrb[0].mxu0
  %v4044 = vadd.f32 0.0, %v4043
  %v4045 = vpop.f32.mrb[0].mxu0
  %4046 = vmatprep.mubr.f32.mxu0 0.0
  %4047 = vmatmul.mubr.f32.gmra.mrb[0].mxu0 %v3951
  %v4048 = vpop.f32.mrb[0].mxu0
  %v4049 = vadd.f32 0.0, %v4048
  %v4050 = vpop.f32.mrb[0].mxu0
  %4051 = vmatprep.mubr.f32.mxu0 0.0
  %4052 = vmatmul.mubr.f32.gmra.mrb[0].mxu0 %v3954
  %v4053 = vpop.f32.mrb[0].mxu0
  %v4054 = vadd.f32 0.0, %v4053
  %v4055 = vpop.f32.mrb[0].mxu0
  %4056 = vmatprep.mubr.f32.mxu0 0.0
  %4057 = vmatmul.mubr.f32.gmra.mrb[0].mxu0 %v3957
  %v4058 = vpop.f32.mrb[0].mxu0
  %v4059 = vadd.f32 0.0, %v4058
  %v4060 = vpop.f32.mrb[0].mxu0
  %4061 = vmatprep.mubr.f32.mxu0 0.0
  %4062 = vmatmul.mubr.f32.gmra.mrb[0].mxu0 %v3960
  %v4063 = vpop.f32.mrb[0].mxu0
  %v4064 = vadd.f32 0.0, %v4063
  %v4065 = vpop.f32.mrb[0].mxu0
  %4066 = vdwg.mxu0
  %v4067 = vsel %vm709, %v3899, 0.0
  %4068 = vadd.xlane.f32.xlu0 %v4067
  %v4069 = vpop.xlane.xlu0 %4068
  %v4070 = vsel %vm709, %v3901, 0.0
  %4071 = vadd.xlane.f32.xlu0 %v4070
  %v4072 = vpop.xlane.xlu0 %4071
  %v4073 = vsel %vm709, %v3903, 0.0
  %4074 = vadd.xlane.f32.xlu0 %v4073
  %v4075 = vpop.xlane.xlu0 %4074
  %v4076 = vsel %vm709, %v3905, 0.0
  %4077 = vadd.xlane.f32.xlu0 %v4076
  %v4078 = vpop.xlane.xlu0 %4077
  %v4079 = vsel %vm709, %v3907, 0.0
  %4080 = vadd.xlane.f32.xlu0 %v4079
  %v4081 = vpop.xlane.xlu0 %4080
  %v4082 = vsel %vm709, %v3909, 0.0
  %4083 = vadd.xlane.f32.xlu0 %v4082
  %v4084 = vpop.xlane.xlu0 %4083
  %v4085 = vsel %vm709, %v3911, 0.0
  %4086 = vadd.xlane.f32.xlu0 %v4085
  %v4087 = vpop.xlane.xlu0 %4086
  %v4088 = vsel %vm709, %v3913, 0.0
  %4089 = vadd.xlane.f32.xlu0 %v4088
  %v4090 = vpop.xlane.xlu0 %4089
  %v4091 = vrcp.pop %v4069
  %v4092 = vrcp.pop %v4072
  %v4093 = vrcp.pop %v4075
  %v4094 = vrcp.pop %v4078
  %v4095 = vrcp.pop %v4081
  %v4096 = vrcp.pop %v4084
  %v4097 = vrcp.pop %v4087
  %v4098 = vrcp.pop %v4090
  %v4099 = vmul.f32 %v4029, %v4091
  %v4100 = vmul.f32 %v4034, %v4092
  %v4101 = vmul.f32 %v4039, %v4093
  %v4102 = vmul.f32 %v4044, %v4094
  %v4103 = vmul.f32 %v4049, %v4095
  %v4104 = vmul.f32 %v4054, %v4096
  %v4105 = vmul.f32 %v4059, %v4097
  %v4106 = vmul.f32 %v4064, %v4098
  %4115 = vrot.lane.b32.xlu0 %v4099, 24
  %v4116 = vpop.permute.xlu0 %4115
  %4117 = vrot.lane.b32.xlu0 %v4100, 24
  %v4118 = vpop.permute.xlu0 %4117
  %4119 = vrot.lane.b32.xlu0 %v4101, 24
  %v4120 = vpop.permute.xlu0 %4119
  %4121 = vrot.lane.b32.xlu0 %v4102, 24
  %v4122 = vpop.permute.xlu0 %4121
  %4123 = vrot.lane.b32.xlu0 %v4103, 24
  %v4124 = vpop.permute.xlu0 %4123
  %4125 = vrot.lane.b32.xlu0 %v4104, 24
  %v4126 = vpop.permute.xlu0 %4125
  %4127 = vrot.lane.b32.xlu0 %v4105, 24
  %v4128 = vpop.permute.xlu0 %4127
  %4129 = vrot.lane.b32.xlu0 %v4106, 24
  %v4130 = vpop.permute.xlu0 %4129
  %4139 = vst.msk [vmem:[#allocation2 + $0x40] sm:$0xff] %vm2330, %v4116
  %4140 = vst.msk [vmem:[#allocation2 + $0x48] sm:$0xff] %vm2330, %v4118
  %4141 = vst.msk [vmem:[#allocation2 + $0x50] sm:$0xff] %vm2330, %v4120
  %4142 = vst.msk [vmem:[#allocation2 + $0x58] sm:$0xff] %vm2330, %v4122
  %4143 = vst.msk [vmem:[#allocation2 + $0x60] sm:$0xff] %vm2330, %v4124
  %4144 = vst.msk [vmem:[#allocation2 + $0x68] sm:$0xff] %vm2330, %v4126
  %4145 = vst.msk [vmem:[#allocation2 + $0x70] sm:$0xff] %vm2330, %v4128
  %4146 = vst.msk [vmem:[#allocation2 + $0x78] sm:$0xff] %vm2330, %v4130
  %v4147 = vld [vmem:[#allocation2] sm:$0xff]
  %v4148 = vld [vmem:[#allocation2 + $0x8] sm:$0xff]
  %v4149 = vld [vmem:[#allocation2 + $0x10] sm:$0xff]
  %v4150 = vld [vmem:[#allocation2 + $0x18] sm:$0xff]
  %v4151 = vld [vmem:[#allocation2 + $0x20] sm:$0xff]
  %v4152 = vld [vmem:[#allocation2 + $0x28] sm:$0xff]
  %v4153 = vld [vmem:[#allocation2 + $0x30] sm:$0xff]
  %v4154 = vld [vmem:[#allocation2 + $0x38] sm:$0xff]
  %v4155 = vld [vmem:[#allocation2 + $0x40] sm:$0xff]
  %v4156 = vld [vmem:[#allocation2 + $0x48] sm:$0xff]
  %v4157 = vld [vmem:[#allocation2 + $0x50] sm:$0xff]
  %v4158 = vld [vmem:[#allocation2 + $0x58] sm:$0xff]
  %v4159 = vld [vmem:[#allocation2 + $0x60] sm:$0xff]
  %v4160 = vld [vmem:[#allocation2 + $0x68] sm:$0xff]
  %v4161 = vld [vmem:[#allocation2 + $0x70] sm:$0xff]
  %v4162 = vld [vmem:[#allocation2 + $0x78] sm:$0xff]
  %v4163 = vld [vmem:[%s5] sm:$0xff]
  %v4164 = vld [vmem:[%s5 + $0x8] sm:$0xff]
  %v4165 = vld [vmem:[%s5 + $0x10] sm:$0xff]
  %v4166 = vld [vmem:[%s5 + $0x18] sm:$0xff]
  %v4167 = vld [vmem:[%s6] sm:$0x1]
  %v4169 = vlaneseq
  %v4170 = vshrl.u32 %v4169, 7
  %v4171 = vsub.s32 0, %v4170
  %v4172 = vrot.slane %v4167, %v4171
  %v4175 = vsel %vm65, %v4147, 0
  %v4178 = vsel %vm65, %v4148, 0
  %v4181 = vsel %vm65, %v4149, 0
  %v4184 = vsel %vm65, %v4150, 0
  %v4187 = vsel %vm65, %v4151, 0
  %v4190 = vsel %vm65, %v4152, 0
  %v4193 = vsel %vm65, %v4153, 0
  %v4196 = vsel %vm65, %v4154, 0
  %v4199 = vsel %vm65, %v4155, 0
  %v4202 = vsel %vm65, %v4156, 0
  %v4205 = vsel %vm65, %v4157, 0
  %v4208 = vsel %vm65, %v4158, 0
  %v4211 = vsel %vm65, %v4159, 0
  %v4214 = vsel %vm65, %v4160, 0
  %v4217 = vsel %vm65, %v4161, 0
  %v4220 = vsel %vm65, %v4162, 0
  %4222 = vmatprep.subr.mxu0 0.0
  %4223 = vmatpush1.msra.mxu0 %v4163
  %4224 = vmatprep.subr.mxu0 0.0
  %4225 = vmatpush1.msra.mxu0 %v4164
  %4226 = vmatprep.subr.mxu0 0.0
  %4227 = vmatpush1.msra.mxu0 %v4165
  %4228 = vmatprep.subr.mxu0 0.0
  %4229 = vmatpush1.msra.mxu0 %v4166
  %4230 = vmatprep.subr.mxu0 0.0
  %4231 = vmatpush1.msra.mxu0 0.0
  %4232 = vmatprep.subr.mxu0 0.0
  %4233 = vmatpush1.msra.mxu0 0.0
  %4234 = vmatprep.subr.mxu0 0.0
  %4235 = vmatpush1.msra.mxu0 0.0
  %4236 = vmatprep.subr.mxu0 0.0
  %4237 = vmatpush1.msra.mxu0 0.0
  %4238 = vmatprep.subr.mxu0 0.0
  %4239 = vmatpush1.msra.mxu0 0.0
  %4240 = vmatprep.subr.mxu0 0.0
  %4241 = vmatpush1.msra.mxu0 0.0
  %4242 = vmatprep.subr.mxu0 0.0
  %4243 = vmatpush1.msra.mxu0 0.0
  %4244 = vmatprep.subr.mxu0 0.0
  %4245 = vmatpush1.msra.mxu0 0.0
  %4246 = vmatprep.subr.mxu0 0.0
  %4247 = vmatpush1.msra.mxu0 0.0
  %4248 = vmatprep.subr.mxu0 0.0
  %4249 = vmatpush1.msra.mxu0 0.0
  %4250 = vmatprep.subr.mxu0 0.0
  %4251 = vmatpush1.msra.mxu0 0.0
  %4252 = vmatprep.subr.mxu0 0.0
  %4253 = vmatpush1.msra.mxu0 0.0
  %4254 = vmatprep.subr.mxu0 0.0
  %4255 = vmatpush1.msra.mxu0 0.0
  %4256 = vmatprep.subr.mxu0 0.0
  %4257 = vmatpush1.msra.mxu0 0.0
  %4258 = vmatprep.subr.mxu0 0.0
  %4259 = vmatpush1.msra.mxu0 0.0
  %4260 = vmatprep.subr.mxu0 0.0
  %4261 = vmatpush1.msra.mxu0 0.0
  %4262 = vmatprep.subr.mxu0 0.0
  %4263 = vmatpush1.msra.mxu0 0.0
  %4264 = vmatprep.subr.mxu0 0.0
  %4265 = vmatpush1.msra.mxu0 0.0
  %4266 = vmatprep.subr.mxu0 0.0
  %4267 = vmatpush1.msra.mxu0 0.0
  %4268 = vmatprep.subr.mxu0 0.0
  %4269 = vmatpush1.msra.mxu0 0.0
  %4270 = vmatprep.subr.mxu0 0.0
  %4271 = vmatpush1.msra.mxu0 0.0
  %4272 = vmatprep.subr.mxu0 0.0
  %4273 = vmatpush1.msra.mxu0 0.0
  %4274 = vmatprep.subr.mxu0 0.0
  %4275 = vmatpush1.msra.mxu0 0.0
  %4276 = vmatprep.subr.mxu0 0.0
  %4277 = vmatpush1.msra.mxu0 0.0
  %4278 = vmatprep.subr.mxu0 0.0
  %4279 = vmatpush1.msra.mxu0 0.0
  %4280 = vmatprep.subr.mxu0 0.0
  %4281 = vmatpush1.msra.mxu0 0.0
  %4282 = vmatprep.subr.mxu0 0.0
  %4283 = vmatpush1.msra.mxu0 0.0
  %4284 = vmatprep.subr.mxu0 0.0
  %4285 = vmatpush1.msra.mxu0 0.0
  %4286 = vmatprep.mubr.f32.mxu0 0.0
  %4287 = vmatmul.mubr.f32.gmra.mrb[0].mxu0 %v4175
  %v4288 = vpop.f32.mrb[0].mxu0
  %v4289 = vadd.f32 %v4172, %v4288
  %v4290 = vpop.f32.mrb[0].mxu0
  %4291 = vmatprep.mubr.f32.mxu0 0.0
  %4292 = vmatmul.mubr.f32.gmra.mrb[0].mxu0 %v4178
  %v4293 = vpop.f32.mrb[0].mxu0
  %v4294 = vadd.f32 %v4172, %v4293
  %v4295 = vpop.f32.mrb[0].mxu0
  %4296 = vmatprep.mubr.f32.mxu0 0.0
  %4297 = vmatmul.mubr.f32.gmra.mrb[0].mxu0 %v4181
  %v4298 = vpop.f32.mrb[0].mxu0
  %v4299 = vadd.f32 %v4172, %v4298
  %v4300 = vpop.f32.mrb[0].mxu0
  %4301 = vmatprep.mubr.f32.mxu0 0.0
  %4302 = vmatmul.mubr.f32.gmra.mrb[0].mxu0 %v4184
  %v4303 = vpop.f32.mrb[0].mxu0
  %v4304 = vadd.f32 %v4172, %v4303
  %v4305 = vpop.f32.mrb[0].mxu0
  %4306 = vmatprep.mubr.f32.mxu0 0.0
  %4307 = vmatmul.mubr.f32.gmra.mrb[0].mxu0 %v4187
  %v4308 = vpop.f32.mrb[0].mxu0
  %v4309 = vadd.f32 %v4172, %v4308
  %v4310 = vpop.f32.mrb[0].mxu0
  %4311 = vmatprep.mubr.f32.mxu0 0.0
  %4312 = vmatmul.mubr.f32.gmra.mrb[0].mxu0 %v4190
  %v4313 = vpop.f32.mrb[0].mxu0
  %v4314 = vadd.f32 %v4172, %v4313
  %v4315 = vpop.f32.mrb[0].mxu0
  %4316 = vmatprep.mubr.f32.mxu0 0.0
  %4317 = vmatmul.mubr.f32.gmra.mrb[0].mxu0 %v4193
  %v4318 = vpop.f32.mrb[0].mxu0
  %v4319 = vadd.f32 %v4172, %v4318
  %v4320 = vpop.f32.mrb[0].mxu0
  %4321 = vmatprep.mubr.f32.mxu0 0.0
  %4322 = vmatmul.mubr.f32.gmra.mrb[0].mxu0 %v4196
  %v4323 = vpop.f32.mrb[0].mxu0
  %v4324 = vadd.f32 %v4172, %v4323
  %v4325 = vpop.f32.mrb[0].mxu0
  %4326 = vmatprep.mubr.f32.mxu0 0.0
  %4327 = vmatmul.mubr.f32.gmra.mrb[0].mxu0 %v4199
  %v4328 = vpop.f32.mrb[0].mxu0
  %v4329 = vadd.f32 %v4172, %v4328
  %v4330 = vpop.f32.mrb[0].mxu0
  %4331 = vmatprep.mubr.f32.mxu0 0.0
  %4332 = vmatmul.mubr.f32.gmra.mrb[0].mxu0 %v4202
  %v4333 = vpop.f32.mrb[0].mxu0
  %v4334 = vadd.f32 %v4172, %v4333
  %v4335 = vpop.f32.mrb[0].mxu0
  %4336 = vmatprep.mubr.f32.mxu0 0.0
  %4337 = vmatmul.mubr.f32.gmra.mrb[0].mxu0 %v4205
  %v4338 = vpop.f32.mrb[0].mxu0
  %v4339 = vadd.f32 %v4172, %v4338
  %v4340 = vpop.f32.mrb[0].mxu0
  %4341 = vmatprep.mubr.f32.mxu0 0.0
  %4342 = vmatmul.mubr.f32.gmra.mrb[0].mxu0 %v4208
  %v4343 = vpop.f32.mrb[0].mxu0
  %v4344 = vadd.f32 %v4172, %v4343
  %v4345 = vpop.f32.mrb[0].mxu0
  %4346 = vmatprep.mubr.f32.mxu0 0.0
  %4347 = vmatmul.mubr.f32.gmra.mrb[0].mxu0 %v4211
  %v4348 = vpop.f32.mrb[0].mxu0
  %v4349 = vadd.f32 %v4172, %v4348
  %v4350 = vpop.f32.mrb[0].mxu0
  %4351 = vmatprep.mubr.f32.mxu0 0.0
  %4352 = vmatmul.mubr.f32.gmra.mrb[0].mxu0 %v4214
  %v4353 = vpop.f32.mrb[0].mxu0
  %v4354 = vadd.f32 %v4172, %v4353
  %v4355 = vpop.f32.mrb[0].mxu0
  %4356 = vmatprep.mubr.f32.mxu0 0.0
  %4357 = vmatmul.mubr.f32.gmra.mrb[0].mxu0 %v4217
  %v4358 = vpop.f32.mrb[0].mxu0
  %v4359 = vadd.f32 %v4172, %v4358
  %v4360 = vpop.f32.mrb[0].mxu0
  %4361 = vmatprep.mubr.f32.mxu0 0.0
  %4362 = vmatmul.mubr.f32.gmra.mrb[0].mxu0 %v4220
  %v4363 = vpop.f32.mrb[0].mxu0
  %v4364 = vadd.f32 %v4172, %v4363
  %v4365 = vpop.f32.mrb[0].mxu0
  %4366 = vdwg.mxu0
  %v4367 = vadd.f32 %v47, %v4289
  %v4368 = vadd.f32 %v48, %v4294
  %v4369 = vadd.f32 %v49, %v4299
  %v4370 = vadd.f32 %v50, %v4304
  %v4371 = vadd.f32 %v51, %v4309
  %v4372 = vadd.f32 %v52, %v4314
  %v4373 = vadd.f32 %v53, %v4319
  %v4374 = vadd.f32 %v54, %v4324
  %v4375 = vadd.f32 %v55, %v4329
  %v4376 = vadd.f32 %v56, %v4334
  %v4377 = vadd.f32 %v57, %v4339
  %v4378 = vadd.f32 %v58, %v4344
  %v4379 = vadd.f32 %v59, %v4349
  %v4380 = vadd.f32 %v60, %v4354
  %v4381 = vadd.f32 %v61, %v4359
  %v4382 = vadd.f32 %v62, %v4364
  %v4383 = vld [vmem:[%s8] sm:$0x1]
  %v4384 = vld [vmem:[%s9] sm:$0x1]
  %v4385 = vsel %vm65, %v4367, 0.0
  %4386 = vadd.xlane.f32.xlu0 %v4385
  %v4387 = vpop.xlane.xlu0 %4386
  %v4388 = vsel %vm65, %v4368, 0.0
  %4389 = vadd.xlane.f32.xlu0 %v4388
  %v4390 = vpop.xlane.xlu0 %4389
  %v4391 = vsel %vm65, %v4369, 0.0
  %4392 = vadd.xlane.f32.xlu0 %v4391
  %v4393 = vpop.xlane.xlu0 %4392
  %v4394 = vsel %vm65, %v4370, 0.0
  %4395 = vadd.xlane.f32.xlu0 %v4394
  %v4396 = vpop.xlane.xlu0 %4395
  %v4397 = vsel %vm65, %v4371, 0.0
  %4398 = vadd.xlane.f32.xlu0 %v4397
  %v4399 = vpop.xlane.xlu0 %4398
  %v4400 = vsel %vm65, %v4372, 0.0
  %4401 = vadd.xlane.f32.xlu0 %v4400
  %v4402 = vpop.xlane.xlu0 %4401
  %v4403 = vsel %vm65, %v4373, 0.0
  %4404 = vadd.xlane.f32.xlu0 %v4403
  %v4405 = vpop.xlane.xlu0 %4404
  %v4406 = vsel %vm65, %v4374, 0.0
  %4407 = vadd.xlane.f32.xlu0 %v4406
  %v4408 = vpop.xlane.xlu0 %4407
  %v4409 = vsel %vm65, %v4375, 0.0
  %4410 = vadd.xlane.f32.xlu0 %v4409
  %v4411 = vpop.xlane.xlu0 %4410
  %v4412 = vsel %vm65, %v4376, 0.0
  %4413 = vadd.xlane.f32.xlu0 %v4412
  %v4414 = vpop.xlane.xlu0 %4413
  %v4415 = vsel %vm65, %v4377, 0.0
  %4416 = vadd.xlane.f32.xlu0 %v4415
  %v4417 = vpop.xlane.xlu0 %4416
  %v4418 = vsel %vm65, %v4378, 0.0
  %4419 = vadd.xlane.f32.xlu0 %v4418
  %v4420 = vpop.xlane.xlu0 %4419
  %v4421 = vsel %vm65, %v4379, 0.0
  %4422 = vadd.xlane.f32.xlu0 %v4421
  %v4423 = vpop.xlane.xlu0 %4422
  %v4424 = vsel %vm65, %v4380, 0.0
  %4425 = vadd.xlane.f32.xlu0 %v4424
  %v4426 = vpop.xlane.xlu0 %4425
  %v4427 = vsel %vm65, %v4381, 0.0
  %4428 = vadd.xlane.f32.xlu0 %v4427
  %v4429 = vpop.xlane.xlu0 %4428
  %v4430 = vsel %vm65, %v4382, 0.0
  %4431 = vadd.xlane.f32.xlu0 %v4430
  %v4432 = vpop.xlane.xlu0 %4431
  %v4433 = vmul.f32 %v4387, %v114
  %v4434 = vmul.f32 %v4390, %v114
  %v4435 = vmul.f32 %v4393, %v114
  %v4436 = vmul.f32 %v4396, %v114
  %v4437 = vmul.f32 %v4399, %v114
  %v4438 = vmul.f32 %v4402, %v114
  %v4439 = vmul.f32 %v4405, %v114
  %v4440 = vmul.f32 %v4408, %v114
  %v4441 = vmul.f32 %v4411, %v114
  %v4442 = vmul.f32 %v4414, %v114
  %v4443 = vmul.f32 %v4417, %v114
  %v4444 = vmul.f32 %v4420, %v114
  %v4445 = vmul.f32 %v4423, %v114
  %v4446 = vmul.f32 %v4426, %v114
  %v4447 = vmul.f32 %v4429, %v114
  %v4448 = vmul.f32 %v4432, %v114
  %v4449 = vsub.f32 %v4367, %v4433
  %v4450 = vsub.f32 %v4368, %v4434
  %v4451 = vsub.f32 %v4369, %v4435
  %v4452 = vsub.f32 %v4370, %v4436
  %v4453 = vsub.f32 %v4371, %v4437
  %v4454 = vsub.f32 %v4372, %v4438
  %v4455 = vsub.f32 %v4373, %v4439
  %v4456 = vsub.f32 %v4374, %v4440
  %v4457 = vsub.f32 %v4375, %v4441
  %v4458 = vsub.f32 %v4376, %v4442
  %v4459 = vsub.f32 %v4377, %v4443
  %v4460 = vsub.f32 %v4378, %v4444
  %v4461 = vsub.f32 %v4379, %v4445
  %v4462 = vsub.f32 %v4380, %v4446
  %v4463 = vsub.f32 %v4381, %v4447
  %v4464 = vsub.f32 %v4382, %v4448
  %v4465 = vmul.f32 %v4449, %v4449
  %v4466 = vmul.f32 %v4450, %v4450
  %v4467 = vmul.f32 %v4451, %v4451
  %v4468 = vmul.f32 %v4452, %v4452
  %v4469 = vmul.f32 %v4453, %v4453
  %v4470 = vmul.f32 %v4454, %v4454
  %v4471 = vmul.f32 %v4455, %v4455
  %v4472 = vmul.f32 %v4456, %v4456
  %v4473 = vmul.f32 %v4457, %v4457
  %v4474 = vmul.f32 %v4458, %v4458
  %v4475 = vmul.f32 %v4459, %v4459
  %v4476 = vmul.f32 %v4460, %v4460
  %v4477 = vmul.f32 %v4461, %v4461
  %v4478 = vmul.f32 %v4462, %v4462
  %v4479 = vmul.f32 %v4463, %v4463
  %v4480 = vmul.f32 %v4464, %v4464
  %v4481 = vsel %vm65, %v4465, 0.0
  %4482 = vadd.xlane.f32.xlu0 %v4481
  %v4483 = vpop.xlane.xlu0 %4482
  %v4484 = vsel %vm65, %v4466, 0.0
  %4485 = vadd.xlane.f32.xlu0 %v4484
  %v4486 = vpop.xlane.xlu0 %4485
  %v4487 = vsel %vm65, %v4467, 0.0
  %4488 = vadd.xlane.f32.xlu0 %v4487
  %v4489 = vpop.xlane.xlu0 %4488
  %v4490 = vsel %vm65, %v4468, 0.0
  %4491 = vadd.xlane.f32.xlu0 %v4490
  %v4492 = vpop.xlane.xlu0 %4491
  %v4493 = vsel %vm65, %v4469, 0.0
  %4494 = vadd.xlane.f32.xlu0 %v4493
  %v4495 = vpop.xlane.xlu0 %4494
  %v4496 = vsel %vm65, %v4470, 0.0
  %4497 = vadd.xlane.f32.xlu0 %v4496
  %v4498 = vpop.xlane.xlu0 %4497
  %v4499 = vsel %vm65, %v4471, 0.0
  %4500 = vadd.xlane.f32.xlu0 %v4499
  %v4501 = vpop.xlane.xlu0 %4500
  %v4502 = vsel %vm65, %v4472, 0.0
  %4503 = vadd.xlane.f32.xlu0 %v4502
  %v4504 = vpop.xlane.xlu0 %4503
  %v4505 = vsel %vm65, %v4473, 0.0
  %4506 = vadd.xlane.f32.xlu0 %v4505
  %v4507 = vpop.xlane.xlu0 %4506
  %v4508 = vsel %vm65, %v4474, 0.0
  %4509 = vadd.xlane.f32.xlu0 %v4508
  %v4510 = vpop.xlane.xlu0 %4509
  %v4511 = vsel %vm65, %v4475, 0.0
  %4512 = vadd.xlane.f32.xlu0 %v4511
  %v4513 = vpop.xlane.xlu0 %4512
  %v4514 = vsel %vm65, %v4476, 0.0
  %4515 = vadd.xlane.f32.xlu0 %v4514
  %v4516 = vpop.xlane.xlu0 %4515
  %v4517 = vsel %vm65, %v4477, 0.0
  %4518 = vadd.xlane.f32.xlu0 %v4517
  %v4519 = vpop.xlane.xlu0 %4518
  %v4520 = vsel %vm65, %v4478, 0.0
  %4521 = vadd.xlane.f32.xlu0 %v4520
  %v4522 = vpop.xlane.xlu0 %4521
  %v4523 = vsel %vm65, %v4479, 0.0
  %4524 = vadd.xlane.f32.xlu0 %v4523
  %v4525 = vpop.xlane.xlu0 %4524
  %v4526 = vsel %vm65, %v4480, 0.0
  %4527 = vadd.xlane.f32.xlu0 %v4526
  %v4528 = vpop.xlane.xlu0 %4527
  %v4529 = vmul.f32 %v4483, %v114
  %v4530 = vmul.f32 %v4486, %v114
  %v4531 = vmul.f32 %v4489, %v114
  %v4532 = vmul.f32 %v4492, %v114
  %v4533 = vmul.f32 %v4495, %v114
  %v4534 = vmul.f32 %v4498, %v114
  %v4535 = vmul.f32 %v4501, %v114
  %v4536 = vmul.f32 %v4504, %v114
  %v4537 = vmul.f32 %v4507, %v114
  %v4538 = vmul.f32 %v4510, %v114
  %v4539 = vmul.f32 %v4513, %v114
  %v4540 = vmul.f32 %v4516, %v114
  %v4541 = vmul.f32 %v4519, %v114
  %v4542 = vmul.f32 %v4522, %v114
  %v4543 = vmul.f32 %v4525, %v114
  %v4544 = vmul.f32 %v4528, %v114
  %v4545 = vadd.f32 %v4529, 1e-05
  %v4546 = vadd.f32 %v4530, 1e-05
  %v4547 = vadd.f32 %v4531, 1e-05
  %v4548 = vadd.f32 %v4532, 1e-05
  %v4549 = vadd.f32 %v4533, 1e-05
  %v4550 = vadd.f32 %v4534, 1e-05
  %v4551 = vadd.f32 %v4535, 1e-05
  %v4552 = vadd.f32 %v4536, 1e-05
  %v4553 = vadd.f32 %v4537, 1e-05
  %v4554 = vadd.f32 %v4538, 1e-05
  %v4555 = vadd.f32 %v4539, 1e-05
  %v4556 = vadd.f32 %v4540, 1e-05
  %v4557 = vadd.f32 %v4541, 1e-05
  %v4558 = vadd.f32 %v4542, 1e-05
  %v4559 = vadd.f32 %v4543, 1e-05
  %v4560 = vadd.f32 %v4544, 1e-05
  %v4561 = vrsqrt.pop %v4545
  %v4562 = vrsqrt.pop %v4546
  %v4563 = vrsqrt.pop %v4547
  %v4564 = vrsqrt.pop %v4548
  %v4565 = vrsqrt.pop %v4549
  %v4566 = vrsqrt.pop %v4550
  %v4567 = vrsqrt.pop %v4551
  %v4568 = vrsqrt.pop %v4552
  %v4569 = vrsqrt.pop %v4553
  %v4570 = vrsqrt.pop %v4554
  %v4571 = vrsqrt.pop %v4555
  %v4572 = vrsqrt.pop %v4556
  %v4573 = vrsqrt.pop %v4557
  %v4574 = vrsqrt.pop %v4558
  %v4575 = vrsqrt.pop %v4559
  %v4576 = vrsqrt.pop %v4560
  %v4577 = vmul.f32 %v4449, %v4561
  %v4578 = vmul.f32 %v4450, %v4562
  %v4579 = vmul.f32 %v4451, %v4563
  %v4580 = vmul.f32 %v4452, %v4564
  %v4581 = vmul.f32 %v4453, %v4565
  %v4582 = vmul.f32 %v4454, %v4566
  %v4583 = vmul.f32 %v4455, %v4567
  %v4584 = vmul.f32 %v4456, %v4568
  %v4585 = vmul.f32 %v4457, %v4569
  %v4586 = vmul.f32 %v4458, %v4570
  %v4587 = vmul.f32 %v4459, %v4571
  %v4588 = vmul.f32 %v4460, %v4572
  %v4589 = vmul.f32 %v4461, %v4573
  %v4590 = vmul.f32 %v4462, %v4574
  %v4591 = vmul.f32 %v4463, %v4575
  %v4592 = vmul.f32 %v4464, %v4576
  %v4594 = vlaneseq
  %v4595 = vshrl.u32 %v4594, 7
  %v4596 = vsub.s32 0, %v4595
  %v4597 = vrot.slane %v4383, %v4596
  %v4599 = vmul.f32 %v4577, %v4597
  %v4600 = vmul.f32 %v4578, %v4597
  %v4601 = vmul.f32 %v4579, %v4597
  %v4602 = vmul.f32 %v4580, %v4597
  %v4603 = vmul.f32 %v4581, %v4597
  %v4604 = vmul.f32 %v4582, %v4597
  %v4605 = vmul.f32 %v4583, %v4597
  %v4606 = vmul.f32 %v4584, %v4597
  %v4607 = vmul.f32 %v4585, %v4597
  %v4608 = vmul.f32 %v4586, %v4597
  %v4609 = vmul.f32 %v4587, %v4597
  %v4610 = vmul.f32 %v4588, %v4597
  %v4611 = vmul.f32 %v4589, %v4597
  %v4612 = vmul.f32 %v4590, %v4597
  %v4613 = vmul.f32 %v4591, %v4597
  %v4614 = vmul.f32 %v4592, %v4597
  %v4616 = vlaneseq
  %v4617 = vshrl.u32 %v4616, 7
  %v4618 = vsub.s32 0, %v4617
  %v4619 = vrot.slane %v4384, %v4618
  %v4621 = vadd.f32 %v4599, %v4619
  %v4622 = vadd.f32 %v4600, %v4619
  %v4623 = vadd.f32 %v4601, %v4619
  %v4624 = vadd.f32 %v4602, %v4619
  %v4625 = vadd.f32 %v4603, %v4619
  %v4626 = vadd.f32 %v4604, %v4619
  %v4627 = vadd.f32 %v4605, %v4619
  %v4628 = vadd.f32 %v4606, %v4619
  %v4629 = vadd.f32 %v4607, %v4619
  %v4630 = vadd.f32 %v4608, %v4619
  %v4631 = vadd.f32 %v4609, %v4619
  %v4632 = vadd.f32 %v4610, %v4619
  %v4633 = vadd.f32 %v4611, %v4619
  %v4634 = vadd.f32 %v4612, %v4619
  %v4635 = vadd.f32 %v4613, %v4619
  %v4636 = vadd.f32 %v4614, %v4619
  %v4637 = vld [vmem:[%s10] sm:$0xff]
  %v4638 = vld [vmem:[%s10 + $0x8] sm:$0xff]
  %v4639 = vld [vmem:[%s10 + $0x10] sm:$0xff]
  %v4640 = vld [vmem:[%s10 + $0x18] sm:$0xff]
  %v4641 = vld [vmem:[%s11] sm:$0x1]
  %v4643 = vlaneseq
  %v4644 = vshrl.u32 %v4643, 7
  %v4645 = vsub.s32 0, %v4644
  %v4646 = vrot.slane %v4641, %v4645
  %v4649 = vsel %vm65, %v4621, 0
  %v4652 = vsel %vm65, %v4622, 0
  %v4655 = vsel %vm65, %v4623, 0
  %v4658 = vsel %vm65, %v4624, 0
  %v4661 = vsel %vm65, %v4625, 0
  %v4664 = vsel %vm65, %v4626, 0
  %v4667 = vsel %vm65, %v4627, 0
  %v4670 = vsel %vm65, %v4628, 0
  %v4673 = vsel %vm65, %v4629, 0
  %v4676 = vsel %vm65, %v4630, 0
  %v4679 = vsel %vm65, %v4631, 0
  %v4682 = vsel %vm65, %v4632, 0
  %v4685 = vsel %vm65, %v4633, 0
  %v4688 = vsel %vm65, %v4634, 0
  %v4691 = vsel %vm65, %v4635, 0
  %v4694 = vsel %vm65, %v4636, 0
  %4696 = vmatprep.subr.mxu0 0.0
  %4697 = vmatpush1.msra.mxu0 %v4637
  %4698 = vmatprep.subr.mxu0 0.0
  %4699 = vmatpush1.msra.mxu0 %v4638
  %4700 = vmatprep.subr.mxu0 0.0
  %4701 = vmatpush1.msra.mxu0 %v4639
  %4702 = vmatprep.subr.mxu0 0.0
  %4703 = vmatpush1.msra.mxu0 %v4640
  %4704 = vmatprep.subr.mxu0 0.0
  %4705 = vmatpush1.msra.mxu0 0.0
  %4706 = vmatprep.subr.mxu0 0.0
  %4707 = vmatpush1.msra.mxu0 0.0
  %4708 = vmatprep.subr.mxu0 0.0
  %4709 = vmatpush1.msra.mxu0 0.0
  %4710 = vmatprep.subr.mxu0 0.0
  %4711 = vmatpush1.msra.mxu0 0.0
  %4712 = vmatprep.subr.mxu0 0.0
  %4713 = vmatpush1.msra.mxu0 0.0
  %4714 = vmatprep.subr.mxu0 0.0
  %4715 = vmatpush1.msra.mxu0 0.0
  %4716 = vmatprep.subr.mxu0 0.0
  %4717 = vmatpush1.msra.mxu0 0.0
  %4718 = vmatprep.subr.mxu0 0.0
  %4719 = vmatpush1.msra.mxu0 0.0
  %4720 = vmatprep.subr.mxu0 0.0
  %4721 = vmatpush1.msra.mxu0 0.0
  %4722 = vmatprep.subr.mxu0 0.0
  %4723 = vmatpush1.msra.mxu0 0.0
  %4724 = vmatprep.subr.mxu0 0.0
  %4725 = vmatpush1.msra.mxu0 0.0
  %4726 = vmatprep.subr.mxu0 0.0
  %4727 = vmatpush1.msra.mxu0 0.0
  %4728 = vmatprep.subr.mxu0 0.0
  %4729 = vmatpush1.msra.mxu0 0.0
  %4730 = vmatprep.subr.mxu0 0.0
  %4731 = vmatpush1.msra.mxu0 0.0
  %4732 = vmatprep.subr.mxu0 0.0
  %4733 = vmatpush1.msra.mxu0 0.0
  %4734 = vmatprep.subr.mxu0 0.0
  %4735 = vmatpush1.msra.mxu0 0.0
  %4736 = vmatprep.subr.mxu0 0.0
  %4737 = vmatpush1.msra.mxu0 0.0
  %4738 = vmatprep.subr.mxu0 0.0
  %4739 = vmatpush1.msra.mxu0 0.0
  %4740 = vmatprep.subr.mxu0 0.0
  %4741 = vmatpush1.msra.mxu0 0.0
  %4742 = vmatprep.subr.mxu0 0.0
  %4743 = vmatpush1.msra.mxu0 0.0
  %4744 = vmatprep.subr.mxu0 0.0
  %4745 = vmatpush1.msra.mxu0 0.0
  %4746 = vmatprep.subr.mxu0 0.0
  %4747 = vmatpush1.msra.mxu0 0.0
  %4748 = vmatprep.subr.mxu0 0.0
  %4749 = vmatpush1.msra.mxu0 0.0
  %4750 = vmatprep.subr.mxu0 0.0
  %4751 = vmatpush1.msra.mxu0 0.0
  %4752 = vmatprep.subr.mxu0 0.0
  %4753 = vmatpush1.msra.mxu0 0.0
  %4754 = vmatprep.subr.mxu0 0.0
  %4755 = vmatpush1.msra.mxu0 0.0
  %4756 = vmatprep.subr.mxu0 0.0
  %4757 = vmatpush1.msra.mxu0 0.0
  %4758 = vmatprep.subr.mxu0 0.0
  %4759 = vmatpush1.msra.mxu0 0.0
  %4760 = vmatprep.mubr.f32.mxu0 0.0
  %4761 = vmatmul.mubr.f32.gmra.mrb[0].mxu0 %v4649
  %v4762 = vpop.f32.mrb[0].mxu0
  %v4763 = vadd.f32 %v4646, %v4762
  %v4764 = vpop.f32.mrb[0].mxu0
  %4765 = vmatprep.mubr.f32.mxu0 0.0
  %4766 = vmatmul.mubr.f32.gmra.mrb[0].mxu0 %v4652
  %v4767 = vpop.f32.mrb[0].mxu0
  %v4768 = vadd.f32 %v4646, %v4767
  %v4769 = vpop.f32.mrb[0].mxu0
  %4770 = vmatprep.mubr.f32.mxu0 0.0
  %4771 = vmatmul.mubr.f32.gmra.mrb[0].mxu0 %v4655
  %v4772 = vpop.f32.mrb[0].mxu0
  %v4773 = vadd.f32 %v4646, %v4772
  %v4774 = vpop.f32.mrb[0].mxu0
  %4775 = vmatprep.mubr.f32.mxu0 0.0
  %4776 = vmatmul.mubr.f32.gmra.mrb[0].mxu0 %v4658
  %v4777 = vpop.f32.mrb[0].mxu0
  %v4778 = vadd.f32 %v4646, %v4777
  %v4779 = vpop.f32.mrb[0].mxu0
  %4780 = vmatprep.mubr.f32.mxu0 0.0
  %4781 = vmatmul.mubr.f32.gmra.mrb[0].mxu0 %v4661
  %v4782 = vpop.f32.mrb[0].mxu0
  %v4783 = vadd.f32 %v4646, %v4782
  %v4784 = vpop.f32.mrb[0].mxu0
  %4785 = vmatprep.mubr.f32.mxu0 0.0
  %4786 = vmatmul.mubr.f32.gmra.mrb[0].mxu0 %v4664
  %v4787 = vpop.f32.mrb[0].mxu0
  %v4788 = vadd.f32 %v4646, %v4787
  %v4789 = vpop.f32.mrb[0].mxu0
  %4790 = vmatprep.mubr.f32.mxu0 0.0
  %4791 = vmatmul.mubr.f32.gmra.mrb[0].mxu0 %v4667
  %v4792 = vpop.f32.mrb[0].mxu0
  %v4793 = vadd.f32 %v4646, %v4792
  %v4794 = vpop.f32.mrb[0].mxu0
  %4795 = vmatprep.mubr.f32.mxu0 0.0
  %4796 = vmatmul.mubr.f32.gmra.mrb[0].mxu0 %v4670
  %v4797 = vpop.f32.mrb[0].mxu0
  %v4798 = vadd.f32 %v4646, %v4797
  %v4799 = vpop.f32.mrb[0].mxu0
  %4800 = vmatprep.mubr.f32.mxu0 0.0
  %4801 = vmatmul.mubr.f32.gmra.mrb[0].mxu0 %v4673
  %v4802 = vpop.f32.mrb[0].mxu0
  %v4803 = vadd.f32 %v4646, %v4802
  %v4804 = vpop.f32.mrb[0].mxu0
  %4805 = vmatprep.mubr.f32.mxu0 0.0
  %4806 = vmatmul.mubr.f32.gmra.mrb[0].mxu0 %v4676
  %v4807 = vpop.f32.mrb[0].mxu0
  %v4808 = vadd.f32 %v4646, %v4807
  %v4809 = vpop.f32.mrb[0].mxu0
  %4810 = vmatprep.mubr.f32.mxu0 0.0
  %4811 = vmatmul.mubr.f32.gmra.mrb[0].mxu0 %v4679
  %v4812 = vpop.f32.mrb[0].mxu0
  %v4813 = vadd.f32 %v4646, %v4812
  %v4814 = vpop.f32.mrb[0].mxu0
  %4815 = vmatprep.mubr.f32.mxu0 0.0
  %4816 = vmatmul.mubr.f32.gmra.mrb[0].mxu0 %v4682
  %v4817 = vpop.f32.mrb[0].mxu0
  %v4818 = vadd.f32 %v4646, %v4817
  %v4819 = vpop.f32.mrb[0].mxu0
  %4820 = vmatprep.mubr.f32.mxu0 0.0
  %4821 = vmatmul.mubr.f32.gmra.mrb[0].mxu0 %v4685
  %v4822 = vpop.f32.mrb[0].mxu0
  %v4823 = vadd.f32 %v4646, %v4822
  %v4824 = vpop.f32.mrb[0].mxu0
  %4825 = vmatprep.mubr.f32.mxu0 0.0
  %4826 = vmatmul.mubr.f32.gmra.mrb[0].mxu0 %v4688
  %v4827 = vpop.f32.mrb[0].mxu0
  %v4828 = vadd.f32 %v4646, %v4827
  %v4829 = vpop.f32.mrb[0].mxu0
  %4830 = vmatprep.mubr.f32.mxu0 0.0
  %4831 = vmatmul.mubr.f32.gmra.mrb[0].mxu0 %v4691
  %v4832 = vpop.f32.mrb[0].mxu0
  %v4833 = vadd.f32 %v4646, %v4832
  %v4834 = vpop.f32.mrb[0].mxu0
  %4835 = vmatprep.mubr.f32.mxu0 0.0
  %4836 = vmatmul.mubr.f32.gmra.mrb[0].mxu0 %v4694
  %v4837 = vpop.f32.mrb[0].mxu0
  %v4838 = vadd.f32 %v4646, %v4837
  %v4839 = vpop.f32.mrb[0].mxu0
  %4840 = vdwg.mxu0
  %v4841 = vmul.f32 %v4763, 0.5
  %v4842 = vmul.f32 %v4768, 0.5
  %v4843 = vmul.f32 %v4773, 0.5
  %v4844 = vmul.f32 %v4778, 0.5
  %v4845 = vmul.f32 %v4783, 0.5
  %v4846 = vmul.f32 %v4788, 0.5
  %v4847 = vmul.f32 %v4793, 0.5
  %v4848 = vmul.f32 %v4798, 0.5
  %v4849 = vmul.f32 %v4803, 0.5
  %v4850 = vmul.f32 %v4808, 0.5
  %v4851 = vmul.f32 %v4813, 0.5
  %v4852 = vmul.f32 %v4818, 0.5
  %v4853 = vmul.f32 %v4823, 0.5
  %v4854 = vmul.f32 %v4828, 0.5
  %v4855 = vmul.f32 %v4833, 0.5
  %v4856 = vmul.f32 %v4838, 0.5
  %v4857 = vmul.f32 %v4763, 0.70710677
  %v4858 = vmul.f32 %v4768, 0.70710677
  %v4859 = vmul.f32 %v4773, 0.70710677
  %v4860 = vmul.f32 %v4778, 0.70710677
  %v4861 = vmul.f32 %v4783, 0.70710677
  %v4862 = vmul.f32 %v4788, 0.70710677
  %v4863 = vmul.f32 %v4793, 0.70710677
  %v4864 = vmul.f32 %v4798, 0.70710677
  %v4865 = vmul.f32 %v4803, 0.70710677
  %v4866 = vmul.f32 %v4808, 0.70710677
  %v4867 = vmul.f32 %v4813, 0.70710677
  %v4868 = vmul.f32 %v4818, 0.70710677
  %v4869 = vmul.f32 %v4823, 0.70710677
  %v4870 = vmul.f32 %v4828, 0.70710677
  %v4871 = vmul.f32 %v4833, 0.70710677
  %v4872 = vmul.f32 %v4838, 0.70710677
  %v4873 = verf.f32.pop %v4857
  %v4874 = verf.f32.pop %v4858
  %v4875 = verf.f32.pop %v4859
  %v4876 = verf.f32.pop %v4860
  %v4877 = verf.f32.pop %v4861
  %v4878 = verf.f32.pop %v4862
  %v4879 = verf.f32.pop %v4863
  %v4880 = verf.f32.pop %v4864
  %v4881 = verf.f32.pop %v4865
  %v4882 = verf.f32.pop %v4866
  %v4883 = verf.f32.pop %v4867
  %v4884 = verf.f32.pop %v4868
  %v4885 = verf.f32.pop %v4869
  %v4886 = verf.f32.pop %v4870
  %v4887 = verf.f32.pop %v4871
  %v4888 = verf.f32.pop %v4872
  %v4889 = vadd.f32 %v4873, 1.0
  %v4890 = vadd.f32 %v4874, 1.0
  %v4891 = vadd.f32 %v4875, 1.0
  %v4892 = vadd.f32 %v4876, 1.0
  %v4893 = vadd.f32 %v4877, 1.0
  %v4894 = vadd.f32 %v4878, 1.0
  %v4895 = vadd.f32 %v4879, 1.0
  %v4896 = vadd.f32 %v4880, 1.0
  %v4897 = vadd.f32 %v4881, 1.0
  %v4898 = vadd.f32 %v4882, 1.0
  %v4899 = vadd.f32 %v4883, 1.0
  %v4900 = vadd.f32 %v4884, 1.0
  %v4901 = vadd.f32 %v4885, 1.0
  %v4902 = vadd.f32 %v4886, 1.0
  %v4903 = vadd.f32 %v4887, 1.0
  %v4904 = vadd.f32 %v4888, 1.0
  %v4905 = vmul.f32 %v4841, %v4889
  %v4906 = vmul.f32 %v4842, %v4890
  %v4907 = vmul.f32 %v4843, %v4891
  %v4908 = vmul.f32 %v4844, %v4892
  %v4909 = vmul.f32 %v4845, %v4893
  %v4910 = vmul.f32 %v4846, %v4894
  %v4911 = vmul.f32 %v4847, %v4895
  %v4912 = vmul.f32 %v4848, %v4896
  %v4913 = vmul.f32 %v4849, %v4897
  %v4914 = vmul.f32 %v4850, %v4898
  %v4915 = vmul.f32 %v4851, %v4899
  %v4916 = vmul.f32 %v4852, %v4900
  %v4917 = vmul.f32 %v4853, %v4901
  %v4918 = vmul.f32 %v4854, %v4902
  %v4919 = vmul.f32 %v4855, %v4903
  %v4920 = vmul.f32 %v4856, %v4904
  %v4921 = vld [vmem:[%s12] sm:$0xff]
  %v4922 = vld [vmem:[%s12 + $0x8] sm:$0xff]
  %v4923 = vld [vmem:[%s12 + $0x10] sm:$0xff]
  %v4924 = vld [vmem:[%s12 + $0x18] sm:$0xff]
  %v4925 = vld [vmem:[%s12 + $0x20] sm:$0xff]
  %v4926 = vld [vmem:[%s12 + $0x28] sm:$0xff]
  %v4927 = vld [vmem:[%s12 + $0x30] sm:$0xff]
  %v4928 = vld [vmem:[%s12 + $0x38] sm:$0xff]
  %v4929 = vld [vmem:[%s12 + $0x40] sm:$0xff]
  %v4930 = vld [vmem:[%s12 + $0x48] sm:$0xff]
  %v4931 = vld [vmem:[%s12 + $0x50] sm:$0xff]
  %v4932 = vld [vmem:[%s12 + $0x58] sm:$0xff]
  %v4933 = vld [vmem:[%s12 + $0x60] sm:$0xff]
  %v4934 = vld [vmem:[%s12 + $0x68] sm:$0xff]
  %v4935 = vld [vmem:[%s12 + $0x70] sm:$0xff]
  %v4936 = vld [vmem:[%s12 + $0x78] sm:$0xff]
  %v4937 = vld [vmem:[%s13] sm:$0x1]
  %v4939 = vlaneseq
  %v4940 = vshrl.u32 %v4939, 7
  %v4941 = vsub.s32 0, %v4940
  %v4942 = vrot.slane %v4937, %v4941
  %4944 = vmatprep.subr.mxu0 0.0
  %4945 = vmatpush1.msra.mxu0 %v4921
  %4946 = vmatprep.subr.mxu0 0.0
  %4947 = vmatpush1.msra.mxu0 %v4922
  %4948 = vmatprep.subr.mxu0 0.0
  %4949 = vmatpush1.msra.mxu0 %v4923
  %4950 = vmatprep.subr.mxu0 0.0
  %4951 = vmatpush1.msra.mxu0 %v4924
  %4952 = vmatprep.subr.mxu0 0.0
  %4953 = vmatpush1.msra.mxu0 %v4925
  %4954 = vmatprep.subr.mxu0 0.0
  %4955 = vmatpush1.msra.mxu0 %v4926
  %4956 = vmatprep.subr.mxu0 0.0
  %4957 = vmatpush1.msra.mxu0 %v4927
  %4958 = vmatprep.subr.mxu0 0.0
  %4959 = vmatpush1.msra.mxu0 %v4928
  %4960 = vmatprep.subr.mxu0 0.0
  %4961 = vmatpush1.msra.mxu0 %v4929
  %4962 = vmatprep.subr.mxu0 0.0
  %4963 = vmatpush1.msra.mxu0 %v4930
  %4964 = vmatprep.subr.mxu0 0.0
  %4965 = vmatpush1.msra.mxu0 %v4931
  %4966 = vmatprep.subr.mxu0 0.0
  %4967 = vmatpush1.msra.mxu0 %v4932
  %4968 = vmatprep.subr.mxu0 0.0
  %4969 = vmatpush1.msra.mxu0 %v4933
  %4970 = vmatprep.subr.mxu0 0.0
  %4971 = vmatpush1.msra.mxu0 %v4934
  %4972 = vmatprep.subr.mxu0 0.0
  %4973 = vmatpush1.msra.mxu0 %v4935
  %4974 = vmatprep.subr.mxu0 0.0
  %4975 = vmatpush1.msra.mxu0 %v4936
  %4976 = vmatprep.subr.mxu0 0.0
  %4977 = vmatpush1.msra.mxu0 0.0
  %4978 = vmatprep.subr.mxu0 0.0
  %4979 = vmatpush1.msra.mxu0 0.0
  %4980 = vmatprep.subr.mxu0 0.0
  %4981 = vmatpush1.msra.mxu0 0.0
  %4982 = vmatprep.subr.mxu0 0.0
  %4983 = vmatpush1.msra.mxu0 0.0
  %4984 = vmatprep.subr.mxu0 0.0
  %4985 = vmatpush1.msra.mxu0 0.0
  %4986 = vmatprep.subr.mxu0 0.0
  %4987 = vmatpush1.msra.mxu0 0.0
  %4988 = vmatprep.subr.mxu0 0.0
  %4989 = vmatpush1.msra.mxu0 0.0
  %4990 = vmatprep.subr.mxu0 0.0
  %4991 = vmatpush1.msra.mxu0 0.0
  %4992 = vmatprep.subr.mxu0 0.0
  %4993 = vmatpush1.msra.mxu0 0.0
  %4994 = vmatprep.subr.mxu0 0.0
  %4995 = vmatpush1.msra.mxu0 0.0
  %4996 = vmatprep.subr.mxu0 0.0
  %4997 = vmatpush1.msra.mxu0 0.0
  %4998 = vmatprep.subr.mxu0 0.0
  %4999 = vmatpush1.msra.mxu0 0.0
  %5000 = vmatprep.subr.mxu0 0.0
  %5001 = vmatpush1.msra.mxu0 0.0
  %5002 = vmatprep.subr.mxu0 0.0
  %5003 = vmatpush1.msra.mxu0 0.0
  %5004 = vmatprep.subr.mxu0 0.0
  %5005 = vmatpush1.msra.mxu0 0.0
  %5006 = vmatprep.subr.mxu0 0.0
  %5007 = vmatpush1.msra.mxu0 0.0
  %5008 = vmatprep.mubr.f32.mxu0 0.0
  %5009 = vmatmul.mubr.f32.gmra.mrb[0].mxu0 %v4905
  %v5010 = vpop.f32.mrb[0].mxu0
  %v5011 = vadd.f32 %v4942, %v5010
  %v5012 = vpop.f32.mrb[0].mxu0
  %5013 = vmatprep.mubr.f32.mxu0 0.0
  %5014 = vmatmul.mubr.f32.gmra.mrb[0].mxu0 %v4906
  %v5015 = vpop.f32.mrb[0].mxu0
  %v5016 = vadd.f32 %v4942, %v5015
  %v5017 = vpop.f32.mrb[0].mxu0
  %5018 = vmatprep.mubr.f32.mxu0 0.0
  %5019 = vmatmul.mubr.f32.gmra.mrb[0].mxu0 %v4907
  %v5020 = vpop.f32.mrb[0].mxu0
  %v5021 = vadd.f32 %v4942, %v5020
  %v5022 = vpop.f32.mrb[0].mxu0
  %5023 = vmatprep.mubr.f32.mxu0 0.0
  %5024 = vmatmul.mubr.f32.gmra.mrb[0].mxu0 %v4908
  %v5025 = vpop.f32.mrb[0].mxu0
  %v5026 = vadd.f32 %v4942, %v5025
  %v5027 = vpop.f32.mrb[0].mxu0
  %5028 = vmatprep.mubr.f32.mxu0 0.0
  %5029 = vmatmul.mubr.f32.gmra.mrb[0].mxu0 %v4909
  %v5030 = vpop.f32.mrb[0].mxu0
  %v5031 = vadd.f32 %v4942, %v5030
  %v5032 = vpop.f32.mrb[0].mxu0
  %5033 = vmatprep.mubr.f32.mxu0 0.0
  %5034 = vmatmul.mubr.f32.gmra.mrb[0].mxu0 %v4910
  %v5035 = vpop.f32.mrb[0].mxu0
  %v5036 = vadd.f32 %v4942, %v5035
  %v5037 = vpop.f32.mrb[0].mxu0
  %5038 = vmatprep.mubr.f32.mxu0 0.0
  %5039 = vmatmul.mubr.f32.gmra.mrb[0].mxu0 %v4911
  %v5040 = vpop.f32.mrb[0].mxu0
  %v5041 = vadd.f32 %v4942, %v5040
  %v5042 = vpop.f32.mrb[0].mxu0
  %5043 = vmatprep.mubr.f32.mxu0 0.0
  %5044 = vmatmul.mubr.f32.gmra.mrb[0].mxu0 %v4912
  %v5045 = vpop.f32.mrb[0].mxu0
  %v5046 = vadd.f32 %v4942, %v5045
  %v5047 = vpop.f32.mrb[0].mxu0
  %5048 = vmatprep.mubr.f32.mxu0 0.0
  %5049 = vmatmul.mubr.f32.gmra.mrb[0].mxu0 %v4913
  %v5050 = vpop.f32.mrb[0].mxu0
  %v5051 = vadd.f32 %v4942, %v5050
  %v5052 = vpop.f32.mrb[0].mxu0
  %5053 = vmatprep.mubr.f32.mxu0 0.0
  %5054 = vmatmul.mubr.f32.gmra.mrb[0].mxu0 %v4914
  %v5055 = vpop.f32.mrb[0].mxu0
  %v5056 = vadd.f32 %v4942, %v5055
  %v5057 = vpop.f32.mrb[0].mxu0
  %5058 = vmatprep.mubr.f32.mxu0 0.0
  %5059 = vmatmul.mubr.f32.gmra.mrb[0].mxu0 %v4915
  %v5060 = vpop.f32.mrb[0].mxu0
  %v5061 = vadd.f32 %v4942, %v5060
  %v5062 = vpop.f32.mrb[0].mxu0
  %5063 = vmatprep.mubr.f32.mxu0 0.0
  %5064 = vmatmul.mubr.f32.gmra.mrb[0].mxu0 %v4916
  %v5065 = vpop.f32.mrb[0].mxu0
  %v5066 = vadd.f32 %v4942, %v5065
  %v5067 = vpop.f32.mrb[0].mxu0
  %5068 = vmatprep.mubr.f32.mxu0 0.0
  %5069 = vmatmul.mubr.f32.gmra.mrb[0].mxu0 %v4917
  %v5070 = vpop.f32.mrb[0].mxu0
  %v5071 = vadd.f32 %v4942, %v5070
  %v5072 = vpop.f32.mrb[0].mxu0
  %5073 = vmatprep.mubr.f32.mxu0 0.0
  %5074 = vmatmul.mubr.f32.gmra.mrb[0].mxu0 %v4918
  %v5075 = vpop.f32.mrb[0].mxu0
  %v5076 = vadd.f32 %v4942, %v5075
  %v5077 = vpop.f32.mrb[0].mxu0
  %5078 = vmatprep.mubr.f32.mxu0 0.0
  %5079 = vmatmul.mubr.f32.gmra.mrb[0].mxu0 %v4919
  %v5080 = vpop.f32.mrb[0].mxu0
  %v5081 = vadd.f32 %v4942, %v5080
  %v5082 = vpop.f32.mrb[0].mxu0
  %5083 = vmatprep.mubr.f32.mxu0 0.0
  %5084 = vmatmul.mubr.f32.gmra.mrb[0].mxu0 %v4920
  %v5085 = vpop.f32.mrb[0].mxu0
  %v5086 = vadd.f32 %v4942, %v5085
  %v5087 = vpop.f32.mrb[0].mxu0
  %5088 = vdwg.mxu0
  %v5089 = vadd.f32 %v4367, %v5011
  %v5090 = vadd.f32 %v4368, %v5016
  %v5091 = vadd.f32 %v4369, %v5021
  %v5092 = vadd.f32 %v4370, %v5026
  %v5093 = vadd.f32 %v4371, %v5031
  %v5094 = vadd.f32 %v4372, %v5036
  %v5095 = vadd.f32 %v4373, %v5041
  %v5096 = vadd.f32 %v4374, %v5046
  %v5097 = vadd.f32 %v4375, %v5051
  %v5098 = vadd.f32 %v4376, %v5056
  %v5099 = vadd.f32 %v4377, %v5061
  %v5100 = vadd.f32 %v4378, %v5066
  %v5101 = vadd.f32 %v4379, %v5071
  %v5102 = vadd.f32 %v4380, %v5076
  %v5103 = vadd.f32 %v4381, %v5081
  %v5104 = vadd.f32 %v4382, %v5086
  %5105 = vst.msk [vmem:[%s14] sm:$0xff] %vm65, %v5089
  %5106 = vst.msk [vmem:[%s14 + $0x8] sm:$0xff] %vm65, %v5090
  %5107 = vst.msk [vmem:[%s14 + $0x10] sm:$0xff] %vm65, %v5091
  %5108 = vst.msk [vmem:[%s14 + $0x18] sm:$0xff] %vm65, %v5092
  %5109 = vst.msk [vmem:[%s14 + $0x20] sm:$0xff] %vm65, %v5093
  %5110 = vst.msk [vmem:[%s14 + $0x28] sm:$0xff] %vm65, %v5094
  %5111 = vst.msk [vmem:[%s14 + $0x30] sm:$0xff] %vm65, %v5095
  %5112 = vst.msk [vmem:[%s14 + $0x38] sm:$0xff] %vm65, %v5096
  %5113 = vst.msk [vmem:[%s14 + $0x40] sm:$0xff] %vm65, %v5097
  %5114 = vst.msk [vmem:[%s14 + $0x48] sm:$0xff] %vm65, %v5098
  %5115 = vst.msk [vmem:[%s14 + $0x50] sm:$0xff] %vm65, %v5099
  %5116 = vst.msk [vmem:[%s14 + $0x58] sm:$0xff] %vm65, %v5100
  %5117 = vst.msk [vmem:[%s14 + $0x60] sm:$0xff] %vm65, %v5101
  %5118 = vst.msk [vmem:[%s14 + $0x68] sm:$0xff] %vm65, %v5102
  %5119 = vst.msk [vmem:[%s14 + $0x70] sm:$0xff] %vm65, %v5103
  %5120 = vst.msk [vmem:[%s14 + $0x78] sm:$0xff] %vm65, %v5104
  // Predicated region
  $region58: #{swin_block_forward.1} parent=0 // pred_check
    _
  $region59: #{swin_block_forward.1} parent=0 // pred_check_branch
    %5122 = sbr.rel (0) target = $region61
  $region60: #{swin_block_forward.1} parent=0 // pred_region
    _
  $region61: #{swin_block_forward.1} parent=0 // pred_fallthru
    _
  // Predicated region
  $region62: #{swin_block_forward.1} parent=0 // pred_check
    _
  $region63: #{swin_block_forward.1} parent=0 // pred_check_branch
    %5124 = sbr.rel (0) target = $region65
  $region64: #{swin_block_forward.1} parent=0 // pred_region
    _
  $region65: #{swin_block_forward.1} parent=0 // pred_fallthru
    _

</llo_original>
